<compile_context>
chip_gen: v5e
topology: v5e:2x2
jax: 0.10.0
libtpu: 0.0.40
codegen_flags: <defaults>
</compile_context>

<pallas_src>
import functools

import numpy as np
import jax
import jax.numpy as jnp
from jax.experimental import pallas as pl
from jax.experimental.pallas import tpu as pltpu


_SHIFTS = ((0, 0), (0, 1), (1, 0), (1, 1))   # (sy, sx), matches torch reference order


def _round_up(v, m):
    return ((v + m - 1) // m) * m


def _choose_tp(c4, p):
    """Pixel tile: big lane-dense blocks, VMEM-capped (v7x safe), >=2 grid steps."""
    p128 = _round_up(max(int(p), 1), 128)
    budget = 20 * 1024 * 1024                      # conservative live-VMEM budget
    tp = budget // (256 * max(int(c4), 8))         # ~bytes per pixel column incl. intermediates
    tp = max(256, min(4096, (tp // 128) * 128))
    if p128 >= 256:                                # allow megacore to split the grid
        tp = min(tp, _round_up(p128 // 2, 128))
    tp = min(tp, p128)
    return max(tp, 128)


# -----------------------------------------------------------------------------
# Butterfly helpers (shared partial sums: 8 adds instead of 12)
# -----------------------------------------------------------------------------
def _haar_fwd(a, b, c, d):
    s1 = a + d
    s2 = b + c
    t1 = d - a
    t2 = b - c
    ll = 0.5 * (s1 + s2)
    lh = 0.5 * (t1 + t2)
    hl = 0.5 * (t1 - t2)
    hh = 0.5 * (s1 - s2)
    return ll, lh, hl, hh


def _haar_inv(ll, lh, hl, hh):
    u1 = ll + hh
    u2 = lh + hl
    v1 = ll - hh
    v2 = lh - hl
    a = 0.5 * (u1 - u2)
    b = 0.5 * (v1 + v2)
    c = 0.5 * (v1 - v2)
    d = 0.5 * (u1 + u2)
    return a, b, c, d


# -----------------------------------------------------------------------------
# Pallas kernel 1: fused forward level (butterfly + shrink CNN on LH/HL/HH)
# -----------------------------------------------------------------------------
def _fwd_level_shrink_kernel(a_ref, b_ref, c_ref, d_ref,
                             w1_ref, b1_ref, w1ra_ref, w1rb_ref, b1r_ref,
                             w2_ref, b2_ref, w2ra_ref, w2rb_ref, b2r_ref,
                             ll_ref, lh_ref, hl_ref, hh_ref):
    f32 = jnp.float32
    bf16 = jnp.bfloat16
    a = a_ref[...].astype(f32)
    b = b_ref[...].astype(f32)
    c = c_ref[...].astype(f32)
    d = d_ref[...].astype(f32)

    ll, lh, hl, hh = _haar_fwd(a, b, c, d)
    ll_ref[...] = ll.astype(ll_ref.dtype)

    tp = lh.shape[-1]
    # Batch the three high-pass bands along lanes -> one set of MXU matmuls.
    dcat = jnp.concatenate([lh, hl, hh], axis=-1)          # (C4, 3*TP), lane-aligned

    env = jnp.abs(dcat)
    env_b = env.astype(bf16)
    conv1 = jnp.maximum(
        jnp.dot(w1_ref[...], env_b, preferred_element_type=f32) + b1_ref[...], 0.0)
    convr1 = jnp.maximum(
        jnp.dot(w1ra_ref[...], conv1.astype(bf16), preferred_element_type=f32)
        + jnp.dot(w1rb_ref[...], env_b, preferred_element_type=f32)
        + b1r_ref[...], 0.0)
    convr1_b = convr1.astype(bf16)
    conv2 = jnp.maximum(
        jnp.dot(w2_ref[...], convr1_b, preferred_element_type=f32) + b2_ref[...], 0.0)
    z = (jnp.dot(w2ra_ref[...], conv2.astype(bf16), preferred_element_type=f32)
         + jnp.dot(w2rb_ref[...], convr1_b, preferred_element_type=f32)
         + b2r_ref[...])
    gate = 0.5 * (jnp.tanh(0.5 * z) + 1.0)                 # exact sigmoid, single EUP op
    out = gate * dcat

    lh_ref[...] = out[:, :tp].astype(lh_ref.dtype)
    hl_ref[...] = out[:, tp:2 * tp].astype(hl_ref.dtype)
    hh_ref[...] = out[:, 2 * tp:].astype(hh_ref.dtype)


def _fwd_level_bypass_kernel(a_ref, b_ref, c_ref, d_ref,
                             ll_ref, lh_ref, hl_ref, hh_ref):
    a = a_ref[...]
    b = b_ref[...]
    c = c_ref[...]
    d = d_ref[...]
    ll, lh, hl, hh = _haar_fwd(a, b, c, d)
    ll_ref[...] = ll.astype(ll_ref.dtype)
    lh_ref[...] = lh.astype(lh_ref.dtype)
    hl_ref[...] = hl.astype(hl_ref.dtype)
    hh_ref[...] = hh.astype(hh_ref.dtype)


def _assemble_quadrants(x_cm):
    """Build the four shift-packed Haar quadrant stacks (group-major over _SHIFTS)
    from 4 parity decimations of x plus 5 half-resolution rolls (no full-res rolls,
    no transposes).  x_cm is channel-major (C, N, H, W)."""
    C, N, H, W = x_cm.shape
    Hh, Wh = H // 2, W // 2
    P = N * Hh * Wh
    e00 = x_cm[:, :, 0::2, 0::2]
    e01 = x_cm[:, :, 0::2, 1::2]
    e10 = x_cm[:, :, 1::2, 0::2]
    e11 = x_cm[:, :, 1::2, 1::2]
    r00 = jnp.roll(e00, -1, axis=2)          # shift -1 within Hh
    r01 = jnp.roll(e01, -1, axis=2)
    c00 = jnp.roll(e00, -1, axis=3)          # shift -1 within Wh
    c10 = jnp.roll(e10, -1, axis=3)
    rc00 = jnp.roll(r00, -1, axis=3)

    def grp(parts):
        return jnp.concatenate(parts, axis=0).reshape(4 * C, P)

    qa = grp([e00, e01, e10, e11])
    qb = grp([e10, e11, r00, r01])
    qc = grp([e01, c00, e11, c10])
    qd = grp([e11, c10, r01, rc00])
    return (qa, qb, qc, qd), (N, C, Hh, Wh, P)


def fwd_level(p, x_cm, apply_shrink=True):
    """One decomposition level, channel-major in / channel-major out."""
    (qa, qb, qc, qd), (N, C, Hh, Wh, P) = _assemble_quadrants(x_cm)
    C4 = 4 * C
    TP = _choose_tp(C4, P)
    P_pad = _round_up(P, TP)
    if P_pad != P:
        padw = ((0, 0), (0, P_pad - P))
        qa, qb, qc, qd = (jnp.pad(q, padw) for q in (qa, qb, qc, qd))

    data_spec = pl.BlockSpec((C4, TP), lambda i: (0, i))
    out_sds = jax.ShapeDtypeStruct((C4, P_pad), x_cm.dtype)
    cparams = pltpu.CompilerParams(dimension_semantics=("parallel",))

    if apply_shrink:
        bf16 = jnp.bfloat16
        f32 = jnp.float32
        weights = (
            p["w1"].astype(bf16), p["b1"].astype(f32),
            p["w1r"][:, :C4].astype(bf16), p["w1r"][:, C4:].astype(bf16),
            p["b1r"].astype(f32),
            p["w2"].astype(bf16), p["b2"].astype(f32),
            p["w2r"][:, :C4].astype(bf16), p["w2r"][:, C4:].astype(bf16),
            p["b2r"].astype(f32),
        )
        w_specs = [pl.BlockSpec(w.shape, lambda i: (0, 0)) for w in weights]
        LL, LH, HL, HH = pl.pallas_call(
            _fwd_level_shrink_kernel,
            grid=(P_pad // TP,),
            out_shape=(out_sds,) * 4,
            in_specs=[data_spec] * 4 + w_specs,
            out_specs=(data_spec,) * 4,
            compiler_params=cparams,
        )(qa, qb, qc, qd, *weights)
    else:
        LL, LH, HL, HH = pl.pallas_call(
            _fwd_level_bypass_kernel,
            grid=(P_pad // TP,),
            out_shape=(out_sds,) * 4,
            in_specs=[data_spec] * 4,
            out_specs=(data_spec,) * 4,
            compiler_params=cparams,
        )(qa, qb, qc, qd)

    def to_cm(y):
        if P_pad != P:
            y = y[:, :P]
        return y.reshape(C4, N, Hh, Wh)

    return to_cm(LL), to_cm(LH), to_cm(HL), to_cm(HH)


# -----------------------------------------------------------------------------
# Pallas kernel 2: fused inverse level
#   Inverse butterflies of all four shift groups in one streaming pass; the
#   terms that need a spatial roll are emitted separately (pre-summed where
#   possible); the 0.25 averaging is folded in.
# -----------------------------------------------------------------------------
def _inv_level_kernel(ll_ref, lh_ref, hl_ref, hh_ref,
                      s00_ref, s01_ref, s10_ref, s11_ref,
                      rc00_ref, rr00_ref, rrc00_ref, rr01_ref, rc10_ref):
    f32 = jnp.float32
    ll = ll_ref[...].astype(f32)
    lh = lh_ref[...].astype(f32)
    hl = hl_ref[...].astype(f32)
    hh = hh_ref[...].astype(f32)
    a, b, c, d = _haar_inv(ll, lh, hl, hh)   # each (4, C, TP); [g] = shift group g

    def st(ref, val):
        ref[...] = (0.25 * val).astype(ref.dtype)

    # Parity planes of the reconstruction (no roll needed):
    st(s00_ref, a[0])
    st(s01_ref, c[0] + a[1])
    st(s10_ref, b[0] + a[2])
    st(s11_ref, d[0] + b[1] + c[2] + a[3])
    # Terms that still need a half-resolution spatial roll (done by the wrapper):
    st(rc00_ref, c[1])           # roll +1 along Wh
    st(rr00_ref, b[2])           # roll +1 along Hh
    st(rrc00_ref, d[3])          # roll +1 along both
    st(rr01_ref, d[2] + b[3])    # roll +1 along Hh
    st(rc10_ref, d[1] + c[3])    # roll +1 along Wh


def inv_level(LL, LH, HL, HH):
    """Inverse overcomplete Haar level, channel-major in / channel-major out."""
    C4, N, Hh, Wh = LL.shape
    C = C4 // 4
    P = N * Hh * Wh
    TP = _choose_tp(C4, P)
    P_pad = _round_up(P, TP)

    def prep(x):
        x = x.reshape(4, C, P)               # group-major split is a free view
        if P_pad != P:
            x = jnp.pad(x, ((0, 0), (0, 0), (0, P_pad - P)))
        return x

    bands = tuple(prep(x) for x in (LL, LH, HL, HH))
    in_spec = pl.BlockSpec((4, C, TP), lambda i: (0, 0, i))
    out_spec = pl.BlockSpec((C, TP), lambda i: (0, i))
    out_sds = jax.ShapeDtypeStruct((C, P_pad), LL.dtype)

    outs = pl.pallas_call(
        _inv_level_kernel,
        grid=(P_pad // TP,),
        out_shape=(out_sds,) * 9,
        in_specs=[in_spec] * 4,
        out_specs=(out_spec,) * 9,
        compiler_params=pltpu.CompilerParams(dimension_semantics=("parallel",)),
    )(*bands)

    def to_sp(y):
        if P_pad != P:
            y = y[:, :P]
        return y.reshape(C, N, Hh, Wh)

    (s00, s01, s10, s11, rc00, rr00, rrc00, rr01, rc10) = (to_sp(o) for o in outs)

    rec00 = (s00 + jnp.roll(rc00, 1, axis=3) + jnp.roll(rr00, 1, axis=2)
             + jnp.roll(rrc00, (1, 1), axis=(2, 3)))
    rec01 = s01 + jnp.roll(rr01, 1, axis=2)
    rec10 = s10 + jnp.roll(rc10, 1, axis=3)
    rec11 = s11

    # Parity interleave via stack + reshape (no scatter-into-zeros).
    row0 = jnp.stack([rec00, rec01], axis=-1)     # (C, N, Hh, Wh, 2): px
    row1 = jnp.stack([rec10, rec11], axis=-1)
    full = jnp.stack([row0, row1], axis=3)        # (C, N, Hh, 2, Wh, 2)
    return full.reshape(C, N, 2 * Hh, 2 * Wh)


# -----------------------------------------------------------------------------
# dhsn1_2d forward (channel-major orchestration around the Pallas kernels)
# -----------------------------------------------------------------------------
def dhsn1_2d_forward(params, x, depth=1, bypass_shrinkage=False):
    x_cm = jnp.transpose(x, (1, 0, 2, 3))         # single NCHW -> channel-major
    LH_list, HL_list, HH_list = [], [], []
    cur = x_cm
    LL = x_cm
    for i in range(depth):
        p = None if bypass_shrinkage else params["shrink"][i]
        LL, LH, HL, HH = fwd_level(p, cur, apply_shrink=not bypass_shrinkage)
        LH_list.append(LH)
        HL_list.append(HL)
        HH_list.append(HH)
        cur = LL
    for i in range(depth):
        indx = depth - i - 1
        LL = inv_level(LL, LH_list[indx], HL_list[indx], HH_list[indx])
    return jnp.transpose(LL, (1, 0, 2, 3))        # channel-major -> NCHW, once


# -----------------------------------------------------------------------------
# Pure-JAX reference (correctness check of the fused Pallas path)
# -----------------------------------------------------------------------------
def _ref_fohwt(x):
    lls, lhs, hls, hhs = [], [], [], []
    for (sy, sx) in _SHIFTS:
        xs = jnp.roll(x, shift=(-sy, -sx), axis=(2, 3))
        a = xs[:, :, 0::2, 0::2]
        b = xs[:, :, 1::2, 0::2]
        c = xs[:, :, 0::2, 1::2]
        d = xs[:, :, 1::2, 1::2]
        lls.append((a + b + c + d) * 0.5)
        lhs.append((-a + b - c + d) * 0.5)
        hls.append((-a - b + c + d) * 0.5)
        hhs.append((a - b - c + d) * 0.5)
    cat = lambda ts: jnp.concatenate(ts, axis=1)
    return cat(lls), cat(lhs), cat(hls), cat(hhs)


def _ref_iohwt(LL, LH, HL, HH):
    N, C4, Hh, Wh = LL.shape
    C = C4 // 4
    rec = None
    for idx, (sy, sx) in enumerate(_SHIFTS):
        sl = slice(idx * C, (idx + 1) * C)
        ll, lh, hl, hh = LL[:, sl], LH[:, sl], HL[:, sl], HH[:, sl]
        a = (ll - lh - hl + hh) * 0.5
        b = (ll + lh - hl - hh) * 0.5
        c = (ll - lh + hl - hh) * 0.5
        d = (ll + lh + hl + hh) * 0.5
        xs = jnp.zeros((N, C, 2 * Hh, 2 * Wh), LL.dtype)
        xs = xs.at[:, :, 0::2, 0::2].set(a)
        xs = xs.at[:, :, 1::2, 0::2].set(b)
        xs = xs.at[:, :, 0::2, 1::2].set(c)
        xs = xs.at[:, :, 1::2, 1::2].set(d)
        x_rec = jnp.roll(xs, shift=(sy, sx), axis=(2, 3))
        rec = x_rec if rec is None else rec + x_rec
    return rec * 0.25


def _ref_shrink(p, D):
    N, C, H, W = D.shape
    d2 = jnp.transpose(D, (1, 0, 2, 3)).reshape(C, -1)
    env = jnp.abs(d2)
    conv1 = jnp.maximum(p["w1"] @ env + p["b1"], 0.0)
    convr1 = jnp.maximum(p["w1r"] @ jnp.concatenate([conv1, env], 0) + p["b1r"], 0.0)
    conv2 = jnp.maximum(p["w2"] @ convr1 + p["b2"], 0.0)
    z = p["w2r"] @ jnp.concatenate([conv2, convr1], 0) + p["b2r"]
    out = (jax.nn.sigmoid(z) * d2).reshape(C, N, H, W)
    return jnp.transpose(out, (1, 0, 2, 3))


def _ref_forward(params, x, depth=1):
    LH_list, HL_list, HH_list = [], [], []
    LL = x
    for i in range(depth):
        LL, LH, HL, HH = _ref_fohwt(x)
        p = params["shrink"][i]
        LH_list.append(_ref_shrink(p, LH))
        HL_list.append(_ref_shrink(p, HL))
        HH_list.append(_ref_shrink(p, HH))
        x = LL
    for i in range(depth):
        indx = depth - i - 1
        LL = _ref_iohwt(LL, LH_list[indx], HL_list[indx], HH_list[indx])
    return LL


# -----------------------------------------------------------------------------
# Deterministic parameter init (PyTorch Conv2d default: U(-1/sqrt(fan_in), ...))
# -----------------------------------------------------------------------------
def _init_shrink_params(key, F):
    ks = jax.random.split(key, 8)

    def u(k, shape, fan_in):
        bound = 1.0 / float(np.sqrt(fan_in))
        return jax.random.uniform(k, shape, jnp.float32, -bound, bound)

    return {
        "w1":  u(ks[0], (F, F), F),         "b1":  u(ks[1], (F, 1), F),
        "w1r": u(ks[2], (F, 2 * F), 2 * F), "b1r": u(ks[3], (F, 1), 2 * F),
        "w2":  u(ks[4], (F, F), F),         "b2":  u(ks[5], (F, 1), F),
        "w2r": u(ks[6], (F, 2 * F), 2 * F), "b2r": u(ks[7], (F, 1), 2 * F),
    }


def init_dhsn1_params(key, in_channels=1, depth=1):
    shrink_params = []
    for i in range(depth):
        F = int(in_channels * 4 ** (i + 1))
        key, sub = jax.random.split(key)
        shrink_params.append(_init_shrink_params(sub, F))
    return {"shrink": shrink_params}


if __name__ == "__main__":
    key = jax.random.PRNGKey(0)
    kx, kp = jax.random.split(key)

    N, Cin, H, W = 2, 1, 32, 32
    x = jax.random.normal(kx, (N, Cin, H, W), dtype=jnp.float32)

    # depth = 1 (module default)
    params1 = init_dhsn1_params(kp, in_channels=Cin, depth=1)
    fwd1 = jax.jit(functools.partial(dhsn1_2d_forward, depth=1))
    y1 = fwd1(params1, x)
    jax.block_until_ready(y1)
    assert y1.shape == x.shape and y1.dtype == x.dtype

    # Sanity 1: with shrinkage bypassed the analysis/synthesis pair is the identity.
    y_bypass = jax.jit(functools.partial(
        dhsn1_2d_forward, depth=1, bypass_shrinkage=True))(params1, x)
    jax.block_until_ready(y_bypass)
    np.testing.assert_allclose(np.asarray(y_bypass), np.asarray(x),
                               rtol=1e-4, atol=1e-5)

    # Sanity 2: fused Pallas path vs pure-JAX f32 reference (bf16 MXU matmuls
    # inside the shrink CNN -> modest tolerance).
    y_ref1 = jax.jit(functools.partial(_ref_forward, depth=1))(params1, x)
    jax.block_until_ready(y_ref1)
    np.testing.assert_allclose(np.asarray(y1), np.asarray(y_ref1),
                               rtol=5e-2, atol=2e-2)

    # Sanity 3: two-level decomposition (exercises multi-level channel ordering
    # and the 16-channel second-level shrink).
    params2 = init_dhsn1_params(kp, in_channels=Cin, depth=2)
    y2 = jax.jit(functools.partial(dhsn1_2d_forward, depth=2))(params2, x)
    y_ref2 = jax.jit(functools.partial(_ref_forward, depth=2))(params2, x)
    jax.block_until_ready((y2, y_ref2))
    np.testing.assert_allclose(np.asarray(y2), np.asarray(y_ref2),
                               rtol=5e-2, atol=2e-2)

    print("KERNEL_OK")
</pallas_src>

<mosaic_0001>
module attributes {stable_mosaic.version = 11 : i64} {
  func.func @_fwd_level_shrink_kernel(%arg0: i32, %arg1: memref<4x256xf32, #tpu.memory_space<vmem>>, %arg2: memref<4x256xf32, #tpu.memory_space<vmem>>, %arg3: memref<4x256xf32, #tpu.memory_space<vmem>>, %arg4: memref<4x256xf32, #tpu.memory_space<vmem>>, %arg5: memref<4x4xbf16, #tpu.memory_space<vmem>>, %arg6: memref<4x1xf32, #tpu.memory_space<vmem>>, %arg7: memref<4x4xbf16, #tpu.memory_space<vmem>>, %arg8: memref<4x4xbf16, #tpu.memory_space<vmem>>, %arg9: memref<4x1xf32, #tpu.memory_space<vmem>>, %arg10: memref<4x4xbf16, #tpu.memory_space<vmem>>, %arg11: memref<4x1xf32, #tpu.memory_space<vmem>>, %arg12: memref<4x4xbf16, #tpu.memory_space<vmem>>, %arg13: memref<4x4xbf16, #tpu.memory_space<vmem>>, %arg14: memref<4x1xf32, #tpu.memory_space<vmem>>, %arg15: memref<4x256xf32, #tpu.memory_space<vmem>>, %arg16: memref<4x256xf32, #tpu.memory_space<vmem>>, %arg17: memref<4x256xf32, #tpu.memory_space<vmem>>, %arg18: memref<4x256xf32, #tpu.memory_space<vmem>>) attributes {dimension_semantics = [#tpu.dimension_semantics<parallel>], iteration_bounds = array<i64: 2>, scalar_prefetch = 0 : i64, scratch_operands = 0 : i64, tpu.core_type = #tpu.core_type<tc>, window_params = [{transform_indices = @transform_0, window_bounds = array<i64: 4, 256>}, {transform_indices = @transform_1, window_bounds = array<i64: 4, 256>}, {transform_indices = @transform_2, window_bounds = array<i64: 4, 256>}, {transform_indices = @transform_3, window_bounds = array<i64: 4, 256>}, {pipeline_mode = #tpu.pipeline_mode<synchronous>, transform_indices = @transform_4, window_bounds = array<i64: 4, 4>}, {pipeline_mode = #tpu.pipeline_mode<synchronous>, transform_indices = @transform_5, window_bounds = array<i64: 4, 1>}, {pipeline_mode = #tpu.pipeline_mode<synchronous>, transform_indices = @transform_6, window_bounds = array<i64: 4, 4>}, {pipeline_mode = #tpu.pipeline_mode<synchronous>, transform_indices = @transform_7, window_bounds = array<i64: 4, 4>}, {pipeline_mode = #tpu.pipeline_mode<synchronous>, transform_indices = @transform_8, window_bounds = array<i64: 4, 1>}, {pipeline_mode = #tpu.pipeline_mode<synchronous>, transform_indices = @transform_9, window_bounds = array<i64: 4, 4>}, {pipeline_mode = #tpu.pipeline_mode<synchronous>, transform_indices = @transform_10, window_bounds = array<i64: 4, 1>}, {pipeline_mode = #tpu.pipeline_mode<synchronous>, transform_indices = @transform_11, window_bounds = array<i64: 4, 4>}, {pipeline_mode = #tpu.pipeline_mode<synchronous>, transform_indices = @transform_12, window_bounds = array<i64: 4, 4>}, {pipeline_mode = #tpu.pipeline_mode<synchronous>, transform_indices = @transform_13, window_bounds = array<i64: 4, 1>}, {transform_indices = @transform_14, window_bounds = array<i64: 4, 256>}, {transform_indices = @transform_15, window_bounds = array<i64: 4, 256>}, {transform_indices = @transform_16, window_bounds = array<i64: 4, 256>}, {transform_indices = @transform_17, window_bounds = array<i64: 4, 256>}]} {
    %c0 = arith.constant 0 : index
    %c0_0 = arith.constant 0 : index
    %0 = vector.load %arg1[%c0, %c0_0] : memref<4x256xf32, #tpu.memory_space<vmem>>, vector<4x256xf32>
    %c0_1 = arith.constant 0 : index
    %c0_2 = arith.constant 0 : index
    %1 = vector.load %arg2[%c0_1, %c0_2] : memref<4x256xf32, #tpu.memory_space<vmem>>, vector<4x256xf32>
    %c0_3 = arith.constant 0 : index
    %c0_4 = arith.constant 0 : index
    %2 = vector.load %arg3[%c0_3, %c0_4] : memref<4x256xf32, #tpu.memory_space<vmem>>, vector<4x256xf32>
    %c0_5 = arith.constant 0 : index
    %c0_6 = arith.constant 0 : index
    %3 = vector.load %arg4[%c0_5, %c0_6] : memref<4x256xf32, #tpu.memory_space<vmem>>, vector<4x256xf32>
    %4 = arith.addf %0, %3 : vector<4x256xf32>
    %5 = arith.addf %1, %2 : vector<4x256xf32>
    %6 = arith.subf %3, %0 : vector<4x256xf32>
    %7 = arith.subf %1, %2 : vector<4x256xf32>
    %8 = arith.addf %4, %5 : vector<4x256xf32>
    %cst = arith.constant 5.000000e-01 : f32
    %9 = vector.broadcast %cst : f32 to vector<4x256xf32>
    %10 = arith.mulf %9, %8 : vector<4x256xf32>
    %11 = arith.addf %6, %7 : vector<4x256xf32>
    %cst_7 = arith.constant 5.000000e-01 : f32
    %12 = vector.broadcast %cst_7 : f32 to vector<4x256xf32>
    %13 = arith.mulf %12, %11 : vector<4x256xf32>
    %14 = arith.subf %6, %7 : vector<4x256xf32>
    %cst_8 = arith.constant 5.000000e-01 : f32
    %15 = vector.broadcast %cst_8 : f32 to vector<4x256xf32>
    %16 = arith.mulf %15, %14 : vector<4x256xf32>
    %17 = arith.subf %4, %5 : vector<4x256xf32>
    %cst_9 = arith.constant 5.000000e-01 : f32
    %18 = vector.broadcast %cst_9 : f32 to vector<4x256xf32>
    %19 = arith.mulf %18, %17 : vector<4x256xf32>
    %c0_10 = arith.constant 0 : index
    %c0_11 = arith.constant 0 : index
    %20 = vector.load %arg15[%c0_10, %c0_11] : memref<4x256xf32, #tpu.memory_space<vmem>>, vector<4x256xf32>
    tpu.vector_store %arg15[%c0_10, %c0_11], %10 {strides = array<i32>} : memref<4x256xf32, #tpu.memory_space<vmem>>, vector<4x256xf32>,
    %21 = tpu.concatenate %13, %16, %19 in 1 : vector<4x256xf32>, vector<4x256xf32>, vector<4x256xf32> -> vector<4x768xf32>
    %22 = math.absf %21 : vector<4x768xf32>
    %23 = arith.truncf %22 : vector<4x768xf32> to vector<4x768xbf16>
    %c0_12 = arith.constant 0 : index
    %c0_13 = arith.constant 0 : index
    %24 = vector.load %arg5[%c0_12, %c0_13] : memref<4x4xbf16, #tpu.memory_space<vmem>>, vector<4x4xbf16>
    %cst_14 = arith.constant dense<0.000000e+00> : vector<4x768xf32>
    %25 = tpu.matmul %24, %23, %cst_14 {dimension_numbers = #tpu.dot_dimension_numbers<[1], [0], [0], [1], [0, 0, 1, 1], [], []>} : vector<4x4xbf16>, vector<4x768xbf16>, vector<4x768xf32> -> vector<4x768xf32>
    %c0_15 = arith.constant 0 : index
    %c0_16 = arith.constant 0 : index
    %26 = vector.load %arg6[%c0_15, %c0_16] : memref<4x1xf32, #tpu.memory_space<vmem>>, vector<4x1xf32>
    %27 = vector.broadcast %26 : vector<4x1xf32> to vector<4x768xf32>
    %28 = arith.addf %25, %27 : vector<4x768xf32>
    %cst_17 = arith.constant 0.000000e+00 : f32
    %29 = vector.broadcast %cst_17 : f32 to vector<4x768xf32>
    %30 = arith.maximumf %28, %29 : vector<4x768xf32>
    %c0_18 = arith.constant 0 : index
    %c0_19 = arith.constant 0 : index
    %31 = vector.load %arg7[%c0_18, %c0_19] : memref<4x4xbf16, #tpu.memory_space<vmem>>, vector<4x4xbf16>
    %32 = arith.truncf %30 : vector<4x768xf32> to vector<4x768xbf16>
    %cst_20 = arith.constant dense<0.000000e+00> : vector<4x768xf32>
    %33 = tpu.matmul %31, %32, %cst_20 {dimension_numbers = #tpu.dot_dimension_numbers<[1], [0], [0], [1], [0, 0, 1, 1], [], []>} : vector<4x4xbf16>, vector<4x768xbf16>, vector<4x768xf32> -> vector<4x768xf32>
    %c0_21 = arith.constant 0 : index
    %c0_22 = arith.constant 0 : index
    %34 = vector.load %arg8[%c0_21, %c0_22] : memref<4x4xbf16, #tpu.memory_space<vmem>>, vector<4x4xbf16>
    %cst_23 = arith.constant dense<0.000000e+00> : vector<4x768xf32>
    %35 = tpu.matmul %34, %23, %cst_23 {dimension_numbers = #tpu.dot_dimension_numbers<[1], [0], [0], [1], [0, 0, 1, 1], [], []>} : vector<4x4xbf16>, vector<4x768xbf16>, vector<4x768xf32> -> vector<4x768xf32>
    %36 = arith.addf %33, %35 : vector<4x768xf32>
    %c0_24 = arith.constant 0 : index
    %c0_25 = arith.constant 0 : index
    %37 = vector.load %arg9[%c0_24, %c0_25] : memref<4x1xf32, #tpu.memory_space<vmem>>, vector<4x1xf32>
    %38 = vector.broadcast %37 : vector<4x1xf32> to vector<4x768xf32>
    %39 = arith.addf %36, %38 : vector<4x768xf32>
    %cst_26 = arith.constant 0.000000e+00 : f32
    %40 = vector.broadcast %cst_26 : f32 to vector<4x768xf32>
    %41 = arith.maximumf %39, %40 : vector<4x768xf32>
    %42 = arith.truncf %41 : vector<4x768xf32> to vector<4x768xbf16>
    %c0_27 = arith.constant 0 : index
    %c0_28 = arith.constant 0 : index
    %43 = vector.load %arg10[%c0_27, %c0_28] : memref<4x4xbf16, #tpu.memory_space<vmem>>, vector<4x4xbf16>
    %cst_29 = arith.constant dense<0.000000e+00> : vector<4x768xf32>
    %44 = tpu.matmul %43, %42, %cst_29 {dimension_numbers = #tpu.dot_dimension_numbers<[1], [0], [0], [1], [0, 0, 1, 1], [], []>} : vector<4x4xbf16>, vector<4x768xbf16>, vector<4x768xf32> -> vector<4x768xf32>
    %c0_30 = arith.constant 0 : index
    %c0_31 = arith.constant 0 : index
    %45 = vector.load %arg11[%c0_30, %c0_31] : memref<4x1xf32, #tpu.memory_space<vmem>>, vector<4x1xf32>
    %46 = vector.broadcast %45 : vector<4x1xf32> to vector<4x768xf32>
    %47 = arith.addf %44, %46 : vector<4x768xf32>
    %cst_32 = arith.constant 0.000000e+00 : f32
    %48 = vector.broadcast %cst_32 : f32 to vector<4x768xf32>
    %49 = arith.maximumf %47, %48 : vector<4x768xf32>
    %c0_33 = arith.constant 0 : index
    %c0_34 = arith.constant 0 : index
    %50 = vector.load %arg12[%c0_33, %c0_34] : memref<4x4xbf16, #tpu.memory_space<vmem>>, vector<4x4xbf16>
    %51 = arith.truncf %49 : vector<4x768xf32> to vector<4x768xbf16>
    %cst_35 = arith.constant dense<0.000000e+00> : vector<4x768xf32>
    %52 = tpu.matmul %50, %51, %cst_35 {dimension_numbers = #tpu.dot_dimension_numbers<[1], [0], [0], [1], [0, 0, 1, 1], [], []>} : vector<4x4xbf16>, vector<4x768xbf16>, vector<4x768xf32> -> vector<4x768xf32>
    %c0_36 = arith.constant 0 : index
    %c0_37 = arith.constant 0 : index
    %53 = vector.load %arg13[%c0_36, %c0_37] : memref<4x4xbf16, #tpu.memory_space<vmem>>, vector<4x4xbf16>
    %cst_38 = arith.constant dense<0.000000e+00> : vector<4x768xf32>
    %54 = tpu.matmul %53, %42, %cst_38 {dimension_numbers = #tpu.dot_dimension_numbers<[1], [0], [0], [1], [0, 0, 1, 1], [], []>} : vector<4x4xbf16>, vector<4x768xbf16>, vector<4x768xf32> -> vector<4x768xf32>
    %55 = arith.addf %52, %54 : vector<4x768xf32>
    %c0_39 = arith.constant 0 : index
    %c0_40 = arith.constant 0 : index
    %56 = vector.load %arg14[%c0_39, %c0_40] : memref<4x1xf32, #tpu.memory_space<vmem>>, vector<4x1xf32>
    %57 = vector.broadcast %56 : vector<4x1xf32> to vector<4x768xf32>
    %58 = arith.addf %55, %57 : vector<4x768xf32>
    %cst_41 = arith.constant 5.000000e-01 : f32
    %59 = vector.broadcast %cst_41 : f32 to vector<4x768xf32>
    %60 = arith.mulf %59, %58 : vector<4x768xf32>
    %61 = math.tanh %60 : vector<4x768xf32>
    %cst_42 = arith.constant 1.000000e+00 : f32
    %62 = vector.broadcast %cst_42 : f32 to vector<4x768xf32>
    %63 = arith.addf %61, %62 : vector<4x768xf32>
    %cst_43 = arith.constant 5.000000e-01 : f32
    %64 = vector.broadcast %cst_43 : f32 to vector<4x768xf32>
    %65 = arith.mulf %64, %63 : vector<4x768xf32>
    %66 = arith.mulf %65, %21 : vector<4x768xf32>
    %67 = vector.extract_strided_slice %66 {offsets = [0, 0], sizes = [4, 256], strides = [1, 1]} : vector<4x768xf32> to vector<4x256xf32>
    %c0_44 = arith.constant 0 : index
    %c0_45 = arith.constant 0 : index
    %68 = vector.load %arg16[%c0_44, %c0_45] : memref<4x256xf32, #tpu.memory_space<vmem>>, vector<4x256xf32>
    tpu.vector_store %arg16[%c0_44, %c0_45], %67 {strides = array<i32>} : memref<4x256xf32, #tpu.memory_space<vmem>>, vector<4x256xf32>,
    %69 = vector.extract_strided_slice %66 {offsets = [0, 256], sizes = [4, 256], strides = [1, 1]} : vector<4x768xf32> to vector<4x256xf32>
    %c0_46 = arith.constant 0 : index
    %c0_47 = arith.constant 0 : index
    %70 = vector.load %arg17[%c0_46, %c0_47] : memref<4x256xf32, #tpu.memory_space<vmem>>, vector<4x256xf32>
    tpu.vector_store %arg17[%c0_46, %c0_47], %69 {strides = array<i32>} : memref<4x256xf32, #tpu.memory_space<vmem>>, vector<4x256xf32>,
    %71 = vector.extract_strided_slice %66 {offsets = [0, 512], sizes = [4, 256], strides = [1, 1]} : vector<4x768xf32> to vector<4x256xf32>
    %c0_48 = arith.constant 0 : index
    %c0_49 = arith.constant 0 : index
    %72 = vector.load %arg18[%c0_48, %c0_49] : memref<4x256xf32, #tpu.memory_space<vmem>>, vector<4x256xf32>
    tpu.vector_store %arg18[%c0_48, %c0_49], %71 {strides = array<i32>} : memref<4x256xf32, #tpu.memory_space<vmem>>, vector<4x256xf32>,
    return
  }
  func.func @transform_0(%arg0: i32) -> (i32, i32) {
    %c0_i32 = arith.constant 0 : i32
    %c0_i32_0 = arith.constant 0 : i32
    return %c0_i32, %arg0 : i32, i32
  }
  func.func @transform_1(%arg0: i32) -> (i32, i32) {
    %c0_i32 = arith.constant 0 : i32
    %c0_i32_0 = arith.constant 0 : i32
    return %c0_i32, %arg0 : i32, i32
  }
  func.func @transform_2(%arg0: i32) -> (i32, i32) {
    %c0_i32 = arith.constant 0 : i32
    %c0_i32_0 = arith.constant 0 : i32
    return %c0_i32, %arg0 : i32, i32
  }
  func.func @transform_3(%arg0: i32) -> (i32, i32) {
    %c0_i32 = arith.constant 0 : i32
    %c0_i32_0 = arith.constant 0 : i32
    return %c0_i32, %arg0 : i32, i32
  }
  func.func @transform_4(%arg0: i32) -> (i32, i32) {
    %c0_i32 = arith.constant 0 : i32
    %c0_i32_0 = arith.constant 0 : i32
    %c0_i32_1 = arith.constant 0 : i32
    return %c0_i32, %c0_i32_0 : i32, i32
  }
  func.func @transform_5(%arg0: i32) -> (i32, i32) {
    %c0_i32 = arith.constant 0 : i32
    %c0_i32_0 = arith.constant 0 : i32
    %c0_i32_1 = arith.constant 0 : i32
    return %c0_i32, %c0_i32_0 : i32, i32
  }
  func.func @transform_6(%arg0: i32) -> (i32, i32) {
    %c0_i32 = arith.constant 0 : i32
    %c0_i32_0 = arith.constant 0 : i32
    %c0_i32_1 = arith.constant 0 : i32
    return %c0_i32, %c0_i32_0 : i32, i32
  }
  func.func @transform_7(%arg0: i32) -> (i32, i32) {
    %c0_i32 = arith.constant 0 : i32
    %c0_i32_0 = arith.constant 0 : i32
    %c0_i32_1 = arith.constant 0 : i32
    return %c0_i32, %c0_i32_0 : i32, i32
  }
  func.func @transform_8(%arg0: i32) -> (i32, i32) {
    %c0_i32 = arith.constant 0 : i32
    %c0_i32_0 = arith.constant 0 : i32
    %c0_i32_1 = arith.constant 0 : i32
    return %c0_i32, %c0_i32_0 : i32, i32
  }
  func.func @transform_9(%arg0: i32) -> (i32, i32) {
    %c0_i32 = arith.constant 0 : i32
    %c0_i32_0 = arith.constant 0 : i32
    %c0_i32_1 = arith.constant 0 : i32
    return %c0_i32, %c0_i32_0 : i32, i32
  }
  func.func @transform_10(%arg0: i32) -> (i32, i32) {
    %c0_i32 = arith.constant 0 : i32
    %c0_i32_0 = arith.constant 0 : i32
    %c0_i32_1 = arith.constant 0 : i32
    return %c0_i32, %c0_i32_0 : i32, i32
  }
  func.func @transform_11(%arg0: i32) -> (i32, i32) {
    %c0_i32 = arith.constant 0 : i32
    %c0_i32_0 = arith.constant 0 : i32
    %c0_i32_1 = arith.constant 0 : i32
    return %c0_i32, %c0_i32_0 : i32, i32
  }
  func.func @transform_12(%arg0: i32) -> (i32, i32) {
    %c0_i32 = arith.constant 0 : i32
    %c0_i32_0 = arith.constant 0 : i32
    %c0_i32_1 = arith.constant 0 : i32
    return %c0_i32, %c0_i32_0 : i32, i32
  }
  func.func @transform_13(%arg0: i32) -> (i32, i32) {
    %c0_i32 = arith.constant 0 : i32
    %c0_i32_0 = arith.constant 0 : i32
    %c0_i32_1 = arith.constant 0 : i32
    return %c0_i32, %c0_i32_0 : i32, i32
  }
  func.func @transform_14(%arg0: i32) -> (i32, i32) {
    %c0_i32 = arith.constant 0 : i32
    %c0_i32_0 = arith.constant 0 : i32
    return %c0_i32, %arg0 : i32, i32
  }
  func.func @transform_15(%arg0: i32) -> (i32, i32) {
    %c0_i32 = arith.constant 0 : i32
    %c0_i32_0 = arith.constant 0 : i32
    return %c0_i32, %arg0 : i32, i32
  }
  func.func @transform_16(%arg0: i32) -> (i32, i32) {
    %c0_i32 = arith.constant 0 : i32
    %c0_i32_0 = arith.constant 0 : i32
    return %c0_i32, %arg0 : i32, i32
  }
  func.func @transform_17(%arg0: i32) -> (i32, i32) {
    %c0_i32 = arith.constant 0 : i32
    %c0_i32_0 = arith.constant 0 : i32
    return %c0_i32, %arg0 : i32, i32
  }
}

module attributes {stable_mosaic.version = 11 : i64} {
  func.func @_inv_level_kernel(%arg0: i32, %arg1: memref<4x1x256xf32, #tpu.memory_space<vmem>>, %arg2: memref<4x1x256xf32, #tpu.memory_space<vmem>>, %arg3: memref<4x1x256xf32, #tpu.memory_space<vmem>>, %arg4: memref<4x1x256xf32, #tpu.memory_space<vmem>>, %arg5: memref<1x256xf32, #tpu.memory_space<vmem>>, %arg6: memref<1x256xf32, #tpu.memory_space<vmem>>, %arg7: memref<1x256xf32, #tpu.memory_space<vmem>>, %arg8: memref<1x256xf32, #tpu.memory_space<vmem>>, %arg9: memref<1x256xf32, #tpu.memory_space<vmem>>, %arg10: memref<1x256xf32, #tpu.memory_space<vmem>>, %arg11: memref<1x256xf32, #tpu.memory_space<vmem>>, %arg12: memref<1x256xf32, #tpu.memory_space<vmem>>, %arg13: memref<1x256xf32, #tpu.memory_space<vmem>>) attributes {dimension_semantics = [#tpu.dimension_semantics<parallel>], iteration_bounds = array<i64: 2>, scalar_prefetch = 0 : i64, scratch_operands = 0 : i64, tpu.core_type = #tpu.core_type<tc>, window_params = [{transform_indices = @transform_0, window_bounds = array<i64: 4, 1, 256>}, {transform_indices = @transform_1, window_bounds = array<i64: 4, 1, 256>}, {transform_indices = @transform_2, window_bounds = array<i64: 4, 1, 256>}, {transform_indices = @transform_3, window_bounds = array<i64: 4, 1, 256>}, {transform_indices = @transform_4, window_bounds = array<i64: 1, 256>}, {transform_indices = @transform_5, window_bounds = array<i64: 1, 256>}, {transform_indices = @transform_6, window_bounds = array<i64: 1, 256>}, {transform_indices = @transform_7, window_bounds = array<i64: 1, 256>}, {transform_indices = @transform_8, window_bounds = array<i64: 1, 256>}, {transform_indices = @transform_9, window_bounds = array<i64: 1, 256>}, {transform_indices = @transform_10, window_bounds = array<i64: 1, 256>}, {transform_indices = @transform_11, window_bounds = array<i64: 1, 256>}, {transform_indices = @transform_12, window_bounds = array<i64: 1, 256>}]} {
    %c0 = arith.constant 0 : index
    %c0_0 = arith.constant 0 : index
    %c0_1 = arith.constant 0 : index
    %0 = vector.load %arg1[%c0, %c0_0, %c0_1] : memref<4x1x256xf32, #tpu.memory_space<vmem>>, vector<4x1x256xf32>
    %c0_2 = arith.constant 0 : index
    %c0_3 = arith.constant 0 : index
    %c0_4 = arith.constant 0 : index
    %1 = vector.load %arg2[%c0_2, %c0_3, %c0_4] : memref<4x1x256xf32, #tpu.memory_space<vmem>>, vector<4x1x256xf32>
    %c0_5 = arith.constant 0 : index
    %c0_6 = arith.constant 0 : index
    %c0_7 = arith.constant 0 : index
    %2 = vector.load %arg3[%c0_5, %c0_6, %c0_7] : memref<4x1x256xf32, #tpu.memory_space<vmem>>, vector<4x1x256xf32>
    %c0_8 = arith.constant 0 : index
    %c0_9 = arith.constant 0 : index
    %c0_10 = arith.constant 0 : index
    %3 = vector.load %arg4[%c0_8, %c0_9, %c0_10] : memref<4x1x256xf32, #tpu.memory_space<vmem>>, vector<4x1x256xf32>
    %4 = arith.addf %0, %3 : vector<4x1x256xf32>
    %5 = arith.addf %1, %2 : vector<4x1x256xf32>
    %6 = arith.subf %0, %3 : vector<4x1x256xf32>
    %7 = arith.subf %1, %2 : vector<4x1x256xf32>
    %8 = arith.subf %4, %5 : vector<4x1x256xf32>
    %cst = arith.constant 5.000000e-01 : f32
    %9 = vector.broadcast %cst : f32 to vector<4x1x256xf32>
    %10 = arith.mulf %9, %8 : vector<4x1x256xf32>
    %11 = arith.addf %6, %7 : vector<4x1x256xf32>
    %cst_11 = arith.constant 5.000000e-01 : f32
    %12 = vector.broadcast %cst_11 : f32 to vector<4x1x256xf32>
    %13 = arith.mulf %12, %11 : vector<4x1x256xf32>
    %14 = arith.subf %6, %7 : vector<4x1x256xf32>
    %cst_12 = arith.constant 5.000000e-01 : f32
    %15 = vector.broadcast %cst_12 : f32 to vector<4x1x256xf32>
    %16 = arith.mulf %15, %14 : vector<4x1x256xf32>
    %17 = arith.addf %4, %5 : vector<4x1x256xf32>
    %cst_13 = arith.constant 5.000000e-01 : f32
    %18 = vector.broadcast %cst_13 : f32 to vector<4x1x256xf32>
    %19 = arith.mulf %18, %17 : vector<4x1x256xf32>
    %20 = vector.extract_strided_slice %10 {offsets = [0, 0, 0], sizes = [1, 1, 256], strides = [1, 1, 1]} : vector<4x1x256xf32> to vector<1x1x256xf32>
    %21 = vector.shape_cast %20 : vector<1x1x256xf32> to vector<1x256xf32>
    %cst_14 = arith.constant 2.500000e-01 : f32
    %22 = vector.broadcast %cst_14 : f32 to vector<1x256xf32>
    %23 = arith.mulf %22, %21 : vector<1x256xf32>
    %c0_15 = arith.constant 0 : index
    %c0_16 = arith.constant 0 : index
    %24 = vector.load %arg5[%c0_15, %c0_16] : memref<1x256xf32, #tpu.memory_space<vmem>>, vector<1x256xf32>
    tpu.vector_store %arg5[%c0_15, %c0_16], %23 {strides = array<i32>} : memref<1x256xf32, #tpu.memory_space<vmem>>, vector<1x256xf32>,
    %25 = vector.extract_strided_slice %16 {offsets = [0, 0, 0], sizes = [1, 1, 256], strides = [1, 1, 1]} : vector<4x1x256xf32> to vector<1x1x256xf32>
    %26 = vector.shape_cast %25 : vector<1x1x256xf32> to vector<1x256xf32>
    %27 = vector.extract_strided_slice %10 {offsets = [1, 0, 0], sizes = [1, 1, 256], strides = [1, 1, 1]} : vector<4x1x256xf32> to vector<1x1x256xf32>
    %28 = vector.shape_cast %27 : vector<1x1x256xf32> to vector<1x256xf32>
    %29 = arith.addf %26, %28 : vector<1x256xf32>
    %cst_17 = arith.constant 2.500000e-01 : f32
    %30 = vector.broadcast %cst_17 : f32 to vector<1x256xf32>
    %31 = arith.mulf %30, %29 : vector<1x256xf32>
    %c0_18 = arith.constant 0 : index
    %c0_19 = arith.constant 0 : index
    %32 = vector.load %arg6[%c0_18, %c0_19] : memref<1x256xf32, #tpu.memory_space<vmem>>, vector<1x256xf32>
    tpu.vector_store %arg6[%c0_18, %c0_19], %31 {strides = array<i32>} : memref<1x256xf32, #tpu.memory_space<vmem>>, vector<1x256xf32>,
    %33 = vector.extract_strided_slice %13 {offsets = [0, 0, 0], sizes = [1, 1, 256], strides = [1, 1, 1]} : vector<4x1x256xf32> to vector<1x1x256xf32>
    %34 = vector.shape_cast %33 : vector<1x1x256xf32> to vector<1x256xf32>
    %35 = vector.extract_strided_slice %10 {offsets = [2, 0, 0], sizes = [1, 1, 256], strides = [1, 1, 1]} : vector<4x1x256xf32> to vector<1x1x256xf32>
    %36 = vector.shape_cast %35 : vector<1x1x256xf32> to vector<1x256xf32>
    %37 = arith.addf %34, %36 : vector<1x256xf32>
    %cst_20 = arith.constant 2.500000e-01 : f32
    %38 = vector.broadcast %cst_20 : f32 to vector<1x256xf32>
    %39 = arith.mulf %38, %37 : vector<1x256xf32>
    %c0_21 = arith.constant 0 : index
    %c0_22 = arith.constant 0 : index
    %40 = vector.load %arg7[%c0_21, %c0_22] : memref<1x256xf32, #tpu.memory_space<vmem>>, vector<1x256xf32>
    tpu.vector_store %arg7[%c0_21, %c0_22], %39 {strides = array<i32>} : memref<1x256xf32, #tpu.memory_space<vmem>>, vector<1x256xf32>,
    %41 = vector.extract_strided_slice %19 {offsets = [0, 0, 0], sizes = [1, 1, 256], strides = [1, 1, 1]} : vector<4x1x256xf32> to vector<1x1x256xf32>
    %42 = vector.shape_cast %41 : vector<1x1x256xf32> to vector<1x256xf32>
    %43 = vector.extract_strided_slice %13 {offsets = [1, 0, 0], sizes = [1, 1, 256], strides = [1, 1, 1]} : vector<4x1x256xf32> to vector<1x1x256xf32>
    %44 = vector.shape_cast %43 : vector<1x1x256xf32> to vector<1x256xf32>
    %45 = arith.addf %42, %44 : vector<1x256xf32>
    %46 = vector.extract_strided_slice %16 {offsets = [2, 0, 0], sizes = [1, 1, 256], strides = [1, 1, 1]} : vector<4x1x256xf32> to vector<1x1x256xf32>
    %47 = vector.shape_cast %46 : vector<1x1x256xf32> to vector<1x256xf32>
    %48 = arith.addf %45, %47 : vector<1x256xf32>
    %49 = vector.extract_strided_slice %10 {offsets = [3, 0, 0], sizes = [1, 1, 256], strides = [1, 1, 1]} : vector<4x1x256xf32> to vector<1x1x256xf32>
    %50 = vector.shape_cast %49 : vector<1x1x256xf32> to vector<1x256xf32>
    %51 = arith.addf %48, %50 : vector<1x256xf32>
    %cst_23 = arith.constant 2.500000e-01 : f32
    %52 = vector.broadcast %cst_23 : f32 to vector<1x256xf32>
    %53 = arith.mulf %52, %51 : vector<1x256xf32>
    %c0_24 = arith.constant 0 : index
    %c0_25 = arith.constant 0 : index
    %54 = vector.load %arg8[%c0_24, %c0_25] : memref<1x256xf32, #tpu.memory_space<vmem>>, vector<1x256xf32>
    tpu.vector_store %arg8[%c0_24, %c0_25], %53 {strides = array<i32>} : memref<1x256xf32, #tpu.memory_space<vmem>>, vector<1x256xf32>,
    %55 = vector.extract_strided_slice %16 {offsets = [1, 0, 0], sizes = [1, 1, 256], strides = [1, 1, 1]} : vector<4x1x256xf32> to vector<1x1x256xf32>
    %56 = vector.shape_cast %55 : vector<1x1x256xf32> to vector<1x256xf32>
    %cst_26 = arith.constant 2.500000e-01 : f32
    %57 = vector.broadcast %cst_26 : f32 to vector<1x256xf32>
    %58 = arith.mulf %57, %56 : vector<1x256xf32>
    %c0_27 = arith.constant 0 : index
    %c0_28 = arith.constant 0 : index
    %59 = vector.load %arg9[%c0_27, %c0_28] : memref<1x256xf32, #tpu.memory_space<vmem>>, vector<1x256xf32>
    tpu.vector_store %arg9[%c0_27, %c0_28], %58 {strides = array<i32>} : memref<1x256xf32, #tpu.memory_space<vmem>>, vector<1x256xf32>,
    %60 = vector.extract_strided_slice %13 {offsets = [2, 0, 0], sizes = [1, 1, 256], strides = [1, 1, 1]} : vector<4x1x256xf32> to vector<1x1x256xf32>
    %61 = vector.shape_cast %60 : vector<1x1x256xf32> to vector<1x256xf32>
    %cst_29 = arith.constant 2.500000e-01 : f32
    %62 = vector.broadcast %cst_29 : f32 to vector<1x256xf32>
    %63 = arith.mulf %62, %61 : vector<1x256xf32>
    %c0_30 = arith.constant 0 : index
    %c0_31 = arith.constant 0 : index
    %64 = vector.load %arg10[%c0_30, %c0_31] : memref<1x256xf32, #tpu.memory_space<vmem>>, vector<1x256xf32>
    tpu.vector_store %arg10[%c0_30, %c0_31], %63 {strides = array<i32>} : memref<1x256xf32, #tpu.memory_space<vmem>>, vector<1x256xf32>,
    %65 = vector.extract_strided_slice %19 {offsets = [3, 0, 0], sizes = [1, 1, 256], strides = [1, 1, 1]} : vector<4x1x256xf32> to vector<1x1x256xf32>
    %66 = vector.shape_cast %65 : vector<1x1x256xf32> to vector<1x256xf32>
    %cst_32 = arith.constant 2.500000e-01 : f32
    %67 = vector.broadcast %cst_32 : f32 to vector<1x256xf32>
    %68 = arith.mulf %67, %66 : vector<1x256xf32>
    %c0_33 = arith.constant 0 : index
    %c0_34 = arith.constant 0 : index
    %69 = vector.load %arg11[%c0_33, %c0_34] : memref<1x256xf32, #tpu.memory_space<vmem>>, vector<1x256xf32>
    tpu.vector_store %arg11[%c0_33, %c0_34], %68 {strides = array<i32>} : memref<1x256xf32, #tpu.memory_space<vmem>>, vector<1x256xf32>,
    %70 = vector.extract_strided_slice %19 {offsets = [2, 0, 0], sizes = [1, 1, 256], strides = [1, 1, 1]} : vector<4x1x256xf32> to vector<1x1x256xf32>
    %71 = vector.shape_cast %70 : vector<1x1x256xf32> to vector<1x256xf32>
    %72 = vector.extract_strided_slice %13 {offsets = [3, 0, 0], sizes = [1, 1, 256], strides = [1, 1, 1]} : vector<4x1x256xf32> to vector<1x1x256xf32>
    %73 = vector.shape_cast %72 : vector<1x1x256xf32> to vector<1x256xf32>
    %74 = arith.addf %71, %73 : vector<1x256xf32>
    %cst_35 = arith.constant 2.500000e-01 : f32
    %75 = vector.broadcast %cst_35 : f32 to vector<1x256xf32>
    %76 = arith.mulf %75, %74 : vector<1x256xf32>
    %c0_36 = arith.constant 0 : index
    %c0_37 = arith.constant 0 : index
    %77 = vector.load %arg12[%c0_36, %c0_37] : memref<1x256xf32, #tpu.memory_space<vmem>>, vector<1x256xf32>
    tpu.vector_store %arg12[%c0_36, %c0_37], %76 {strides = array<i32>} : memref<1x256xf32, #tpu.memory_space<vmem>>, vector<1x256xf32>,
    %78 = vector.extract_strided_slice %19 {offsets = [1, 0, 0], sizes = [1, 1, 256], strides = [1, 1, 1]} : vector<4x1x256xf32> to vector<1x1x256xf32>
    %79 = vector.shape_cast %78 : vector<1x1x256xf32> to vector<1x256xf32>
    %80 = vector.extract_strided_slice %16 {offsets = [3, 0, 0], sizes = [1, 1, 256], strides = [1, 1, 1]} : vector<4x1x256xf32> to vector<1x1x256xf32>
    %81 = vector.shape_cast %80 : vector<1x1x256xf32> to vector<1x256xf32>
    %82 = arith.addf %79, %81 : vector<1x256xf32>
    %cst_38 = arith.constant 2.500000e-01 : f32
    %83 = vector.broadcast %cst_38 : f32 to vector<1x256xf32>
    %84 = arith.mulf %83, %82 : vector<1x256xf32>
    %c0_39 = arith.constant 0 : index
    %c0_40 = arith.constant 0 : index
    %85 = vector.load %arg13[%c0_39, %c0_40] : memref<1x256xf32, #tpu.memory_space<vmem>>, vector<1x256xf32>
    tpu.vector_store %arg13[%c0_39, %c0_40], %84 {strides = array<i32>} : memref<1x256xf32, #tpu.memory_space<vmem>>, vector<1x256xf32>,
    return
  }
  func.func @transform_0(%arg0: i32) -> (i32, i32, i32) {
    %c0_i32 = arith.constant 0 : i32
    %c0_i32_0 = arith.constant 0 : i32
    %c0_i32_1 = arith.constant 0 : i32
    return %c0_i32, %c0_i32_0, %arg0 : i32, i32, i32
  }
  func.func @transform_1(%arg0: i32) -> (i32, i32, i32) {
    %c0_i32 = arith.constant 0 : i32
    %c0_i32_0 = arith.constant 0 : i32
    %c0_i32_1 = arith.constant 0 : i32
    return %c0_i32, %c0_i32_0, %arg0 : i32, i32, i32
  }
  func.func @transform_2(%arg0: i32) -> (i32, i32, i32) {
    %c0_i32 = arith.constant 0 : i32
    %c0_i32_0 = arith.constant 0 : i32
    %c0_i32_1 = arith.constant 0 : i32
    return %c0_i32, %c0_i32_0, %arg0 : i32, i32, i32
  }
  func.func @transform_3(%arg0: i32) -> (i32, i32, i32) {
    %c0_i32 = arith.constant 0 : i32
    %c0_i32_0 = arith.constant 0 : i32
    %c0_i32_1 = arith.constant 0 : i32
    return %c0_i32, %c0_i32_0, %arg0 : i32, i32, i32
  }
  func.func @transform_4(%arg0: i32) -> (i32, i32) {
    %c0_i32 = arith.constant 0 : i32
    %c0_i32_0 = arith.constant 0 : i32
    return %c0_i32, %arg0 : i32, i32
  }
  func.func @transform_5(%arg0: i32) -> (i32, i32) {
    %c0_i32 = arith.constant 0 : i32
    %c0_i32_0 = arith.constant 0 : i32
    return %c0_i32, %arg0 : i32, i32
  }
  func.func @transform_6(%arg0: i32) -> (i32, i32) {
    %c0_i32 = arith.constant 0 : i32
    %c0_i32_0 = arith.constant 0 : i32
    return %c0_i32, %arg0 : i32, i32
  }
  func.func @transform_7(%arg0: i32) -> (i32, i32) {
    %c0_i32 = arith.constant 0 : i32
    %c0_i32_0 = arith.constant 0 : i32
    return %c0_i32, %arg0 : i32, i32
  }
  func.func @transform_8(%arg0: i32) -> (i32, i32) {
    %c0_i32 = arith.constant 0 : i32
    %c0_i32_0 = arith.constant 0 : i32
    return %c0_i32, %arg0 : i32, i32
  }
  func.func @transform_9(%arg0: i32) -> (i32, i32) {
    %c0_i32 = arith.constant 0 : i32
    %c0_i32_0 = arith.constant 0 : i32
    return %c0_i32, %arg0 : i32, i32
  }
  func.func @transform_10(%arg0: i32) -> (i32, i32) {
    %c0_i32 = arith.constant 0 : i32
    %c0_i32_0 = arith.constant 0 : i32
    return %c0_i32, %arg0 : i32, i32
  }
  func.func @transform_11(%arg0: i32) -> (i32, i32) {
    %c0_i32 = arith.constant 0 : i32
    %c0_i32_0 = arith.constant 0 : i32
    return %c0_i32, %arg0 : i32, i32
  }
  func.func @transform_12(%arg0: i32) -> (i32, i32) {
    %c0_i32 = arith.constant 0 : i32
    %c0_i32_0 = arith.constant 0 : i32
    return %c0_i32, %arg0 : i32, i32
  }
}

</mosaic_0001>

<llo_original>
// kernel: dhsn1_2d_forward.3
$region0: #{dhsn1_2d_forward.3}
  #allocation0 [shape = 'u32[]', space=smem, size = 0x4, offset = 0x4, fixed_abs, tag = 'smem constant byte address 0x4 - core index']
  #allocation1 [shape = 'u32[72,128]{1,0:T(1,128)}', space=vmem, size = 0x9000, scoped, tag = 'internal scratch']
  %s0 = inlined_call_operand.vmem [shape: f32[4,1,512], index: 0, kind: input, shape index: {}]
  %s1 = inlined_call_operand.vmem [shape: f32[4,1,512], index: 1, kind: input, shape index: {}]
  %s2 = inlined_call_operand.vmem [shape: f32[4,1,512], index: 2, kind: input, shape index: {}]
  %s3 = inlined_call_operand.vmem [shape: f32[4,1,512], index: 3, kind: input, shape index: {}]
  %s4 = inlined_call_operand.vmem [shape: f32[1,512], index: 4, kind: output, shape index: {0}]
  %s5 = inlined_call_operand.vmem [shape: f32[1,512], index: 5, kind: output, shape index: {1}]
  %s6 = inlined_call_operand.vmem [shape: f32[1,512], index: 6, kind: output, shape index: {2}]
  %s7 = inlined_call_operand.vmem [shape: f32[1,512], index: 7, kind: output, shape index: {3}]
  %s8 = inlined_call_operand.vmem [shape: f32[1,512], index: 8, kind: output, shape index: {4}]
  %s9 = inlined_call_operand.vmem [shape: f32[1,512], index: 9, kind: output, shape index: {5}]
  %s10 = inlined_call_operand.vmem [shape: f32[1,512], index: 10, kind: output, shape index: {6}]
  %s11 = inlined_call_operand.vmem [shape: f32[1,512], index: 11, kind: output, shape index: {7}]
  %s12 = inlined_call_operand.vmem [shape: f32[1,512], index: 12, kind: output, shape index: {8}]
  %13 = xla_tuple %s4, %s5, %s6, %s7, %s8, %s9, %s10, %s11, %s12
  %s14 = sld [smem:[#allocation0]]
  $region277: #{dhsn1_2d_forward.3} parent=0
    _
  %s16 = ssub.s32 1, %s14
  %s17 = scalar_select 0, %s16, %s14
  $region1: #{dhsn1_2d_forward.3} parent=0
    #allocation2 [shape = 'u8[8192]{0}', space=vmem, size = 0x2000, scoped, tag = 'input window, operand 0']
    #allocation3 [shape = 'u8[8192]{0}', space=vmem, size = 0x2000, scoped, tag = 'input window, operand 1']
    #allocation4 [shape = 'u8[8192]{0}', space=vmem, size = 0x2000, scoped, tag = 'input window, operand 2']
    #allocation5 [shape = 'u8[8192]{0}', space=vmem, size = 0x2000, scoped, tag = 'input window, operand 3']
    loop: start=0, step=1, limit=4
    $region2: #{dhsn1_2d_forward.3} parent=1 // loop_pre_header
      _
    $region3: #{dhsn1_2d_forward.3} parent=1 // loop_header
      %s19 = sphi 0, %s23
      %p20 = scmp.ge.s32.totalorder %s19, 4
      %s29 = sphi 0, %s31
      %s32 = sphi 0, %s29
      %s33 = sphi 0, %s32
      %s49 = sphi 0, %s33
      %s55 = sphi 0, %s57
      %s58 = sphi 0, %s55
      %s59 = sphi 0, %s58
      %s75 = sphi 0, %s59
      %s81 = sphi 0, %s83
      %s84 = sphi 0, %s81
      %s85 = sphi 0, %s84
      %s101 = sphi 0, %s85
      %s107 = sphi 0, %s109
      %s110 = sphi 0, %s107
      %s111 = sphi 0, %s110
      %s127 = sphi 0, %s111
      %s133 = sphi 0, %s135
      %s136 = sphi 0, %s133
      %s137 = sphi 0, %s136
      %s153 = sphi 0, %s137
      %s159 = sphi 0, %s161
      %s162 = sphi 0, %s159
      %s163 = sphi 0, %s162
      %s179 = sphi 0, %s163
      %s185 = sphi 0, %s187
      %s188 = sphi 0, %s185
      %s189 = sphi 0, %s188
      %s205 = sphi 0, %s189
      %s211 = sphi 0, %s213
      %s214 = sphi 0, %s211
      %s215 = sphi 0, %s214
      %s231 = sphi 0, %s215
      %s237 = sphi 0, %s239
      %s240 = sphi 0, %s237
      %s241 = sphi 0, %s240
      %s257 = sphi 0, %s241
      %s263 = sphi 0, %s265
      %s266 = sphi 0, %s263
      %s267 = sphi 0, %s266
      %s283 = sphi 0, %s267
      %s289 = sphi 0, %s291
      %s292 = sphi 0, %s289
      %s293 = sphi 0, %s292
      %s309 = sphi 0, %s293
      %s315 = sphi 0, %s317
      %s318 = sphi 0, %s315
      %s319 = sphi 0, %s318
      %s335 = sphi 0, %s319
      %s341 = sphi 0, %s343
      %s344 = sphi 0, %s341
      %s345 = sphi 0, %s344
      %s361 = sphi 0, %s345
    $region4: #{dhsn1_2d_forward.3} parent=1 // loop_header_branch
      %22 = sbr.rel (%p20) target = $region8
    $region5: #{dhsn1_2d_forward.3} parent=1 // loop_body
      %s24 = ssub.s32 %s19, 1
      %s25 = ssub.s32 %s19, 2
      %s26 = sadd.s32 %s19, 1
      %s27 = ssub.s32 %s19, %s26
      %p28 = scmp.eq.s32.totalorder %s27, 0
      %s30 = sadd.s32 %s29, 1
      %s31 = scalar_select %p28, %s29, %s30
      %p34 = pneg %p28
      %p35 = scmp.eq.s32.totalorder %s19, 1
      %p36 = por %p34, %p35
      %p37 = scmp.ne.s32.totalorder %s29, %s32
      %p38 = scmp.eq.s32.totalorder %s19, 0
      %p39 = por %p37, %p38
      %p40 = scmp.ne.s32.totalorder %s29, %s32
      %p41 = scmp.eq.s32.totalorder %s24, 1
      %p42 = por %p40, %p41
      %p43 = scmp.ne.s32.totalorder %s32, %s33
      %p44 = scmp.eq.s32.totalorder %s24, 0
      %p45 = por %p43, %p44
      %p46 = scmp.ne.s32.totalorder %s32, %s33
      %p47 = scmp.eq.s32.totalorder %s25, 1
      %p48 = por %p46, %p47
      %p50 = scmp.ne.s32.totalorder %s33, %s49
      %p51 = scmp.eq.s32.totalorder %s25, 0
      %p52 = por %p50, %p51
      %s53 = ssub.s32 %s19, %s26
      %p54 = scmp.eq.s32.totalorder %s53, 0
      %s56 = sadd.s32 %s55, 1
      %s57 = scalar_select %p54, %s55, %s56
      %p60 = pneg %p54
      %p61 = scmp.eq.s32.totalorder %s19, 1
      %p62 = por %p60, %p61
      %p63 = scmp.ne.s32.totalorder %s55, %s58
      %p64 = scmp.eq.s32.totalorder %s19, 0
      %p65 = por %p63, %p64
      %p66 = scmp.ne.s32.totalorder %s55, %s58
      %p67 = scmp.eq.s32.totalorder %s24, 1
      %p68 = por %p66, %p67
      %p69 = scmp.ne.s32.totalorder %s58, %s59
      %p70 = scmp.eq.s32.totalorder %s24, 0
      %p71 = por %p69, %p70
      %p72 = scmp.ne.s32.totalorder %s58, %s59
      %p73 = scmp.eq.s32.totalorder %s25, 1
      %p74 = por %p72, %p73
      %p76 = scmp.ne.s32.totalorder %s59, %s75
      %p77 = scmp.eq.s32.totalorder %s25, 0
      %p78 = por %p76, %p77
      %s79 = ssub.s32 %s19, %s26
      %p80 = scmp.eq.s32.totalorder %s79, 0
      %s82 = sadd.s32 %s81, 1
      %s83 = scalar_select %p80, %s81, %s82
      %p86 = pneg %p80
      %p87 = scmp.eq.s32.totalorder %s19, 1
      %p88 = por %p86, %p87
      %p89 = scmp.ne.s32.totalorder %s81, %s84
      %p90 = scmp.eq.s32.totalorder %s19, 0
      %p91 = por %p89, %p90
      %p92 = scmp.ne.s32.totalorder %s81, %s84
      %p93 = scmp.eq.s32.totalorder %s24, 1
      %p94 = por %p92, %p93
      %p95 = scmp.ne.s32.totalorder %s84, %s85
      %p96 = scmp.eq.s32.totalorder %s24, 0
      %p97 = por %p95, %p96
      %p98 = scmp.ne.s32.totalorder %s84, %s85
      %p99 = scmp.eq.s32.totalorder %s25, 1
      %p100 = por %p98, %p99
      %p102 = scmp.ne.s32.totalorder %s85, %s101
      %p103 = scmp.eq.s32.totalorder %s25, 0
      %p104 = por %p102, %p103
      %s105 = ssub.s32 %s19, %s26
      %p106 = scmp.eq.s32.totalorder %s105, 0
      %s108 = sadd.s32 %s107, 1
      %s109 = scalar_select %p106, %s107, %s108
      %p112 = pneg %p106
      %p113 = scmp.eq.s32.totalorder %s19, 1
      %p114 = por %p112, %p113
      %p115 = scmp.ne.s32.totalorder %s107, %s110
      %p116 = scmp.eq.s32.totalorder %s19, 0
      %p117 = por %p115, %p116
      %p118 = scmp.ne.s32.totalorder %s107, %s110
      %p119 = scmp.eq.s32.totalorder %s24, 1
      %p120 = por %p118, %p119
      %p121 = scmp.ne.s32.totalorder %s110, %s111
      %p122 = scmp.eq.s32.totalorder %s24, 0
      %p123 = por %p121, %p122
      %p124 = scmp.ne.s32.totalorder %s110, %s111
      %p125 = scmp.eq.s32.totalorder %s25, 1
      %p126 = por %p124, %p125
      %p128 = scmp.ne.s32.totalorder %s111, %s127
      %p129 = scmp.eq.s32.totalorder %s25, 0
      %p130 = por %p128, %p129
      %s131 = ssub.s32 %s19, %s26
      %p132 = scmp.eq.s32.totalorder %s131, 0
      %s134 = sadd.s32 %s133, 1
      %s135 = scalar_select %p132, %s133, %s134
      %p138 = pneg %p132
      %p139 = scmp.eq.s32.totalorder %s19, 1
      %p140 = por %p138, %p139
      %p141 = scmp.ne.s32.totalorder %s133, %s136
      %p142 = scmp.eq.s32.totalorder %s19, 0
      %p143 = por %p141, %p142
      %p144 = scmp.ne.s32.totalorder %s133, %s136
      %p145 = scmp.eq.s32.totalorder %s24, 1
      %p146 = por %p144, %p145
      %p147 = scmp.ne.s32.totalorder %s136, %s137
      %p148 = scmp.eq.s32.totalorder %s24, 0
      %p149 = por %p147, %p148
      %p150 = scmp.ne.s32.totalorder %s136, %s137
      %p151 = scmp.eq.s32.totalorder %s25, 1
      %p152 = por %p150, %p151
      %p154 = scmp.ne.s32.totalorder %s137, %s153
      %p155 = scmp.eq.s32.totalorder %s25, 0
      %p156 = por %p154, %p155
      %s157 = ssub.s32 %s19, %s26
      %p158 = scmp.eq.s32.totalorder %s157, 0
      %s160 = sadd.s32 %s159, 1
      %s161 = scalar_select %p158, %s159, %s160
      %p164 = pneg %p158
      %p165 = scmp.eq.s32.totalorder %s19, 1
      %p166 = por %p164, %p165
      %p167 = scmp.ne.s32.totalorder %s159, %s162
      %p168 = scmp.eq.s32.totalorder %s19, 0
      %p169 = por %p167, %p168
      %p170 = scmp.ne.s32.totalorder %s159, %s162
      %p171 = scmp.eq.s32.totalorder %s24, 1
      %p172 = por %p170, %p171
      %p173 = scmp.ne.s32.totalorder %s162, %s163
      %p174 = scmp.eq.s32.totalorder %s24, 0
      %p175 = por %p173, %p174
      %p176 = scmp.ne.s32.totalorder %s162, %s163
      %p177 = scmp.eq.s32.totalorder %s25, 1
      %p178 = por %p176, %p177
      %p180 = scmp.ne.s32.totalorder %s163, %s179
      %p181 = scmp.eq.s32.totalorder %s25, 0
      %p182 = por %p180, %p181
      %s183 = ssub.s32 %s19, %s26
      %p184 = scmp.eq.s32.totalorder %s183, 0
      %s186 = sadd.s32 %s185, 1
      %s187 = scalar_select %p184, %s185, %s186
      %p190 = pneg %p184
      %p191 = scmp.eq.s32.totalorder %s19, 1
      %p192 = por %p190, %p191
      %p193 = scmp.ne.s32.totalorder %s185, %s188
      %p194 = scmp.eq.s32.totalorder %s19, 0
      %p195 = por %p193, %p194
      %p196 = scmp.ne.s32.totalorder %s185, %s188
      %p197 = scmp.eq.s32.totalorder %s24, 1
      %p198 = por %p196, %p197
      %p199 = scmp.ne.s32.totalorder %s188, %s189
      %p200 = scmp.eq.s32.totalorder %s24, 0
      %p201 = por %p199, %p200
      %p202 = scmp.ne.s32.totalorder %s188, %s189
      %p203 = scmp.eq.s32.totalorder %s25, 1
      %p204 = por %p202, %p203
      %p206 = scmp.ne.s32.totalorder %s189, %s205
      %p207 = scmp.eq.s32.totalorder %s25, 0
      %p208 = por %p206, %p207
      %s209 = ssub.s32 %s19, %s26
      %p210 = scmp.eq.s32.totalorder %s209, 0
      %s212 = sadd.s32 %s211, 1
      %s213 = scalar_select %p210, %s211, %s212
      %p216 = pneg %p210
      %p217 = scmp.eq.s32.totalorder %s19, 1
      %p218 = por %p216, %p217
      %p219 = scmp.ne.s32.totalorder %s211, %s214
      %p220 = scmp.eq.s32.totalorder %s19, 0
      %p221 = por %p219, %p220
      %p222 = scmp.ne.s32.totalorder %s211, %s214
      %p223 = scmp.eq.s32.totalorder %s24, 1
      %p224 = por %p222, %p223
      %p225 = scmp.ne.s32.totalorder %s214, %s215
      %p226 = scmp.eq.s32.totalorder %s24, 0
      %p227 = por %p225, %p226
      %p228 = scmp.ne.s32.totalorder %s214, %s215
      %p229 = scmp.eq.s32.totalorder %s25, 1
      %p230 = por %p228, %p229
      %p232 = scmp.ne.s32.totalorder %s215, %s231
      %p233 = scmp.eq.s32.totalorder %s25, 0
      %p234 = por %p232, %p233
      %s235 = ssub.s32 %s19, %s26
      %p236 = scmp.eq.s32.totalorder %s235, 0
      %s238 = sadd.s32 %s237, 1
      %s239 = scalar_select %p236, %s237, %s238
      %p242 = pneg %p236
      %p243 = scmp.eq.s32.totalorder %s19, 1
      %p244 = por %p242, %p243
      %p245 = scmp.ne.s32.totalorder %s237, %s240
      %p246 = scmp.eq.s32.totalorder %s19, 0
      %p247 = por %p245, %p246
      %p248 = scmp.ne.s32.totalorder %s237, %s240
      %p249 = scmp.eq.s32.totalorder %s24, 1
      %p250 = por %p248, %p249
      %p251 = scmp.ne.s32.totalorder %s240, %s241
      %p252 = scmp.eq.s32.totalorder %s24, 0
      %p253 = por %p251, %p252
      %p254 = scmp.ne.s32.totalorder %s240, %s241
      %p255 = scmp.eq.s32.totalorder %s25, 1
      %p256 = por %p254, %p255
      %p258 = scmp.ne.s32.totalorder %s241, %s257
      %p259 = scmp.eq.s32.totalorder %s25, 0
      %p260 = por %p258, %p259
      %s261 = ssub.s32 %s19, %s26
      %p262 = scmp.eq.s32.totalorder %s261, 0
      %s264 = sadd.s32 %s263, 1
      %s265 = scalar_select %p262, %s263, %s264
      %p268 = pneg %p262
      %p269 = scmp.eq.s32.totalorder %s19, 1
      %p270 = por %p268, %p269
      %p271 = scmp.ne.s32.totalorder %s263, %s266
      %p272 = scmp.eq.s32.totalorder %s19, 0
      %p273 = por %p271, %p272
      %p274 = scmp.ne.s32.totalorder %s263, %s266
      %p275 = scmp.eq.s32.totalorder %s24, 1
      %p276 = por %p274, %p275
      %p277 = scmp.ne.s32.totalorder %s266, %s267
      %p278 = scmp.eq.s32.totalorder %s24, 0
      %p279 = por %p277, %p278
      %p280 = scmp.ne.s32.totalorder %s266, %s267
      %p281 = scmp.eq.s32.totalorder %s25, 1
      %p282 = por %p280, %p281
      %p284 = scmp.ne.s32.totalorder %s267, %s283
      %p285 = scmp.eq.s32.totalorder %s25, 0
      %p286 = por %p284, %p285
      %s287 = ssub.s32 %s19, %s26
      %p288 = scmp.eq.s32.totalorder %s287, 0
      %s290 = sadd.s32 %s289, 1
      %s291 = scalar_select %p288, %s289, %s290
      %p294 = pneg %p288
      %p295 = scmp.eq.s32.totalorder %s19, 1
      %p296 = por %p294, %p295
      %p297 = scmp.ne.s32.totalorder %s289, %s292
      %p298 = scmp.eq.s32.totalorder %s19, 0
      %p299 = por %p297, %p298
      %p300 = scmp.ne.s32.totalorder %s289, %s292
      %p301 = scmp.eq.s32.totalorder %s24, 1
      %p302 = por %p300, %p301
      %p303 = scmp.ne.s32.totalorder %s292, %s293
      %p304 = scmp.eq.s32.totalorder %s24, 0
      %p305 = por %p303, %p304
      %p306 = scmp.ne.s32.totalorder %s292, %s293
      %p307 = scmp.eq.s32.totalorder %s25, 1
      %p308 = por %p306, %p307
      %p310 = scmp.ne.s32.totalorder %s293, %s309
      %p311 = scmp.eq.s32.totalorder %s25, 0
      %p312 = por %p310, %p311
      %s313 = ssub.s32 %s19, %s26
      %p314 = scmp.eq.s32.totalorder %s313, 0
      %s316 = sadd.s32 %s315, 1
      %s317 = scalar_select %p314, %s315, %s316
      %p320 = pneg %p314
      %p321 = scmp.eq.s32.totalorder %s19, 1
      %p322 = por %p320, %p321
      %p323 = scmp.ne.s32.totalorder %s315, %s318
      %p324 = scmp.eq.s32.totalorder %s19, 0
      %p325 = por %p323, %p324
      %p326 = scmp.ne.s32.totalorder %s315, %s318
      %p327 = scmp.eq.s32.totalorder %s24, 1
      %p328 = por %p326, %p327
      %p329 = scmp.ne.s32.totalorder %s318, %s319
      %p330 = scmp.eq.s32.totalorder %s24, 0
      %p331 = por %p329, %p330
      %p332 = scmp.ne.s32.totalorder %s318, %s319
      %p333 = scmp.eq.s32.totalorder %s25, 1
      %p334 = por %p332, %p333
      %p336 = scmp.ne.s32.totalorder %s319, %s335
      %p337 = scmp.eq.s32.totalorder %s25, 0
      %p338 = por %p336, %p337
      %s339 = ssub.s32 %s19, %s26
      %p340 = scmp.eq.s32.totalorder %s339, 0
      %s342 = sadd.s32 %s341, 1
      %s343 = scalar_select %p340, %s341, %s342
      %p346 = pneg %p340
      %p347 = scmp.eq.s32.totalorder %s19, 1
      %p348 = por %p346, %p347
      %p349 = scmp.ne.s32.totalorder %s341, %s344
      %p350 = scmp.eq.s32.totalorder %s19, 0
      %p351 = por %p349, %p350
      %p352 = scmp.ne.s32.totalorder %s341, %s344
      %p353 = scmp.eq.s32.totalorder %s24, 1
      %p354 = por %p352, %p353
      %p355 = scmp.ne.s32.totalorder %s344, %s345
      %p356 = scmp.eq.s32.totalorder %s24, 0
      %p357 = por %p355, %p356
      %p358 = scmp.ne.s32.totalorder %s344, %s345
      %p359 = scmp.eq.s32.totalorder %s25, 1
      %p360 = por %p358, %p359
      %p362 = scmp.ne.s32.totalorder %s345, %s361
      %p363 = scmp.eq.s32.totalorder %s25, 0
      %p364 = por %p362, %p363
      %p365 = scmp.le.s32.totalorder 1, %s19
      %p366 = scmp.lt.s32.totalorder %s19, 3
      %p367 = pnand %p365, %p366
      %p368 = pneg %p367
      // Predicated region
      $region9: #{dhsn1_2d_forward.3} parent=5 // pred_check
        _
      $region10: #{dhsn1_2d_forward.3} parent=5 // pred_check_branch
        %370 = sbr.rel (%p367) target = $region12
      $region11: #{dhsn1_2d_forward.3} parent=5 // pred_region
        %s371 = ssub.s32 %s19, 1
      $region12: #{dhsn1_2d_forward.3} parent=5 // pred_fallthru
        _
      %p372 = scmp.lt.s32.totalorder %s19, 2
      // Predicated region
      $region13: #{dhsn1_2d_forward.3} parent=5 // pred_check
        %p373 = pneg %p372
      $region14: #{dhsn1_2d_forward.3} parent=5 // pred_check_branch
        %375 = sbr.rel (%p373) target = $region16
      $region15: #{dhsn1_2d_forward.3} parent=5 // pred_region
        // Predicated region
        $region17: #{dhsn1_2d_forward.3} parent=15 // pred_check
          %p376 = pneg %p39
        $region18: #{dhsn1_2d_forward.3} parent=15 // pred_check_branch
          %378 = sbr.rel (%p376) target = $region20
        $region19: #{dhsn1_2d_forward.3} parent=15 // pred_region
          %s379 = sand.u32 %s29, 1
          %s380 = sand.u32 %s29, 1
          %s381 = smul.addr %s380, 8
          %s382 = scalar_lea.vmem [#allocation2], %s381
          %s383 = smul.u32 2, %s19
          %s384 = scalar_lea.vmem %s0, %s383
          // Predicated region
          $region21: #{dhsn1_2d_forward.3} parent=19 // pred_check
            _
          $region22: #{dhsn1_2d_forward.3} parent=19 // pred_check_branch
            %386 = sbr.rel (0) target = $region24
          $region23: #{dhsn1_2d_forward.3} parent=19 // pred_region
            // Predicated region
            $region25: #{dhsn1_2d_forward.3} parent=23 // pred_check
              _
            $region26: #{dhsn1_2d_forward.3} parent=23 // pred_check_branch
              %388 = sbr.rel target = $region28
            $region27: #{dhsn1_2d_forward.3} parent=23 // pred_region
              // Predicated region
              $region40: #{dhsn1_2d_forward.3} parent=27 // pred_check
                _
              $region41: #{dhsn1_2d_forward.3} parent=27 // pred_check_branch
                %410 = sbr.rel (0) target = $region43
              $region42: #{dhsn1_2d_forward.3} parent=27 // pred_region
                loop: start=0, step=1, limit=1
                $region44: #{dhsn1_2d_forward.3} parent=42 // loop_pre_header
                  _
                $region45: #{dhsn1_2d_forward.3} parent=42 // loop_header
                  %s412 = sphi 0, %s416
                  %p413 = scmp.ge.s32.totalorder %s412, 1
                  %s417 = sphi %s384, %s384
                  %s418 = sphi %s382, %s382
                $region46: #{dhsn1_2d_forward.3} parent=42 // loop_header_branch
                  %415 = sbr.rel (%p413) target = $region50
                $region47: #{dhsn1_2d_forward.3} parent=42 // loop_body
                  _
                $region48: #{dhsn1_2d_forward.3} parent=42 // loop_footer
                  %s416 = sadd.s32 1, %s412
                $region49: #{dhsn1_2d_forward.3} parent=42 // loop_footer_branch
                  %411 = sbr.rel target = $region45
                $region50: #{dhsn1_2d_forward.3} parent=42 // loop_exit
                  _
                %s420 = ssub.s32 4, 1
                loop: start=0, step=1, limit=1
                $region51: #{dhsn1_2d_forward.3} parent=42 // loop_pre_header
                  _
                $region52: #{dhsn1_2d_forward.3} parent=42 // loop_header
                  %s422 = sphi 0, %s426
                  %p423 = scmp.ge.s32.totalorder %s422, 1
                  %s427 = sphi %s384, %s384
                  %s428 = sphi %s382, %s382
                $region53: #{dhsn1_2d_forward.3} parent=42 // loop_header_branch
                  %425 = sbr.rel (%p423) target = $region57
                $region54: #{dhsn1_2d_forward.3} parent=42 // loop_body
                  %v429 = vld [vmem:[%s427] sm:%s420]
                  %430 = vst [vmem:[%s428] sm:%s420] %v429
                  %v431 = vld [vmem:[%s427 + $0x4] sm:%s420]
                  %432 = vst [vmem:[%s428 + $0x2] sm:%s420] %v431
                  %v433 = vld [vmem:[%s427 + $0x8] sm:%s420]
                  %434 = vst [vmem:[%s428 + $0x4] sm:%s420] %v433
                  %v435 = vld [vmem:[%s427 + $0xc] sm:%s420]
                  %436 = vst [vmem:[%s428 + $0x6] sm:%s420] %v435
                $region55: #{dhsn1_2d_forward.3} parent=42 // loop_footer
                  %s426 = sadd.s32 1, %s422
                $region56: #{dhsn1_2d_forward.3} parent=42 // loop_footer_branch
                  %421 = sbr.rel target = $region52
                $region57: #{dhsn1_2d_forward.3} parent=42 // loop_exit
                  _
              $region43: #{dhsn1_2d_forward.3} parent=27 // pred_fallthru
                _
            $region28: #{dhsn1_2d_forward.3} parent=23 // pred_fallthru
              _
            // Predicated region
            $region29: #{dhsn1_2d_forward.3} parent=23 // pred_check
              _
            $region30: #{dhsn1_2d_forward.3} parent=23 // pred_check_branch
              %390 = sbr.rel (0) target = $region32
            $region31: #{dhsn1_2d_forward.3} parent=23 // pred_region
              %s392 = ssub.s32 4, 1
              loop: start=0, step=1, limit=1
              $region33: #{dhsn1_2d_forward.3} parent=31 // loop_pre_header
                _
              $region34: #{dhsn1_2d_forward.3} parent=31 // loop_header
                %s394 = sphi 0, %s398
                %p395 = scmp.ge.s32.totalorder %s394, 1
                %s399 = sphi %s384, %s384
                %s400 = sphi %s382, %s382
              $region35: #{dhsn1_2d_forward.3} parent=31 // loop_header_branch
                %397 = sbr.rel (%p395) target = $region39
              $region36: #{dhsn1_2d_forward.3} parent=31 // loop_body
                %v401 = vld [vmem:[%s399] sm:%s392]
                %402 = vst [vmem:[%s400] sm:%s392] %v401
                %v403 = vld [vmem:[%s399 + $0x4] sm:%s392]
                %404 = vst [vmem:[%s400 + $0x2] sm:%s392] %v403
                %v405 = vld [vmem:[%s399 + $0x8] sm:%s392]
                %406 = vst [vmem:[%s400 + $0x4] sm:%s392] %v405
                %v407 = vld [vmem:[%s399 + $0xc] sm:%s392]
                %408 = vst [vmem:[%s400 + $0x6] sm:%s392] %v407
              $region37: #{dhsn1_2d_forward.3} parent=31 // loop_footer
                %s398 = sadd.s32 1, %s394
              $region38: #{dhsn1_2d_forward.3} parent=31 // loop_footer_branch
                %393 = sbr.rel target = $region34
              $region39: #{dhsn1_2d_forward.3} parent=31 // loop_exit
                _
            $region32: #{dhsn1_2d_forward.3} parent=23 // pred_fallthru
              _
          $region24: #{dhsn1_2d_forward.3} parent=19 // pred_fallthru
            _
          %437 = vnop
        $region20: #{dhsn1_2d_forward.3} parent=15 // pred_fallthru
          _
        // Predicated region
        $region58: #{dhsn1_2d_forward.3} parent=15 // pred_check
          %p438 = pneg %p65
        $region59: #{dhsn1_2d_forward.3} parent=15 // pred_check_branch
          %440 = sbr.rel (%p438) target = $region61
        $region60: #{dhsn1_2d_forward.3} parent=15 // pred_region
          %s441 = sand.u32 %s55, 1
          %s442 = sand.u32 %s55, 1
          %s443 = smul.addr %s442, 8
          %s444 = scalar_lea.vmem [#allocation3], %s443
          %s445 = smul.u32 2, %s19
          %s446 = scalar_lea.vmem %s1, %s445
          // Predicated region
          $region62: #{dhsn1_2d_forward.3} parent=60 // pred_check
            _
          $region63: #{dhsn1_2d_forward.3} parent=60 // pred_check_branch
            %448 = sbr.rel (0) target = $region65
          $region64: #{dhsn1_2d_forward.3} parent=60 // pred_region
            // Predicated region
            $region66: #{dhsn1_2d_forward.3} parent=64 // pred_check
              _
            $region67: #{dhsn1_2d_forward.3} parent=64 // pred_check_branch
              %450 = sbr.rel target = $region69
            $region68: #{dhsn1_2d_forward.3} parent=64 // pred_region
              // Predicated region
              $region81: #{dhsn1_2d_forward.3} parent=68 // pred_check
                _
              $region82: #{dhsn1_2d_forward.3} parent=68 // pred_check_branch
                %472 = sbr.rel (0) target = $region84
              $region83: #{dhsn1_2d_forward.3} parent=68 // pred_region
                loop: start=0, step=1, limit=1
                $region85: #{dhsn1_2d_forward.3} parent=83 // loop_pre_header
                  _
                $region86: #{dhsn1_2d_forward.3} parent=83 // loop_header
                  %s474 = sphi 0, %s478
                  %p475 = scmp.ge.s32.totalorder %s474, 1
                  %s479 = sphi %s446, %s446
                  %s480 = sphi %s444, %s444
                $region87: #{dhsn1_2d_forward.3} parent=83 // loop_header_branch
                  %477 = sbr.rel (%p475) target = $region91
                $region88: #{dhsn1_2d_forward.3} parent=83 // loop_body
                  _
                $region89: #{dhsn1_2d_forward.3} parent=83 // loop_footer
                  %s478 = sadd.s32 1, %s474
                $region90: #{dhsn1_2d_forward.3} parent=83 // loop_footer_branch
                  %473 = sbr.rel target = $region86
                $region91: #{dhsn1_2d_forward.3} parent=83 // loop_exit
                  _
                %s482 = ssub.s32 4, 1
                loop: start=0, step=1, limit=1
                $region92: #{dhsn1_2d_forward.3} parent=83 // loop_pre_header
                  _
                $region93: #{dhsn1_2d_forward.3} parent=83 // loop_header
                  %s484 = sphi 0, %s488
                  %p485 = scmp.ge.s32.totalorder %s484, 1
                  %s489 = sphi %s446, %s446
                  %s490 = sphi %s444, %s444
                $region94: #{dhsn1_2d_forward.3} parent=83 // loop_header_branch
                  %487 = sbr.rel (%p485) target = $region98
                $region95: #{dhsn1_2d_forward.3} parent=83 // loop_body
                  %v491 = vld [vmem:[%s489] sm:%s482]
                  %492 = vst [vmem:[%s490] sm:%s482] %v491
                  %v493 = vld [vmem:[%s489 + $0x4] sm:%s482]
                  %494 = vst [vmem:[%s490 + $0x2] sm:%s482] %v493
                  %v495 = vld [vmem:[%s489 + $0x8] sm:%s482]
                  %496 = vst [vmem:[%s490 + $0x4] sm:%s482] %v495
                  %v497 = vld [vmem:[%s489 + $0xc] sm:%s482]
                  %498 = vst [vmem:[%s490 + $0x6] sm:%s482] %v497
                $region96: #{dhsn1_2d_forward.3} parent=83 // loop_footer
                  %s488 = sadd.s32 1, %s484
                $region97: #{dhsn1_2d_forward.3} parent=83 // loop_footer_branch
                  %483 = sbr.rel target = $region93
                $region98: #{dhsn1_2d_forward.3} parent=83 // loop_exit
                  _
              $region84: #{dhsn1_2d_forward.3} parent=68 // pred_fallthru
                _
            $region69: #{dhsn1_2d_forward.3} parent=64 // pred_fallthru
              _
            // Predicated region
            $region70: #{dhsn1_2d_forward.3} parent=64 // pred_check
              _
            $region71: #{dhsn1_2d_forward.3} parent=64 // pred_check_branch
              %452 = sbr.rel (0) target = $region73
            $region72: #{dhsn1_2d_forward.3} parent=64 // pred_region
              %s454 = ssub.s32 4, 1
              loop: start=0, step=1, limit=1
              $region74: #{dhsn1_2d_forward.3} parent=72 // loop_pre_header
                _
              $region75: #{dhsn1_2d_forward.3} parent=72 // loop_header
                %s456 = sphi 0, %s460
                %p457 = scmp.ge.s32.totalorder %s456, 1
                %s461 = sphi %s446, %s446
                %s462 = sphi %s444, %s444
              $region76: #{dhsn1_2d_forward.3} parent=72 // loop_header_branch
                %459 = sbr.rel (%p457) target = $region80
              $region77: #{dhsn1_2d_forward.3} parent=72 // loop_body
                %v463 = vld [vmem:[%s461] sm:%s454]
                %464 = vst [vmem:[%s462] sm:%s454] %v463
                %v465 = vld [vmem:[%s461 + $0x4] sm:%s454]
                %466 = vst [vmem:[%s462 + $0x2] sm:%s454] %v465
                %v467 = vld [vmem:[%s461 + $0x8] sm:%s454]
                %468 = vst [vmem:[%s462 + $0x4] sm:%s454] %v467
                %v469 = vld [vmem:[%s461 + $0xc] sm:%s454]
                %470 = vst [vmem:[%s462 + $0x6] sm:%s454] %v469
              $region78: #{dhsn1_2d_forward.3} parent=72 // loop_footer
                %s460 = sadd.s32 1, %s456
              $region79: #{dhsn1_2d_forward.3} parent=72 // loop_footer_branch
                %455 = sbr.rel target = $region75
              $region80: #{dhsn1_2d_forward.3} parent=72 // loop_exit
                _
            $region73: #{dhsn1_2d_forward.3} parent=64 // pred_fallthru
              _
          $region65: #{dhsn1_2d_forward.3} parent=60 // pred_fallthru
            _
          %499 = vnop
        $region61: #{dhsn1_2d_forward.3} parent=15 // pred_fallthru
          _
        // Predicated region
        $region99: #{dhsn1_2d_forward.3} parent=15 // pred_check
          %p500 = pneg %p91
        $region100: #{dhsn1_2d_forward.3} parent=15 // pred_check_branch
          %502 = sbr.rel (%p500) target = $region102
        $region101: #{dhsn1_2d_forward.3} parent=15 // pred_region
          %s503 = sand.u32 %s81, 1
          %s504 = sand.u32 %s81, 1
          %s505 = smul.addr %s504, 8
          %s506 = scalar_lea.vmem [#allocation4], %s505
          %s507 = smul.u32 2, %s19
          %s508 = scalar_lea.vmem %s2, %s507
          // Predicated region
          $region103: #{dhsn1_2d_forward.3} parent=101 // pred_check
            _
          $region104: #{dhsn1_2d_forward.3} parent=101 // pred_check_branch
            %510 = sbr.rel (0) target = $region106
          $region105: #{dhsn1_2d_forward.3} parent=101 // pred_region
            // Predicated region
            $region107: #{dhsn1_2d_forward.3} parent=105 // pred_check
              _
            $region108: #{dhsn1_2d_forward.3} parent=105 // pred_check_branch
              %512 = sbr.rel target = $region110
            $region109: #{dhsn1_2d_forward.3} parent=105 // pred_region
              // Predicated region
              $region122: #{dhsn1_2d_forward.3} parent=109 // pred_check
                _
              $region123: #{dhsn1_2d_forward.3} parent=109 // pred_check_branch
                %534 = sbr.rel (0) target = $region125
              $region124: #{dhsn1_2d_forward.3} parent=109 // pred_region
                loop: start=0, step=1, limit=1
                $region126: #{dhsn1_2d_forward.3} parent=124 // loop_pre_header
                  _
                $region127: #{dhsn1_2d_forward.3} parent=124 // loop_header
                  %s536 = sphi 0, %s540
                  %p537 = scmp.ge.s32.totalorder %s536, 1
                  %s541 = sphi %s508, %s508
                  %s542 = sphi %s506, %s506
                $region128: #{dhsn1_2d_forward.3} parent=124 // loop_header_branch
                  %539 = sbr.rel (%p537) target = $region132
                $region129: #{dhsn1_2d_forward.3} parent=124 // loop_body
                  _
                $region130: #{dhsn1_2d_forward.3} parent=124 // loop_footer
                  %s540 = sadd.s32 1, %s536
                $region131: #{dhsn1_2d_forward.3} parent=124 // loop_footer_branch
                  %535 = sbr.rel target = $region127
                $region132: #{dhsn1_2d_forward.3} parent=124 // loop_exit
                  _
                %s544 = ssub.s32 4, 1
                loop: start=0, step=1, limit=1
                $region133: #{dhsn1_2d_forward.3} parent=124 // loop_pre_header
                  _
                $region134: #{dhsn1_2d_forward.3} parent=124 // loop_header
                  %s546 = sphi 0, %s550
                  %p547 = scmp.ge.s32.totalorder %s546, 1
                  %s551 = sphi %s508, %s508
                  %s552 = sphi %s506, %s506
                $region135: #{dhsn1_2d_forward.3} parent=124 // loop_header_branch
                  %549 = sbr.rel (%p547) target = $region139
                $region136: #{dhsn1_2d_forward.3} parent=124 // loop_body
                  %v553 = vld [vmem:[%s551] sm:%s544]
                  %554 = vst [vmem:[%s552] sm:%s544] %v553
                  %v555 = vld [vmem:[%s551 + $0x4] sm:%s544]
                  %556 = vst [vmem:[%s552 + $0x2] sm:%s544] %v555
                  %v557 = vld [vmem:[%s551 + $0x8] sm:%s544]
                  %558 = vst [vmem:[%s552 + $0x4] sm:%s544] %v557
                  %v559 = vld [vmem:[%s551 + $0xc] sm:%s544]
                  %560 = vst [vmem:[%s552 + $0x6] sm:%s544] %v559
                $region137: #{dhsn1_2d_forward.3} parent=124 // loop_footer
                  %s550 = sadd.s32 1, %s546
                $region138: #{dhsn1_2d_forward.3} parent=124 // loop_footer_branch
                  %545 = sbr.rel target = $region134
                $region139: #{dhsn1_2d_forward.3} parent=124 // loop_exit
                  _
              $region125: #{dhsn1_2d_forward.3} parent=109 // pred_fallthru
                _
            $region110: #{dhsn1_2d_forward.3} parent=105 // pred_fallthru
              _
            // Predicated region
            $region111: #{dhsn1_2d_forward.3} parent=105 // pred_check
              _
            $region112: #{dhsn1_2d_forward.3} parent=105 // pred_check_branch
              %514 = sbr.rel (0) target = $region114
            $region113: #{dhsn1_2d_forward.3} parent=105 // pred_region
              %s516 = ssub.s32 4, 1
              loop: start=0, step=1, limit=1
              $region115: #{dhsn1_2d_forward.3} parent=113 // loop_pre_header
                _
              $region116: #{dhsn1_2d_forward.3} parent=113 // loop_header
                %s518 = sphi 0, %s522
                %p519 = scmp.ge.s32.totalorder %s518, 1
                %s523 = sphi %s508, %s508
                %s524 = sphi %s506, %s506
              $region117: #{dhsn1_2d_forward.3} parent=113 // loop_header_branch
                %521 = sbr.rel (%p519) target = $region121
              $region118: #{dhsn1_2d_forward.3} parent=113 // loop_body
                %v525 = vld [vmem:[%s523] sm:%s516]
                %526 = vst [vmem:[%s524] sm:%s516] %v525
                %v527 = vld [vmem:[%s523 + $0x4] sm:%s516]
                %528 = vst [vmem:[%s524 + $0x2] sm:%s516] %v527
                %v529 = vld [vmem:[%s523 + $0x8] sm:%s516]
                %530 = vst [vmem:[%s524 + $0x4] sm:%s516] %v529
                %v531 = vld [vmem:[%s523 + $0xc] sm:%s516]
                %532 = vst [vmem:[%s524 + $0x6] sm:%s516] %v531
              $region119: #{dhsn1_2d_forward.3} parent=113 // loop_footer
                %s522 = sadd.s32 1, %s518
              $region120: #{dhsn1_2d_forward.3} parent=113 // loop_footer_branch
                %517 = sbr.rel target = $region116
              $region121: #{dhsn1_2d_forward.3} parent=113 // loop_exit
                _
            $region114: #{dhsn1_2d_forward.3} parent=105 // pred_fallthru
              _
          $region106: #{dhsn1_2d_forward.3} parent=101 // pred_fallthru
            _
          %561 = vnop
        $region102: #{dhsn1_2d_forward.3} parent=15 // pred_fallthru
          _
        // Predicated region
        $region140: #{dhsn1_2d_forward.3} parent=15 // pred_check
          %p562 = pneg %p117
        $region141: #{dhsn1_2d_forward.3} parent=15 // pred_check_branch
          %564 = sbr.rel (%p562) target = $region143
        $region142: #{dhsn1_2d_forward.3} parent=15 // pred_region
          %s565 = sand.u32 %s107, 1
          %s566 = sand.u32 %s107, 1
          %s567 = smul.addr %s566, 8
          %s568 = scalar_lea.vmem [#allocation5], %s567
          %s569 = smul.u32 2, %s19
          %s570 = scalar_lea.vmem %s3, %s569
          // Predicated region
          $region144: #{dhsn1_2d_forward.3} parent=142 // pred_check
            _
          $region145: #{dhsn1_2d_forward.3} parent=142 // pred_check_branch
            %572 = sbr.rel (0) target = $region147
          $region146: #{dhsn1_2d_forward.3} parent=142 // pred_region
            // Predicated region
            $region148: #{dhsn1_2d_forward.3} parent=146 // pred_check
              _
            $region149: #{dhsn1_2d_forward.3} parent=146 // pred_check_branch
              %574 = sbr.rel target = $region151
            $region150: #{dhsn1_2d_forward.3} parent=146 // pred_region
              // Predicated region
              $region163: #{dhsn1_2d_forward.3} parent=150 // pred_check
                _
              $region164: #{dhsn1_2d_forward.3} parent=150 // pred_check_branch
                %596 = sbr.rel (0) target = $region166
              $region165: #{dhsn1_2d_forward.3} parent=150 // pred_region
                loop: start=0, step=1, limit=1
                $region167: #{dhsn1_2d_forward.3} parent=165 // loop_pre_header
                  _
                $region168: #{dhsn1_2d_forward.3} parent=165 // loop_header
                  %s598 = sphi 0, %s602
                  %p599 = scmp.ge.s32.totalorder %s598, 1
                  %s603 = sphi %s570, %s570
                  %s604 = sphi %s568, %s568
                $region169: #{dhsn1_2d_forward.3} parent=165 // loop_header_branch
                  %601 = sbr.rel (%p599) target = $region173
                $region170: #{dhsn1_2d_forward.3} parent=165 // loop_body
                  _
                $region171: #{dhsn1_2d_forward.3} parent=165 // loop_footer
                  %s602 = sadd.s32 1, %s598
                $region172: #{dhsn1_2d_forward.3} parent=165 // loop_footer_branch
                  %597 = sbr.rel target = $region168
                $region173: #{dhsn1_2d_forward.3} parent=165 // loop_exit
                  _
                %s606 = ssub.s32 4, 1
                loop: start=0, step=1, limit=1
                $region174: #{dhsn1_2d_forward.3} parent=165 // loop_pre_header
                  _
                $region175: #{dhsn1_2d_forward.3} parent=165 // loop_header
                  %s608 = sphi 0, %s612
                  %p609 = scmp.ge.s32.totalorder %s608, 1
                  %s613 = sphi %s570, %s570
                  %s614 = sphi %s568, %s568
                $region176: #{dhsn1_2d_forward.3} parent=165 // loop_header_branch
                  %611 = sbr.rel (%p609) target = $region180
                $region177: #{dhsn1_2d_forward.3} parent=165 // loop_body
                  %v615 = vld [vmem:[%s613] sm:%s606]
                  %616 = vst [vmem:[%s614] sm:%s606] %v615
                  %v617 = vld [vmem:[%s613 + $0x4] sm:%s606]
                  %618 = vst [vmem:[%s614 + $0x2] sm:%s606] %v617
                  %v619 = vld [vmem:[%s613 + $0x8] sm:%s606]
                  %620 = vst [vmem:[%s614 + $0x4] sm:%s606] %v619
                  %v621 = vld [vmem:[%s613 + $0xc] sm:%s606]
                  %622 = vst [vmem:[%s614 + $0x6] sm:%s606] %v621
                $region178: #{dhsn1_2d_forward.3} parent=165 // loop_footer
                  %s612 = sadd.s32 1, %s608
                $region179: #{dhsn1_2d_forward.3} parent=165 // loop_footer_branch
                  %607 = sbr.rel target = $region175
                $region180: #{dhsn1_2d_forward.3} parent=165 // loop_exit
                  _
              $region166: #{dhsn1_2d_forward.3} parent=150 // pred_fallthru
                _
            $region151: #{dhsn1_2d_forward.3} parent=146 // pred_fallthru
              _
            // Predicated region
            $region152: #{dhsn1_2d_forward.3} parent=146 // pred_check
              _
            $region153: #{dhsn1_2d_forward.3} parent=146 // pred_check_branch
              %576 = sbr.rel (0) target = $region155
            $region154: #{dhsn1_2d_forward.3} parent=146 // pred_region
              %s578 = ssub.s32 4, 1
              loop: start=0, step=1, limit=1
              $region156: #{dhsn1_2d_forward.3} parent=154 // loop_pre_header
                _
              $region157: #{dhsn1_2d_forward.3} parent=154 // loop_header
                %s580 = sphi 0, %s584
                %p581 = scmp.ge.s32.totalorder %s580, 1
                %s585 = sphi %s570, %s570
                %s586 = sphi %s568, %s568
              $region158: #{dhsn1_2d_forward.3} parent=154 // loop_header_branch
                %583 = sbr.rel (%p581) target = $region162
              $region159: #{dhsn1_2d_forward.3} parent=154 // loop_body
                %v587 = vld [vmem:[%s585] sm:%s578]
                %588 = vst [vmem:[%s586] sm:%s578] %v587
                %v589 = vld [vmem:[%s585 + $0x4] sm:%s578]
                %590 = vst [vmem:[%s586 + $0x2] sm:%s578] %v589
                %v591 = vld [vmem:[%s585 + $0x8] sm:%s578]
                %592 = vst [vmem:[%s586 + $0x4] sm:%s578] %v591
                %v593 = vld [vmem:[%s585 + $0xc] sm:%s578]
                %594 = vst [vmem:[%s586 + $0x6] sm:%s578] %v593
              $region160: #{dhsn1_2d_forward.3} parent=154 // loop_footer
                %s584 = sadd.s32 1, %s580
              $region161: #{dhsn1_2d_forward.3} parent=154 // loop_footer_branch
                %579 = sbr.rel target = $region157
              $region162: #{dhsn1_2d_forward.3} parent=154 // loop_exit
                _
            $region155: #{dhsn1_2d_forward.3} parent=146 // pred_fallthru
              _
          $region147: #{dhsn1_2d_forward.3} parent=142 // pred_fallthru
            _
          %623 = vnop
        $region143: #{dhsn1_2d_forward.3} parent=15 // pred_fallthru
          _
      $region16: #{dhsn1_2d_forward.3} parent=5 // pred_fallthru
        _
      %p624 = scmp.le.s32.totalorder 1, %s19
      %p625 = scmp.lt.s32.totalorder %s19, 3
      %p626 = pnand %p624, %p625
      %p627 = pneg %p626
      // Predicated region
      $region181: #{dhsn1_2d_forward.3} parent=5 // pred_check
        _
      $region182: #{dhsn1_2d_forward.3} parent=5 // pred_check_branch
        %629 = sbr.rel (%p626) target = $region184
      $region183: #{dhsn1_2d_forward.3} parent=5 // pred_region
        %s630 = ssub.s32 %s19, 1
        %s631 = sand.u32 %s32, 1
        %s632 = sand.u32 %s32, 1
        %s633 = smul.addr %s632, 8
        %s634 = scalar_lea.vmem [#allocation2], %s633
        // Predicated region
        $region185: #{dhsn1_2d_forward.3} parent=183 // pred_check
          %p635 = pneg %p45
        $region186: #{dhsn1_2d_forward.3} parent=183 // pred_check_branch
          %637 = sbr.rel (%p635) target = $region188
        $region187: #{dhsn1_2d_forward.3} parent=183 // pred_region
          _
        $region188: #{dhsn1_2d_forward.3} parent=183 // pred_fallthru
          _
        %s638 = sand.u32 %s58, 1
        %s639 = sand.u32 %s58, 1
        %s640 = smul.addr %s639, 8
        %s641 = scalar_lea.vmem [#allocation3], %s640
        // Predicated region
        $region189: #{dhsn1_2d_forward.3} parent=183 // pred_check
          %p642 = pneg %p71
        $region190: #{dhsn1_2d_forward.3} parent=183 // pred_check_branch
          %644 = sbr.rel (%p642) target = $region192
        $region191: #{dhsn1_2d_forward.3} parent=183 // pred_region
          _
        $region192: #{dhsn1_2d_forward.3} parent=183 // pred_fallthru
          _
        %s645 = sand.u32 %s84, 1
        %s646 = sand.u32 %s84, 1
        %s647 = smul.addr %s646, 8
        %s648 = scalar_lea.vmem [#allocation4], %s647
        // Predicated region
        $region193: #{dhsn1_2d_forward.3} parent=183 // pred_check
          %p649 = pneg %p97
        $region194: #{dhsn1_2d_forward.3} parent=183 // pred_check_branch
          %651 = sbr.rel (%p649) target = $region196
        $region195: #{dhsn1_2d_forward.3} parent=183 // pred_region
          _
        $region196: #{dhsn1_2d_forward.3} parent=183 // pred_fallthru
          _
        %s652 = sand.u32 %s110, 1
        %s653 = sand.u32 %s110, 1
        %s654 = smul.addr %s653, 8
        %s655 = scalar_lea.vmem [#allocation5], %s654
        // Predicated region
        $region197: #{dhsn1_2d_forward.3} parent=183 // pred_check
          %p656 = pneg %p123
        $region198: #{dhsn1_2d_forward.3} parent=183 // pred_check_branch
          %658 = sbr.rel (%p656) target = $region200
        $region199: #{dhsn1_2d_forward.3} parent=183 // pred_region
          _
        $region200: #{dhsn1_2d_forward.3} parent=183 // pred_fallthru
          _
        %s659 = sand.u32 %s32, 1
        %s660 = sand.u32 %s32, 1
        %s661 = smul.addr %s660, 8
        %s662 = scalar_lea.vmem [#allocation2], %s661
        %p663 = pneg %p45
        %p664 = pneg %p42
        %s665 = sand.u32 %s58, 1
        %s666 = sand.u32 %s58, 1
        %s667 = smul.addr %s666, 8
        %s668 = scalar_lea.vmem [#allocation3], %s667
        %p669 = pneg %p71
        %p670 = pneg %p68
        %s671 = sand.u32 %s84, 1
        %s672 = sand.u32 %s84, 1
        %s673 = smul.addr %s672, 8
        %s674 = scalar_lea.vmem [#allocation4], %s673
        %p675 = pneg %p97
        %p676 = pneg %p94
        %s677 = sand.u32 %s110, 1
        %s678 = sand.u32 %s110, 1
        %s679 = smul.addr %s678, 8
        %s680 = scalar_lea.vmem [#allocation5], %s679
        %p681 = pneg %p123
        %p682 = pneg %p120
        %p683 = pneg %p149
        %p684 = pneg %p146
        %s685 = smul.u32 2, %s24
        %p686 = scmp.lt.s32.totalorder %s685, 3
        %s687 = scalar_select %p686, %s685, 3
        %s688 = scalar_lea.vmem %s4, %s687
        %p689 = pneg %p175
        %p690 = pneg %p172
        %s691 = smul.u32 2, %s24
        %p692 = scmp.lt.s32.totalorder %s691, 3
        %s693 = scalar_select %p692, %s691, 3
        %s694 = scalar_lea.vmem %s5, %s693
        %p695 = pneg %p201
        %p696 = pneg %p198
        %s697 = smul.u32 2, %s24
        %p698 = scmp.lt.s32.totalorder %s697, 3
        %s699 = scalar_select %p698, %s697, 3
        %s700 = scalar_lea.vmem %s6, %s699
        %p701 = pneg %p227
        %p702 = pneg %p224
        %s703 = smul.u32 2, %s24
        %p704 = scmp.lt.s32.totalorder %s703, 3
        %s705 = scalar_select %p704, %s703, 3
        %s706 = scalar_lea.vmem %s7, %s705
        %p707 = pneg %p253
        %p708 = pneg %p250
        %s709 = smul.u32 2, %s24
        %p710 = scmp.lt.s32.totalorder %s709, 3
        %s711 = scalar_select %p710, %s709, 3
        %s712 = scalar_lea.vmem %s8, %s711
        %p713 = pneg %p279
        %p714 = pneg %p276
        %s715 = smul.u32 2, %s24
        %p716 = scmp.lt.s32.totalorder %s715, 3
        %s717 = scalar_select %p716, %s715, 3
        %s718 = scalar_lea.vmem %s9, %s717
        %p719 = pneg %p305
        %p720 = pneg %p302
        %s721 = smul.u32 2, %s24
        %p722 = scmp.lt.s32.totalorder %s721, 3
        %s723 = scalar_select %p722, %s721, 3
        %s724 = scalar_lea.vmem %s10, %s723
        %p725 = pneg %p331
        %p726 = pneg %p328
        %s727 = smul.u32 2, %s24
        %p728 = scmp.lt.s32.totalorder %s727, 3
        %s729 = scalar_select %p728, %s727, 3
        %s730 = scalar_lea.vmem %s11, %s729
        %p731 = pneg %p357
        %p732 = pneg %p354
        %s733 = smul.u32 2, %s24
        %p734 = scmp.lt.s32.totalorder %s733, 3
        %s735 = scalar_select %p734, %s733, 3
        %s736 = scalar_lea.vmem %s12, %s735
        %s737 = smul.u32 2, %s24
        %s738 = smul.u32 2, %s24
        %s739 = smul.u32 2, %s24
        %s740 = smul.u32 2, %s24
        %s741 = smul.u32 2, %s24
        %p742 = scmp.lt.s32.totalorder %s741, 3
        %s743 = scalar_select %p742, %s741, 3
        %s744 = scalar_lea.vmem %s4, %s743
        %s745 = smul.u32 2, %s24
        %s746 = smul.u32 2, %s24
        %p747 = scmp.lt.s32.totalorder %s746, 3
        %s748 = scalar_select %p747, %s746, 3
        %s749 = scalar_lea.vmem %s5, %s748
        %s750 = smul.u32 2, %s24
        %s751 = smul.u32 2, %s24
        %p752 = scmp.lt.s32.totalorder %s751, 3
        %s753 = scalar_select %p752, %s751, 3
        %s754 = scalar_lea.vmem %s6, %s753
        %s755 = smul.u32 2, %s24
        %s756 = smul.u32 2, %s24
        %p757 = scmp.lt.s32.totalorder %s756, 3
        %s758 = scalar_select %p757, %s756, 3
        %s759 = scalar_lea.vmem %s7, %s758
        %s760 = smul.u32 2, %s24
        %s761 = smul.u32 2, %s24
        %p762 = scmp.lt.s32.totalorder %s761, 3
        %s763 = scalar_select %p762, %s761, 3
        %s764 = scalar_lea.vmem %s8, %s763
        %s765 = smul.u32 2, %s24
        %s766 = smul.u32 2, %s24
        %p767 = scmp.lt.s32.totalorder %s766, 3
        %s768 = scalar_select %p767, %s766, 3
        %s769 = scalar_lea.vmem %s9, %s768
        %s770 = smul.u32 2, %s24
        %s771 = smul.u32 2, %s24
        %p772 = scmp.lt.s32.totalorder %s771, 3
        %s773 = scalar_select %p772, %s771, 3
        %s774 = scalar_lea.vmem %s10, %s773
        %s775 = smul.u32 2, %s24
        %s776 = smul.u32 2, %s24
        %p777 = scmp.lt.s32.totalorder %s776, 3
        %s778 = scalar_select %p777, %s776, 3
        %s779 = scalar_lea.vmem %s11, %s778
        %s780 = smul.u32 2, %s24
        %s781 = smul.u32 2, %s24
        %p782 = scmp.lt.s32.totalorder %s781, 3
        %s783 = scalar_select %p782, %s781, 3
        %s784 = scalar_lea.vmem %s12, %s783
        %s785 = smul.u32 2, %s24
        %v786 = vld [vmem:[%s634] sm:$0x3]
        %v787 = vld [vmem:[%s634 + $0x2] sm:$0x3]
        %v788 = vld [vmem:[%s634 + $0x4] sm:$0x3]
        %v789 = vld [vmem:[%s634 + $0x6] sm:$0x3]
        %v790 = vld [vmem:[%s641] sm:$0x3]
        %v791 = vld [vmem:[%s641 + $0x2] sm:$0x3]
        %v792 = vld [vmem:[%s641 + $0x4] sm:$0x3]
        %v793 = vld [vmem:[%s641 + $0x6] sm:$0x3]
        %v794 = vld [vmem:[%s648] sm:$0x3]
        %v795 = vld [vmem:[%s648 + $0x2] sm:$0x3]
        %v796 = vld [vmem:[%s648 + $0x4] sm:$0x3]
        %v797 = vld [vmem:[%s648 + $0x6] sm:$0x3]
        %v798 = vld [vmem:[%s655] sm:$0x3]
        %v799 = vld [vmem:[%s655 + $0x2] sm:$0x3]
        %v800 = vld [vmem:[%s655 + $0x4] sm:$0x3]
        %v801 = vld [vmem:[%s655 + $0x6] sm:$0x3]
        %v802 = vadd.f32 %v786, %v798
        %v803 = vadd.f32 %v787, %v799
        %v804 = vadd.f32 %v788, %v800
        %v805 = vadd.f32 %v789, %v801
        %v806 = vadd.f32 %v790, %v794
        %v807 = vadd.f32 %v791, %v795
        %v808 = vadd.f32 %v792, %v796
        %v809 = vadd.f32 %v793, %v797
        %v810 = vsub.f32 %v786, %v798
        %v811 = vsub.f32 %v787, %v799
        %v812 = vsub.f32 %v788, %v800
        %v813 = vsub.f32 %v789, %v801
        %v814 = vsub.f32 %v790, %v794
        %v815 = vsub.f32 %v791, %v795
        %v816 = vsub.f32 %v792, %v796
        %v817 = vsub.f32 %v793, %v797
        %v818 = vsub.f32 %v802, %v806
        %v819 = vsub.f32 %v803, %v807
        %v820 = vsub.f32 %v804, %v808
        %v821 = vsub.f32 %v805, %v809
        %v822 = vmul.f32 %v818, 0.5
        %v823 = vmul.f32 %v819, 0.5
        %v824 = vmul.f32 %v820, 0.5
        %v825 = vmul.f32 %v821, 0.5
        %v826 = vadd.f32 %v810, %v814
        %v827 = vadd.f32 %v811, %v815
        %v828 = vadd.f32 %v812, %v816
        %v829 = vadd.f32 %v813, %v817
        %v830 = vmul.f32 %v826, 0.5
        %v831 = vmul.f32 %v827, 0.5
        %v832 = vmul.f32 %v828, 0.5
        %v833 = vmul.f32 %v829, 0.5
        %v834 = vsub.f32 %v810, %v814
        %v835 = vsub.f32 %v811, %v815
        %v836 = vsub.f32 %v812, %v816
        %v837 = vsub.f32 %v813, %v817
        %v838 = vmul.f32 %v834, 0.5
        %v839 = vmul.f32 %v835, 0.5
        %v840 = vmul.f32 %v836, 0.5
        %v841 = vmul.f32 %v837, 0.5
        %v842 = vadd.f32 %v802, %v806
        %v843 = vadd.f32 %v803, %v807
        %v844 = vadd.f32 %v804, %v808
        %v845 = vadd.f32 %v805, %v809
        %v846 = vmul.f32 %v842, 0.5
        %v847 = vmul.f32 %v843, 0.5
        %v848 = vmul.f32 %v844, 0.5
        %v849 = vmul.f32 %v845, 0.5
        %v850 = vmul.f32 %v822, 0.25
        %v851 = vlaneseq
        %vm852 = vcmp.ge.s32.totalorder %v851, 0
        %vm853 = vcmp.lt.s32.totalorder %v851, 256
        %vm854 = vmand %vm852, %vm853
        %855 = vst.msk [vmem:[%s744] sm:$0x3] %vm854, %v850
        %v856 = vadd.f32 %v838, %v823
        %v857 = vmul.f32 %v856, 0.25
        %858 = vst.msk [vmem:[%s749] sm:$0x3] %vm854, %v857
        %v859 = vadd.f32 %v830, %v824
        %v860 = vmul.f32 %v859, 0.25
        %861 = vst.msk [vmem:[%s754] sm:$0x3] %vm854, %v860
        %v862 = vadd.f32 %v846, %v831
        %v863 = vadd.f32 %v862, %v840
        %v864 = vadd.f32 %v863, %v825
        %v865 = vmul.f32 %v864, 0.25
        %866 = vst.msk [vmem:[%s759] sm:$0x3] %vm854, %v865
        %v867 = vmul.f32 %v839, 0.25
        %868 = vst.msk [vmem:[%s764] sm:$0x3] %vm854, %v867
        %v869 = vmul.f32 %v832, 0.25
        %870 = vst.msk [vmem:[%s769] sm:$0x3] %vm854, %v869
        %v871 = vmul.f32 %v849, 0.25
        %872 = vst.msk [vmem:[%s774] sm:$0x3] %vm854, %v871
        %v873 = vadd.f32 %v848, %v833
        %v874 = vmul.f32 %v873, 0.25
        %875 = vst.msk [vmem:[%s779] sm:$0x3] %vm854, %v874
        %v876 = vadd.f32 %v847, %v841
        %v877 = vmul.f32 %v876, 0.25
        %878 = vst.msk [vmem:[%s784] sm:$0x3] %vm854, %v877
        %s879 = smul.u32 2, %s24
        %p880 = scmp.lt.s32.totalorder %s879, 3
        %s881 = scalar_select %p880, %s879, 3
        %s882 = scalar_lea.vmem %s4, %s881
        %s883 = smul.u32 2, %s24
        %p884 = scmp.lt.s32.totalorder %s883, 3
        %s885 = scalar_select %p884, %s883, 3
        %s886 = scalar_lea.vmem %s5, %s885
        %s887 = smul.u32 2, %s24
        %p888 = scmp.lt.s32.totalorder %s887, 3
        %s889 = scalar_select %p888, %s887, 3
        %s890 = scalar_lea.vmem %s6, %s889
        %s891 = smul.u32 2, %s24
        %p892 = scmp.lt.s32.totalorder %s891, 3
        %s893 = scalar_select %p892, %s891, 3
        %s894 = scalar_lea.vmem %s7, %s893
        %s895 = smul.u32 2, %s24
        %p896 = scmp.lt.s32.totalorder %s895, 3
        %s897 = scalar_select %p896, %s895, 3
        %s898 = scalar_lea.vmem %s8, %s897
        %s899 = smul.u32 2, %s24
        %p900 = scmp.lt.s32.totalorder %s899, 3
        %s901 = scalar_select %p900, %s899, 3
        %s902 = scalar_lea.vmem %s9, %s901
        %s903 = smul.u32 2, %s24
        %p904 = scmp.lt.s32.totalorder %s903, 3
        %s905 = scalar_select %p904, %s903, 3
        %s906 = scalar_lea.vmem %s10, %s905
        %s907 = smul.u32 2, %s24
        %p908 = scmp.lt.s32.totalorder %s907, 3
        %s909 = scalar_select %p908, %s907, 3
        %s910 = scalar_lea.vmem %s11, %s909
        %s911 = smul.u32 2, %s24
        %p912 = scmp.lt.s32.totalorder %s911, 3
        %s913 = scalar_select %p912, %s911, 3
        %s914 = scalar_lea.vmem %s12, %s913
        // Predicated region
        $region201: #{dhsn1_2d_forward.3} parent=183 // pred_check
          %p915 = pneg %p146
        $region202: #{dhsn1_2d_forward.3} parent=183 // pred_check_branch
          %917 = sbr.rel (%p915) target = $region204
        $region203: #{dhsn1_2d_forward.3} parent=183 // pred_region
          %s918 = smul.u32 2, %s24
        $region204: #{dhsn1_2d_forward.3} parent=183 // pred_fallthru
          _
        // Predicated region
        $region205: #{dhsn1_2d_forward.3} parent=183 // pred_check
          %p919 = pneg %p172
        $region206: #{dhsn1_2d_forward.3} parent=183 // pred_check_branch
          %921 = sbr.rel (%p919) target = $region208
        $region207: #{dhsn1_2d_forward.3} parent=183 // pred_region
          %s922 = smul.u32 2, %s24
        $region208: #{dhsn1_2d_forward.3} parent=183 // pred_fallthru
          _
        // Predicated region
        $region209: #{dhsn1_2d_forward.3} parent=183 // pred_check
          %p923 = pneg %p198
        $region210: #{dhsn1_2d_forward.3} parent=183 // pred_check_branch
          %925 = sbr.rel (%p923) target = $region212
        $region211: #{dhsn1_2d_forward.3} parent=183 // pred_region
          %s926 = smul.u32 2, %s24
        $region212: #{dhsn1_2d_forward.3} parent=183 // pred_fallthru
          _
        // Predicated region
        $region213: #{dhsn1_2d_forward.3} parent=183 // pred_check
          %p927 = pneg %p224
        $region214: #{dhsn1_2d_forward.3} parent=183 // pred_check_branch
          %929 = sbr.rel (%p927) target = $region216
        $region215: #{dhsn1_2d_forward.3} parent=183 // pred_region
          %s930 = smul.u32 2, %s24
        $region216: #{dhsn1_2d_forward.3} parent=183 // pred_fallthru
          _
        // Predicated region
        $region217: #{dhsn1_2d_forward.3} parent=183 // pred_check
          %p931 = pneg %p250
        $region218: #{dhsn1_2d_forward.3} parent=183 // pred_check_branch
          %933 = sbr.rel (%p931) target = $region220
        $region219: #{dhsn1_2d_forward.3} parent=183 // pred_region
          %s934 = smul.u32 2, %s24
        $region220: #{dhsn1_2d_forward.3} parent=183 // pred_fallthru
          _
        // Predicated region
        $region221: #{dhsn1_2d_forward.3} parent=183 // pred_check
          %p935 = pneg %p276
        $region222: #{dhsn1_2d_forward.3} parent=183 // pred_check_branch
          %937 = sbr.rel (%p935) target = $region224
        $region223: #{dhsn1_2d_forward.3} parent=183 // pred_region
          %s938 = smul.u32 2, %s24
        $region224: #{dhsn1_2d_forward.3} parent=183 // pred_fallthru
          _
        // Predicated region
        $region225: #{dhsn1_2d_forward.3} parent=183 // pred_check
          %p939 = pneg %p302
        $region226: #{dhsn1_2d_forward.3} parent=183 // pred_check_branch
          %941 = sbr.rel (%p939) target = $region228
        $region227: #{dhsn1_2d_forward.3} parent=183 // pred_region
          %s942 = smul.u32 2, %s24
        $region228: #{dhsn1_2d_forward.3} parent=183 // pred_fallthru
          _
        // Predicated region
        $region229: #{dhsn1_2d_forward.3} parent=183 // pred_check
          %p943 = pneg %p328
        $region230: #{dhsn1_2d_forward.3} parent=183 // pred_check_branch
          %945 = sbr.rel (%p943) target = $region232
        $region231: #{dhsn1_2d_forward.3} parent=183 // pred_region
          %s946 = smul.u32 2, %s24
        $region232: #{dhsn1_2d_forward.3} parent=183 // pred_fallthru
          _
        // Predicated region
        $region233: #{dhsn1_2d_forward.3} parent=183 // pred_check
          %p947 = pneg %p354
        $region234: #{dhsn1_2d_forward.3} parent=183 // pred_check_branch
          %949 = sbr.rel (%p947) target = $region236
        $region235: #{dhsn1_2d_forward.3} parent=183 // pred_region
          %s950 = smul.u32 2, %s24
        $region236: #{dhsn1_2d_forward.3} parent=183 // pred_fallthru
          _
      $region184: #{dhsn1_2d_forward.3} parent=5 // pred_fallthru
        _
      %p951 = scmp.le.s32.totalorder 2, %s19
      // Predicated region
      $region237: #{dhsn1_2d_forward.3} parent=5 // pred_check
        %p952 = pneg %p951
      $region238: #{dhsn1_2d_forward.3} parent=5 // pred_check_branch
        %954 = sbr.rel (%p952) target = $region240
      $region239: #{dhsn1_2d_forward.3} parent=5 // pred_region
        %s955 = ssub.s32 %s19, 2
        // Predicated region
        $region241: #{dhsn1_2d_forward.3} parent=239 // pred_check
          %p956 = pneg %p152
        $region242: #{dhsn1_2d_forward.3} parent=239 // pred_check_branch
          %958 = sbr.rel (%p956) target = $region244
        $region243: #{dhsn1_2d_forward.3} parent=239 // pred_region
          %s959 = smul.u32 2, %s25
          %p960 = scmp.lt.s32.totalorder %s959, 3
          %s961 = scalar_select %p960, %s959, 3
          %s962 = scalar_lea.vmem %s4, %s961
        $region244: #{dhsn1_2d_forward.3} parent=239 // pred_fallthru
          _
        // Predicated region
        $region245: #{dhsn1_2d_forward.3} parent=239 // pred_check
          %p963 = pneg %p178
        $region246: #{dhsn1_2d_forward.3} parent=239 // pred_check_branch
          %965 = sbr.rel (%p963) target = $region248
        $region247: #{dhsn1_2d_forward.3} parent=239 // pred_region
          %s966 = smul.u32 2, %s25
          %p967 = scmp.lt.s32.totalorder %s966, 3
          %s968 = scalar_select %p967, %s966, 3
          %s969 = scalar_lea.vmem %s5, %s968
        $region248: #{dhsn1_2d_forward.3} parent=239 // pred_fallthru
          _
        // Predicated region
        $region249: #{dhsn1_2d_forward.3} parent=239 // pred_check
          %p970 = pneg %p204
        $region250: #{dhsn1_2d_forward.3} parent=239 // pred_check_branch
          %972 = sbr.rel (%p970) target = $region252
        $region251: #{dhsn1_2d_forward.3} parent=239 // pred_region
          %s973 = smul.u32 2, %s25
          %p974 = scmp.lt.s32.totalorder %s973, 3
          %s975 = scalar_select %p974, %s973, 3
          %s976 = scalar_lea.vmem %s6, %s975
        $region252: #{dhsn1_2d_forward.3} parent=239 // pred_fallthru
          _
        // Predicated region
        $region253: #{dhsn1_2d_forward.3} parent=239 // pred_check
          %p977 = pneg %p230
        $region254: #{dhsn1_2d_forward.3} parent=239 // pred_check_branch
          %979 = sbr.rel (%p977) target = $region256
        $region255: #{dhsn1_2d_forward.3} parent=239 // pred_region
          %s980 = smul.u32 2, %s25
          %p981 = scmp.lt.s32.totalorder %s980, 3
          %s982 = scalar_select %p981, %s980, 3
          %s983 = scalar_lea.vmem %s7, %s982
        $region256: #{dhsn1_2d_forward.3} parent=239 // pred_fallthru
          _
        // Predicated region
        $region257: #{dhsn1_2d_forward.3} parent=239 // pred_check
          %p984 = pneg %p256
        $region258: #{dhsn1_2d_forward.3} parent=239 // pred_check_branch
          %986 = sbr.rel (%p984) target = $region260
        $region259: #{dhsn1_2d_forward.3} parent=239 // pred_region
          %s987 = smul.u32 2, %s25
          %p988 = scmp.lt.s32.totalorder %s987, 3
          %s989 = scalar_select %p988, %s987, 3
          %s990 = scalar_lea.vmem %s8, %s989
        $region260: #{dhsn1_2d_forward.3} parent=239 // pred_fallthru
          _
        // Predicated region
        $region261: #{dhsn1_2d_forward.3} parent=239 // pred_check
          %p991 = pneg %p282
        $region262: #{dhsn1_2d_forward.3} parent=239 // pred_check_branch
          %993 = sbr.rel (%p991) target = $region264
        $region263: #{dhsn1_2d_forward.3} parent=239 // pred_region
          %s994 = smul.u32 2, %s25
          %p995 = scmp.lt.s32.totalorder %s994, 3
          %s996 = scalar_select %p995, %s994, 3
          %s997 = scalar_lea.vmem %s9, %s996
        $region264: #{dhsn1_2d_forward.3} parent=239 // pred_fallthru
          _
        // Predicated region
        $region265: #{dhsn1_2d_forward.3} parent=239 // pred_check
          %p998 = pneg %p308
        $region266: #{dhsn1_2d_forward.3} parent=239 // pred_check_branch
          %1000 = sbr.rel (%p998) target = $region268
        $region267: #{dhsn1_2d_forward.3} parent=239 // pred_region
          %s1001 = smul.u32 2, %s25
          %p1002 = scmp.lt.s32.totalorder %s1001, 3
          %s1003 = scalar_select %p1002, %s1001, 3
          %s1004 = scalar_lea.vmem %s10, %s1003
        $region268: #{dhsn1_2d_forward.3} parent=239 // pred_fallthru
          _
        // Predicated region
        $region269: #{dhsn1_2d_forward.3} parent=239 // pred_check
          %p1005 = pneg %p334
        $region270: #{dhsn1_2d_forward.3} parent=239 // pred_check_branch
          %1007 = sbr.rel (%p1005) target = $region272
        $region271: #{dhsn1_2d_forward.3} parent=239 // pred_region
          %s1008 = smul.u32 2, %s25
          %p1009 = scmp.lt.s32.totalorder %s1008, 3
          %s1010 = scalar_select %p1009, %s1008, 3
          %s1011 = scalar_lea.vmem %s11, %s1010
        $region272: #{dhsn1_2d_forward.3} parent=239 // pred_fallthru
          _
        // Predicated region
        $region273: #{dhsn1_2d_forward.3} parent=239 // pred_check
          %p1012 = pneg %p360
        $region274: #{dhsn1_2d_forward.3} parent=239 // pred_check_branch
          %1014 = sbr.rel (%p1012) target = $region276
        $region275: #{dhsn1_2d_forward.3} parent=239 // pred_region
          %s1015 = smul.u32 2, %s25
          %p1016 = scmp.lt.s32.totalorder %s1015, 3
          %s1017 = scalar_select %p1016, %s1015, 3
          %s1018 = scalar_lea.vmem %s12, %s1017
        $region276: #{dhsn1_2d_forward.3} parent=239 // pred_fallthru
          _
      $region240: #{dhsn1_2d_forward.3} parent=5 // pred_fallthru
        _
    $region6: #{dhsn1_2d_forward.3} parent=1 // loop_footer
      %s23 = sadd.s32 1, %s19
    $region7: #{dhsn1_2d_forward.3} parent=1 // loop_footer_branch
      %18 = sbr.rel target = $region3
    $region8: #{dhsn1_2d_forward.3} parent=1 // loop_exit
      _

// kernel: dhsn1_2d_forward.2
$region0: #{dhsn1_2d_forward.2}
  #allocation0 [shape = 'u32[]', space=smem, size = 0x4, offset = 0x4, fixed_abs, tag = 'smem constant byte address 0x4 - core index']
  #allocation1 [shape = 'u32[72,128]{1,0:T(1,128)}', space=vmem, size = 0x9000, scoped, tag = 'internal scratch']
  %s0 = inlined_call_operand.vmem [shape: f32[4,512], index: 0, kind: input, shape index: {}]
  %s1 = inlined_call_operand.vmem [shape: f32[4,512], index: 1, kind: input, shape index: {}]
  %s2 = inlined_call_operand.vmem [shape: f32[4,512], index: 2, kind: input, shape index: {}]
  %s3 = inlined_call_operand.vmem [shape: f32[4,512], index: 3, kind: input, shape index: {}]
  %s4 = inlined_call_operand.vmem [shape: bf16[4,4], index: 4, kind: input, shape index: {}]
  %s5 = inlined_call_operand.vmem [shape: f32[4,1], index: 5, kind: input, shape index: {}]
  %s6 = inlined_call_operand.vmem [shape: bf16[4,4], index: 6, kind: input, shape index: {}]
  %s7 = inlined_call_operand.vmem [shape: bf16[4,4], index: 7, kind: input, shape index: {}]
  %s8 = inlined_call_operand.vmem [shape: f32[4,1], index: 8, kind: input, shape index: {}]
  %s9 = inlined_call_operand.vmem [shape: bf16[4,4], index: 9, kind: input, shape index: {}]
  %s10 = inlined_call_operand.vmem [shape: f32[4,1], index: 10, kind: input, shape index: {}]
  %s11 = inlined_call_operand.vmem [shape: bf16[4,4], index: 11, kind: input, shape index: {}]
  %s12 = inlined_call_operand.vmem [shape: bf16[4,4], index: 12, kind: input, shape index: {}]
  %s13 = inlined_call_operand.vmem [shape: f32[4,1], index: 13, kind: input, shape index: {}]
  %s14 = inlined_call_operand.vmem [shape: f32[4,512], index: 14, kind: output, shape index: {0}]
  %s15 = inlined_call_operand.vmem [shape: f32[4,512], index: 15, kind: output, shape index: {1}]
  %s16 = inlined_call_operand.vmem [shape: f32[4,512], index: 16, kind: output, shape index: {2}]
  %s17 = inlined_call_operand.vmem [shape: f32[4,512], index: 17, kind: output, shape index: {3}]
  %18 = xla_tuple %s14, %s15, %s16, %s17
  %s19 = sld [smem:[#allocation0]]
  $region113: #{dhsn1_2d_forward.2} parent=0
    _
  %s21 = ssub.s32 1, %s19
  %s22 = scalar_select 0, %s21, %s19
  loop: start=0, step=1, limit=4
  $region2: #{dhsn1_2d_forward.2} parent=0 // loop_pre_header
    _
  $region3: #{dhsn1_2d_forward.2} parent=0 // loop_header
    %s24 = sphi 0, %s28
    %p25 = scmp.ge.s32.totalorder %s24, 4
    %s34 = sphi 0, %s36
    %s37 = sphi 0, %s34
    %s38 = sphi 0, %s37
    %s54 = sphi 0, %s38
    %s60 = sphi 0, %s62
    %s63 = sphi 0, %s60
    %s64 = sphi 0, %s63
    %s80 = sphi 0, %s64
    %s86 = sphi 0, %s88
    %s89 = sphi 0, %s86
    %s90 = sphi 0, %s89
    %s106 = sphi 0, %s90
    %s112 = sphi 0, %s114
    %s115 = sphi 0, %s112
    %s116 = sphi 0, %s115
    %s132 = sphi 0, %s116
    %s136 = sphi 0, %s136
    %s138 = sphi 0, %s136
    %s139 = sphi 0, %s138
    %s153 = sphi 0, %s139
    %s157 = sphi 0, %s157
    %s159 = sphi 0, %s157
    %s160 = sphi 0, %s159
    %s174 = sphi 0, %s160
    %s178 = sphi 0, %s178
    %s180 = sphi 0, %s178
    %s181 = sphi 0, %s180
    %s195 = sphi 0, %s181
    %s199 = sphi 0, %s199
    %s201 = sphi 0, %s199
    %s202 = sphi 0, %s201
    %s216 = sphi 0, %s202
    %s220 = sphi 0, %s220
    %s222 = sphi 0, %s220
    %s223 = sphi 0, %s222
    %s237 = sphi 0, %s223
    %s241 = sphi 0, %s241
    %s243 = sphi 0, %s241
    %s244 = sphi 0, %s243
    %s258 = sphi 0, %s244
    %s262 = sphi 0, %s262
    %s264 = sphi 0, %s262
    %s265 = sphi 0, %s264
    %s279 = sphi 0, %s265
    %s283 = sphi 0, %s283
    %s285 = sphi 0, %s283
    %s286 = sphi 0, %s285
    %s300 = sphi 0, %s286
    %s304 = sphi 0, %s304
    %s306 = sphi 0, %s304
    %s307 = sphi 0, %s306
    %s321 = sphi 0, %s307
    %s325 = sphi 0, %s325
    %s327 = sphi 0, %s325
    %s328 = sphi 0, %s327
    %s342 = sphi 0, %s328
    %s348 = sphi 0, %s350
    %s351 = sphi 0, %s348
    %s352 = sphi 0, %s351
    %s368 = sphi 0, %s352
    %s374 = sphi 0, %s376
    %s377 = sphi 0, %s374
    %s378 = sphi 0, %s377
    %s394 = sphi 0, %s378
    %s400 = sphi 0, %s402
    %s403 = sphi 0, %s400
    %s404 = sphi 0, %s403
    %s420 = sphi 0, %s404
    %s426 = sphi 0, %s428
    %s429 = sphi 0, %s426
    %s430 = sphi 0, %s429
    %s446 = sphi 0, %s430
  $region4: #{dhsn1_2d_forward.2} parent=0 // loop_header_branch
    %27 = sbr.rel (%p25) target = $region8
  $region5: #{dhsn1_2d_forward.2} parent=0 // loop_body
    %s29 = ssub.s32 %s24, 1
    %s30 = ssub.s32 %s24, 2
    %s31 = sadd.s32 %s24, 1
    %s32 = ssub.s32 %s24, %s31
    %p33 = scmp.eq.s32.totalorder %s32, 0
    %s35 = sadd.s32 %s34, 1
    %s36 = scalar_select %p33, %s34, %s35
    %p39 = pneg %p33
    %p40 = scmp.eq.s32.totalorder %s24, 1
    %p41 = por %p39, %p40
    %p42 = scmp.ne.s32.totalorder %s34, %s37
    %p43 = scmp.eq.s32.totalorder %s24, 0
    %p44 = por %p42, %p43
    %p45 = scmp.ne.s32.totalorder %s34, %s37
    %p46 = scmp.eq.s32.totalorder %s29, 1
    %p47 = por %p45, %p46
    %p48 = scmp.ne.s32.totalorder %s37, %s38
    %p49 = scmp.eq.s32.totalorder %s29, 0
    %p50 = por %p48, %p49
    %p51 = scmp.ne.s32.totalorder %s37, %s38
    %p52 = scmp.eq.s32.totalorder %s30, 1
    %p53 = por %p51, %p52
    %p55 = scmp.ne.s32.totalorder %s38, %s54
    %p56 = scmp.eq.s32.totalorder %s30, 0
    %p57 = por %p55, %p56
    %s58 = ssub.s32 %s24, %s31
    %p59 = scmp.eq.s32.totalorder %s58, 0
    %s61 = sadd.s32 %s60, 1
    %s62 = scalar_select %p59, %s60, %s61
    %p65 = pneg %p59
    %p66 = scmp.eq.s32.totalorder %s24, 1
    %p67 = por %p65, %p66
    %p68 = scmp.ne.s32.totalorder %s60, %s63
    %p69 = scmp.eq.s32.totalorder %s24, 0
    %p70 = por %p68, %p69
    %p71 = scmp.ne.s32.totalorder %s60, %s63
    %p72 = scmp.eq.s32.totalorder %s29, 1
    %p73 = por %p71, %p72
    %p74 = scmp.ne.s32.totalorder %s63, %s64
    %p75 = scmp.eq.s32.totalorder %s29, 0
    %p76 = por %p74, %p75
    %p77 = scmp.ne.s32.totalorder %s63, %s64
    %p78 = scmp.eq.s32.totalorder %s30, 1
    %p79 = por %p77, %p78
    %p81 = scmp.ne.s32.totalorder %s64, %s80
    %p82 = scmp.eq.s32.totalorder %s30, 0
    %p83 = por %p81, %p82
    %s84 = ssub.s32 %s24, %s31
    %p85 = scmp.eq.s32.totalorder %s84, 0
    %s87 = sadd.s32 %s86, 1
    %s88 = scalar_select %p85, %s86, %s87
    %p91 = pneg %p85
    %p92 = scmp.eq.s32.totalorder %s24, 1
    %p93 = por %p91, %p92
    %p94 = scmp.ne.s32.totalorder %s86, %s89
    %p95 = scmp.eq.s32.totalorder %s24, 0
    %p96 = por %p94, %p95
    %p97 = scmp.ne.s32.totalorder %s86, %s89
    %p98 = scmp.eq.s32.totalorder %s29, 1
    %p99 = por %p97, %p98
    %p100 = scmp.ne.s32.totalorder %s89, %s90
    %p101 = scmp.eq.s32.totalorder %s29, 0
    %p102 = por %p100, %p101
    %p103 = scmp.ne.s32.totalorder %s89, %s90
    %p104 = scmp.eq.s32.totalorder %s30, 1
    %p105 = por %p103, %p104
    %p107 = scmp.ne.s32.totalorder %s90, %s106
    %p108 = scmp.eq.s32.totalorder %s30, 0
    %p109 = por %p107, %p108
    %s110 = ssub.s32 %s24, %s31
    %p111 = scmp.eq.s32.totalorder %s110, 0
    %s113 = sadd.s32 %s112, 1
    %s114 = scalar_select %p111, %s112, %s113
    %p117 = pneg %p111
    %p118 = scmp.eq.s32.totalorder %s24, 1
    %p119 = por %p117, %p118
    %p120 = scmp.ne.s32.totalorder %s112, %s115
    %p121 = scmp.eq.s32.totalorder %s24, 0
    %p122 = por %p120, %p121
    %p123 = scmp.ne.s32.totalorder %s112, %s115
    %p124 = scmp.eq.s32.totalorder %s29, 1
    %p125 = por %p123, %p124
    %p126 = scmp.ne.s32.totalorder %s115, %s116
    %p127 = scmp.eq.s32.totalorder %s29, 0
    %p128 = por %p126, %p127
    %p129 = scmp.ne.s32.totalorder %s115, %s116
    %p130 = scmp.eq.s32.totalorder %s30, 1
    %p131 = por %p129, %p130
    %p133 = scmp.ne.s32.totalorder %s116, %s132
    %p134 = scmp.eq.s32.totalorder %s30, 0
    %p135 = por %p133, %p134
    %s137 = sadd.s32 %s136, 1
    %p140 = scmp.eq.s32.totalorder %s24, 1
    %p141 = scmp.ne.s32.totalorder %s136, %s138
    %p142 = scmp.eq.s32.totalorder %s24, 0
    %p143 = por %p141, %p142
    %p144 = scmp.ne.s32.totalorder %s136, %s138
    %p145 = scmp.eq.s32.totalorder %s29, 1
    %p146 = por %p144, %p145
    %p147 = scmp.ne.s32.totalorder %s138, %s139
    %p148 = scmp.eq.s32.totalorder %s29, 0
    %p149 = por %p147, %p148
    %p150 = scmp.ne.s32.totalorder %s138, %s139
    %p151 = scmp.eq.s32.totalorder %s30, 1
    %p152 = por %p150, %p151
    %p154 = scmp.ne.s32.totalorder %s139, %s153
    %p155 = scmp.eq.s32.totalorder %s30, 0
    %p156 = por %p154, %p155
    %s158 = sadd.s32 %s157, 1
    %p161 = scmp.eq.s32.totalorder %s24, 1
    %p162 = scmp.ne.s32.totalorder %s157, %s159
    %p163 = scmp.eq.s32.totalorder %s24, 0
    %p164 = por %p162, %p163
    %p165 = scmp.ne.s32.totalorder %s157, %s159
    %p166 = scmp.eq.s32.totalorder %s29, 1
    %p167 = por %p165, %p166
    %p168 = scmp.ne.s32.totalorder %s159, %s160
    %p169 = scmp.eq.s32.totalorder %s29, 0
    %p170 = por %p168, %p169
    %p171 = scmp.ne.s32.totalorder %s159, %s160
    %p172 = scmp.eq.s32.totalorder %s30, 1
    %p173 = por %p171, %p172
    %p175 = scmp.ne.s32.totalorder %s160, %s174
    %p176 = scmp.eq.s32.totalorder %s30, 0
    %p177 = por %p175, %p176
    %s179 = sadd.s32 %s178, 1
    %p182 = scmp.eq.s32.totalorder %s24, 1
    %p183 = scmp.ne.s32.totalorder %s178, %s180
    %p184 = scmp.eq.s32.totalorder %s24, 0
    %p185 = por %p183, %p184
    %p186 = scmp.ne.s32.totalorder %s178, %s180
    %p187 = scmp.eq.s32.totalorder %s29, 1
    %p188 = por %p186, %p187
    %p189 = scmp.ne.s32.totalorder %s180, %s181
    %p190 = scmp.eq.s32.totalorder %s29, 0
    %p191 = por %p189, %p190
    %p192 = scmp.ne.s32.totalorder %s180, %s181
    %p193 = scmp.eq.s32.totalorder %s30, 1
    %p194 = por %p192, %p193
    %p196 = scmp.ne.s32.totalorder %s181, %s195
    %p197 = scmp.eq.s32.totalorder %s30, 0
    %p198 = por %p196, %p197
    %s200 = sadd.s32 %s199, 1
    %p203 = scmp.eq.s32.totalorder %s24, 1
    %p204 = scmp.ne.s32.totalorder %s199, %s201
    %p205 = scmp.eq.s32.totalorder %s24, 0
    %p206 = por %p204, %p205
    %p207 = scmp.ne.s32.totalorder %s199, %s201
    %p208 = scmp.eq.s32.totalorder %s29, 1
    %p209 = por %p207, %p208
    %p210 = scmp.ne.s32.totalorder %s201, %s202
    %p211 = scmp.eq.s32.totalorder %s29, 0
    %p212 = por %p210, %p211
    %p213 = scmp.ne.s32.totalorder %s201, %s202
    %p214 = scmp.eq.s32.totalorder %s30, 1
    %p215 = por %p213, %p214
    %p217 = scmp.ne.s32.totalorder %s202, %s216
    %p218 = scmp.eq.s32.totalorder %s30, 0
    %p219 = por %p217, %p218
    %s221 = sadd.s32 %s220, 1
    %p224 = scmp.eq.s32.totalorder %s24, 1
    %p225 = scmp.ne.s32.totalorder %s220, %s222
    %p226 = scmp.eq.s32.totalorder %s24, 0
    %p227 = por %p225, %p226
    %p228 = scmp.ne.s32.totalorder %s220, %s222
    %p229 = scmp.eq.s32.totalorder %s29, 1
    %p230 = por %p228, %p229
    %p231 = scmp.ne.s32.totalorder %s222, %s223
    %p232 = scmp.eq.s32.totalorder %s29, 0
    %p233 = por %p231, %p232
    %p234 = scmp.ne.s32.totalorder %s222, %s223
    %p235 = scmp.eq.s32.totalorder %s30, 1
    %p236 = por %p234, %p235
    %p238 = scmp.ne.s32.totalorder %s223, %s237
    %p239 = scmp.eq.s32.totalorder %s30, 0
    %p240 = por %p238, %p239
    %s242 = sadd.s32 %s241, 1
    %p245 = scmp.eq.s32.totalorder %s24, 1
    %p246 = scmp.ne.s32.totalorder %s241, %s243
    %p247 = scmp.eq.s32.totalorder %s24, 0
    %p248 = por %p246, %p247
    %p249 = scmp.ne.s32.totalorder %s241, %s243
    %p250 = scmp.eq.s32.totalorder %s29, 1
    %p251 = por %p249, %p250
    %p252 = scmp.ne.s32.totalorder %s243, %s244
    %p253 = scmp.eq.s32.totalorder %s29, 0
    %p254 = por %p252, %p253
    %p255 = scmp.ne.s32.totalorder %s243, %s244
    %p256 = scmp.eq.s32.totalorder %s30, 1
    %p257 = por %p255, %p256
    %p259 = scmp.ne.s32.totalorder %s244, %s258
    %p260 = scmp.eq.s32.totalorder %s30, 0
    %p261 = por %p259, %p260
    %s263 = sadd.s32 %s262, 1
    %p266 = scmp.eq.s32.totalorder %s24, 1
    %p267 = scmp.ne.s32.totalorder %s262, %s264
    %p268 = scmp.eq.s32.totalorder %s24, 0
    %p269 = por %p267, %p268
    %p270 = scmp.ne.s32.totalorder %s262, %s264
    %p271 = scmp.eq.s32.totalorder %s29, 1
    %p272 = por %p270, %p271
    %p273 = scmp.ne.s32.totalorder %s264, %s265
    %p274 = scmp.eq.s32.totalorder %s29, 0
    %p275 = por %p273, %p274
    %p276 = scmp.ne.s32.totalorder %s264, %s265
    %p277 = scmp.eq.s32.totalorder %s30, 1
    %p278 = por %p276, %p277
    %p280 = scmp.ne.s32.totalorder %s265, %s279
    %p281 = scmp.eq.s32.totalorder %s30, 0
    %p282 = por %p280, %p281
    %s284 = sadd.s32 %s283, 1
    %p287 = scmp.eq.s32.totalorder %s24, 1
    %p288 = scmp.ne.s32.totalorder %s283, %s285
    %p289 = scmp.eq.s32.totalorder %s24, 0
    %p290 = por %p288, %p289
    %p291 = scmp.ne.s32.totalorder %s283, %s285
    %p292 = scmp.eq.s32.totalorder %s29, 1
    %p293 = por %p291, %p292
    %p294 = scmp.ne.s32.totalorder %s285, %s286
    %p295 = scmp.eq.s32.totalorder %s29, 0
    %p296 = por %p294, %p295
    %p297 = scmp.ne.s32.totalorder %s285, %s286
    %p298 = scmp.eq.s32.totalorder %s30, 1
    %p299 = por %p297, %p298
    %p301 = scmp.ne.s32.totalorder %s286, %s300
    %p302 = scmp.eq.s32.totalorder %s30, 0
    %p303 = por %p301, %p302
    %s305 = sadd.s32 %s304, 1
    %p308 = scmp.eq.s32.totalorder %s24, 1
    %p309 = scmp.ne.s32.totalorder %s304, %s306
    %p310 = scmp.eq.s32.totalorder %s24, 0
    %p311 = por %p309, %p310
    %p312 = scmp.ne.s32.totalorder %s304, %s306
    %p313 = scmp.eq.s32.totalorder %s29, 1
    %p314 = por %p312, %p313
    %p315 = scmp.ne.s32.totalorder %s306, %s307
    %p316 = scmp.eq.s32.totalorder %s29, 0
    %p317 = por %p315, %p316
    %p318 = scmp.ne.s32.totalorder %s306, %s307
    %p319 = scmp.eq.s32.totalorder %s30, 1
    %p320 = por %p318, %p319
    %p322 = scmp.ne.s32.totalorder %s307, %s321
    %p323 = scmp.eq.s32.totalorder %s30, 0
    %p324 = por %p322, %p323
    %s326 = sadd.s32 %s325, 1
    %p329 = scmp.eq.s32.totalorder %s24, 1
    %p330 = scmp.ne.s32.totalorder %s325, %s327
    %p331 = scmp.eq.s32.totalorder %s24, 0
    %p332 = por %p330, %p331
    %p333 = scmp.ne.s32.totalorder %s325, %s327
    %p334 = scmp.eq.s32.totalorder %s29, 1
    %p335 = por %p333, %p334
    %p336 = scmp.ne.s32.totalorder %s327, %s328
    %p337 = scmp.eq.s32.totalorder %s29, 0
    %p338 = por %p336, %p337
    %p339 = scmp.ne.s32.totalorder %s327, %s328
    %p340 = scmp.eq.s32.totalorder %s30, 1
    %p341 = por %p339, %p340
    %p343 = scmp.ne.s32.totalorder %s328, %s342
    %p344 = scmp.eq.s32.totalorder %s30, 0
    %p345 = por %p343, %p344
    %s346 = ssub.s32 %s24, %s31
    %p347 = scmp.eq.s32.totalorder %s346, 0
    %s349 = sadd.s32 %s348, 1
    %s350 = scalar_select %p347, %s348, %s349
    %p353 = pneg %p347
    %p354 = scmp.eq.s32.totalorder %s24, 1
    %p355 = por %p353, %p354
    %p356 = scmp.ne.s32.totalorder %s348, %s351
    %p357 = scmp.eq.s32.totalorder %s24, 0
    %p358 = por %p356, %p357
    %p359 = scmp.ne.s32.totalorder %s348, %s351
    %p360 = scmp.eq.s32.totalorder %s29, 1
    %p361 = por %p359, %p360
    %p362 = scmp.ne.s32.totalorder %s351, %s352
    %p363 = scmp.eq.s32.totalorder %s29, 0
    %p364 = por %p362, %p363
    %p365 = scmp.ne.s32.totalorder %s351, %s352
    %p366 = scmp.eq.s32.totalorder %s30, 1
    %p367 = por %p365, %p366
    %p369 = scmp.ne.s32.totalorder %s352, %s368
    %p370 = scmp.eq.s32.totalorder %s30, 0
    %p371 = por %p369, %p370
    %s372 = ssub.s32 %s24, %s31
    %p373 = scmp.eq.s32.totalorder %s372, 0
    %s375 = sadd.s32 %s374, 1
    %s376 = scalar_select %p373, %s374, %s375
    %p379 = pneg %p373
    %p380 = scmp.eq.s32.totalorder %s24, 1
    %p381 = por %p379, %p380
    %p382 = scmp.ne.s32.totalorder %s374, %s377
    %p383 = scmp.eq.s32.totalorder %s24, 0
    %p384 = por %p382, %p383
    %p385 = scmp.ne.s32.totalorder %s374, %s377
    %p386 = scmp.eq.s32.totalorder %s29, 1
    %p387 = por %p385, %p386
    %p388 = scmp.ne.s32.totalorder %s377, %s378
    %p389 = scmp.eq.s32.totalorder %s29, 0
    %p390 = por %p388, %p389
    %p391 = scmp.ne.s32.totalorder %s377, %s378
    %p392 = scmp.eq.s32.totalorder %s30, 1
    %p393 = por %p391, %p392
    %p395 = scmp.ne.s32.totalorder %s378, %s394
    %p396 = scmp.eq.s32.totalorder %s30, 0
    %p397 = por %p395, %p396
    %s398 = ssub.s32 %s24, %s31
    %p399 = scmp.eq.s32.totalorder %s398, 0
    %s401 = sadd.s32 %s400, 1
    %s402 = scalar_select %p399, %s400, %s401
    %p405 = pneg %p399
    %p406 = scmp.eq.s32.totalorder %s24, 1
    %p407 = por %p405, %p406
    %p408 = scmp.ne.s32.totalorder %s400, %s403
    %p409 = scmp.eq.s32.totalorder %s24, 0
    %p410 = por %p408, %p409
    %p411 = scmp.ne.s32.totalorder %s400, %s403
    %p412 = scmp.eq.s32.totalorder %s29, 1
    %p413 = por %p411, %p412
    %p414 = scmp.ne.s32.totalorder %s403, %s404
    %p415 = scmp.eq.s32.totalorder %s29, 0
    %p416 = por %p414, %p415
    %p417 = scmp.ne.s32.totalorder %s403, %s404
    %p418 = scmp.eq.s32.totalorder %s30, 1
    %p419 = por %p417, %p418
    %p421 = scmp.ne.s32.totalorder %s404, %s420
    %p422 = scmp.eq.s32.totalorder %s30, 0
    %p423 = por %p421, %p422
    %s424 = ssub.s32 %s24, %s31
    %p425 = scmp.eq.s32.totalorder %s424, 0
    %s427 = sadd.s32 %s426, 1
    %s428 = scalar_select %p425, %s426, %s427
    %p431 = pneg %p425
    %p432 = scmp.eq.s32.totalorder %s24, 1
    %p433 = por %p431, %p432
    %p434 = scmp.ne.s32.totalorder %s426, %s429
    %p435 = scmp.eq.s32.totalorder %s24, 0
    %p436 = por %p434, %p435
    %p437 = scmp.ne.s32.totalorder %s426, %s429
    %p438 = scmp.eq.s32.totalorder %s29, 1
    %p439 = por %p437, %p438
    %p440 = scmp.ne.s32.totalorder %s429, %s430
    %p441 = scmp.eq.s32.totalorder %s29, 0
    %p442 = por %p440, %p441
    %p443 = scmp.ne.s32.totalorder %s429, %s430
    %p444 = scmp.eq.s32.totalorder %s30, 1
    %p445 = por %p443, %p444
    %p447 = scmp.ne.s32.totalorder %s430, %s446
    %p448 = scmp.eq.s32.totalorder %s30, 0
    %p449 = por %p447, %p448
    %p450 = scmp.le.s32.totalorder 1, %s24
    %p451 = scmp.lt.s32.totalorder %s24, 3
    %p452 = pnand %p450, %p451
    %p453 = pneg %p452
    // Predicated region
    $region9: #{dhsn1_2d_forward.2} parent=5 // pred_check
      _
    $region10: #{dhsn1_2d_forward.2} parent=5 // pred_check_branch
      %455 = sbr.rel (%p452) target = $region12
    $region11: #{dhsn1_2d_forward.2} parent=5 // pred_region
      %s456 = ssub.s32 %s24, 1
      // Predicated region
      $region13: #{dhsn1_2d_forward.2} parent=11 // pred_check
        %p457 = pneg %p149
      $region14: #{dhsn1_2d_forward.2} parent=11 // pred_check_branch
        %459 = sbr.rel (%p457) target = $region16
      $region15: #{dhsn1_2d_forward.2} parent=11 // pred_region
        _
      $region16: #{dhsn1_2d_forward.2} parent=11 // pred_fallthru
        _
      // Predicated region
      $region17: #{dhsn1_2d_forward.2} parent=11 // pred_check
        %p460 = pneg %p170
      $region18: #{dhsn1_2d_forward.2} parent=11 // pred_check_branch
        %462 = sbr.rel (%p460) target = $region20
      $region19: #{dhsn1_2d_forward.2} parent=11 // pred_region
        _
      $region20: #{dhsn1_2d_forward.2} parent=11 // pred_fallthru
        _
      // Predicated region
      $region21: #{dhsn1_2d_forward.2} parent=11 // pred_check
        %p463 = pneg %p191
      $region22: #{dhsn1_2d_forward.2} parent=11 // pred_check_branch
        %465 = sbr.rel (%p463) target = $region24
      $region23: #{dhsn1_2d_forward.2} parent=11 // pred_region
        _
      $region24: #{dhsn1_2d_forward.2} parent=11 // pred_fallthru
        _
      // Predicated region
      $region25: #{dhsn1_2d_forward.2} parent=11 // pred_check
        %p466 = pneg %p212
      $region26: #{dhsn1_2d_forward.2} parent=11 // pred_check_branch
        %468 = sbr.rel (%p466) target = $region28
      $region27: #{dhsn1_2d_forward.2} parent=11 // pred_region
        _
      $region28: #{dhsn1_2d_forward.2} parent=11 // pred_fallthru
        _
      // Predicated region
      $region29: #{dhsn1_2d_forward.2} parent=11 // pred_check
        %p469 = pneg %p233
      $region30: #{dhsn1_2d_forward.2} parent=11 // pred_check_branch
        %471 = sbr.rel (%p469) target = $region32
      $region31: #{dhsn1_2d_forward.2} parent=11 // pred_region
        _
      $region32: #{dhsn1_2d_forward.2} parent=11 // pred_fallthru
        _
      // Predicated region
      $region33: #{dhsn1_2d_forward.2} parent=11 // pred_check
        %p472 = pneg %p254
      $region34: #{dhsn1_2d_forward.2} parent=11 // pred_check_branch
        %474 = sbr.rel (%p472) target = $region36
      $region35: #{dhsn1_2d_forward.2} parent=11 // pred_region
        _
      $region36: #{dhsn1_2d_forward.2} parent=11 // pred_fallthru
        _
      // Predicated region
      $region37: #{dhsn1_2d_forward.2} parent=11 // pred_check
        %p475 = pneg %p275
      $region38: #{dhsn1_2d_forward.2} parent=11 // pred_check_branch
        %477 = sbr.rel (%p475) target = $region40
      $region39: #{dhsn1_2d_forward.2} parent=11 // pred_region
        _
      $region40: #{dhsn1_2d_forward.2} parent=11 // pred_fallthru
        _
      // Predicated region
      $region41: #{dhsn1_2d_forward.2} parent=11 // pred_check
        %p478 = pneg %p296
      $region42: #{dhsn1_2d_forward.2} parent=11 // pred_check_branch
        %480 = sbr.rel (%p478) target = $region44
      $region43: #{dhsn1_2d_forward.2} parent=11 // pred_region
        _
      $region44: #{dhsn1_2d_forward.2} parent=11 // pred_fallthru
        _
      // Predicated region
      $region45: #{dhsn1_2d_forward.2} parent=11 // pred_check
        %p481 = pneg %p317
      $region46: #{dhsn1_2d_forward.2} parent=11 // pred_check_branch
        %483 = sbr.rel (%p481) target = $region48
      $region47: #{dhsn1_2d_forward.2} parent=11 // pred_region
        _
      $region48: #{dhsn1_2d_forward.2} parent=11 // pred_fallthru
        _
      // Predicated region
      $region49: #{dhsn1_2d_forward.2} parent=11 // pred_check
        %p484 = pneg %p338
      $region50: #{dhsn1_2d_forward.2} parent=11 // pred_check_branch
        %486 = sbr.rel (%p484) target = $region52
      $region51: #{dhsn1_2d_forward.2} parent=11 // pred_region
        _
      $region52: #{dhsn1_2d_forward.2} parent=11 // pred_fallthru
        _
    $region12: #{dhsn1_2d_forward.2} parent=5 // pred_fallthru
      _
    %p487 = scmp.lt.s32.totalorder %s24, 2
    // Predicated region
    $region53: #{dhsn1_2d_forward.2} parent=5 // pred_check
      %p488 = pneg %p487
    $region54: #{dhsn1_2d_forward.2} parent=5 // pred_check_branch
      %490 = sbr.rel (%p488) target = $region56
    $region55: #{dhsn1_2d_forward.2} parent=5 // pred_region
      // Predicated region
      $region57: #{dhsn1_2d_forward.2} parent=55 // pred_check
        %p491 = pneg %p44
      $region58: #{dhsn1_2d_forward.2} parent=55 // pred_check_branch
        %493 = sbr.rel (%p491) target = $region60
      $region59: #{dhsn1_2d_forward.2} parent=55 // pred_region
        %s494 = smul.u32 2, %s24
        %p495 = scmp.lt.s32.totalorder %s494, 3
        %s496 = scalar_select %p495, %s494, 3
        %s497 = smul.addr %s496, 4
        %s498 = scalar_lea.vmem %s0, %s497
        %s499 = smul.u32 2, %s24
      $region60: #{dhsn1_2d_forward.2} parent=55 // pred_fallthru
        _
      // Predicated region
      $region61: #{dhsn1_2d_forward.2} parent=55 // pred_check
        %p500 = pneg %p70
      $region62: #{dhsn1_2d_forward.2} parent=55 // pred_check_branch
        %502 = sbr.rel (%p500) target = $region64
      $region63: #{dhsn1_2d_forward.2} parent=55 // pred_region
        %s503 = smul.u32 2, %s24
        %p504 = scmp.lt.s32.totalorder %s503, 3
        %s505 = scalar_select %p504, %s503, 3
        %s506 = smul.addr %s505, 4
        %s507 = scalar_lea.vmem %s1, %s506
        %s508 = smul.u32 2, %s24
      $region64: #{dhsn1_2d_forward.2} parent=55 // pred_fallthru
        _
      // Predicated region
      $region65: #{dhsn1_2d_forward.2} parent=55 // pred_check
        %p509 = pneg %p96
      $region66: #{dhsn1_2d_forward.2} parent=55 // pred_check_branch
        %511 = sbr.rel (%p509) target = $region68
      $region67: #{dhsn1_2d_forward.2} parent=55 // pred_region
        %s512 = smul.u32 2, %s24
        %p513 = scmp.lt.s32.totalorder %s512, 3
        %s514 = scalar_select %p513, %s512, 3
        %s515 = smul.addr %s514, 4
        %s516 = scalar_lea.vmem %s2, %s515
        %s517 = smul.u32 2, %s24
      $region68: #{dhsn1_2d_forward.2} parent=55 // pred_fallthru
        _
      // Predicated region
      $region69: #{dhsn1_2d_forward.2} parent=55 // pred_check
        %p518 = pneg %p122
      $region70: #{dhsn1_2d_forward.2} parent=55 // pred_check_branch
        %520 = sbr.rel (%p518) target = $region72
      $region71: #{dhsn1_2d_forward.2} parent=55 // pred_region
        %s521 = smul.u32 2, %s24
        %p522 = scmp.lt.s32.totalorder %s521, 3
        %s523 = scalar_select %p522, %s521, 3
        %s524 = smul.addr %s523, 4
        %s525 = scalar_lea.vmem %s3, %s524
        %s526 = smul.u32 2, %s24
      $region72: #{dhsn1_2d_forward.2} parent=55 // pred_fallthru
        _
    $region56: #{dhsn1_2d_forward.2} parent=5 // pred_fallthru
      _
    %p527 = scmp.le.s32.totalorder 1, %s24
    %p528 = scmp.lt.s32.totalorder %s24, 3
    %p529 = pnand %p527, %p528
    %p530 = pneg %p529
    // Predicated region
    $region73: #{dhsn1_2d_forward.2} parent=5 // pred_check
      _
    $region74: #{dhsn1_2d_forward.2} parent=5 // pred_check_branch
      %532 = sbr.rel (%p529) target = $region76
    $region75: #{dhsn1_2d_forward.2} parent=5 // pred_region
      %s533 = ssub.s32 %s24, 1
      %s534 = smul.u32 2, %s29
      %p535 = scmp.lt.s32.totalorder %s534, 3
      %s536 = scalar_select %p535, %s534, 3
      %s537 = smul.addr %s536, 4
      %s538 = scalar_lea.vmem %s0, %s537
      %p539 = pneg %p50
      %p540 = pneg %p47
      %s541 = smul.u32 2, %s29
      %p542 = scmp.lt.s32.totalorder %s541, 3
      %s543 = scalar_select %p542, %s541, 3
      %s544 = smul.addr %s543, 4
      %s545 = scalar_lea.vmem %s1, %s544
      %p546 = pneg %p76
      %p547 = pneg %p73
      %s548 = smul.u32 2, %s29
      %p549 = scmp.lt.s32.totalorder %s548, 3
      %s550 = scalar_select %p549, %s548, 3
      %s551 = smul.addr %s550, 4
      %s552 = scalar_lea.vmem %s2, %s551
      %p553 = pneg %p102
      %p554 = pneg %p99
      %s555 = smul.u32 2, %s29
      %p556 = scmp.lt.s32.totalorder %s555, 3
      %s557 = scalar_select %p556, %s555, 3
      %s558 = smul.addr %s557, 4
      %s559 = scalar_lea.vmem %s3, %s558
      %p560 = pneg %p128
      %p561 = pneg %p125
      %p562 = pneg %p149
      %p563 = pneg %p146
      %p564 = pneg %p170
      %p565 = pneg %p167
      %p566 = pneg %p191
      %p567 = pneg %p188
      %p568 = pneg %p212
      %p569 = pneg %p209
      %p570 = pneg %p233
      %p571 = pneg %p230
      %p572 = pneg %p254
      %p573 = pneg %p251
      %p574 = pneg %p275
      %p575 = pneg %p272
      %p576 = pneg %p296
      %p577 = pneg %p293
      %p578 = pneg %p317
      %p579 = pneg %p314
      %p580 = pneg %p338
      %p581 = pneg %p335
      %p582 = pneg %p364
      %p583 = pneg %p361
      %s584 = smul.u32 2, %s29
      %p585 = scmp.lt.s32.totalorder %s584, 3
      %s586 = scalar_select %p585, %s584, 3
      %s587 = smul.addr %s586, 4
      %s588 = scalar_lea.vmem %s14, %s587
      %p589 = pneg %p390
      %p590 = pneg %p387
      %s591 = smul.u32 2, %s29
      %p592 = scmp.lt.s32.totalorder %s591, 3
      %s593 = scalar_select %p592, %s591, 3
      %s594 = smul.addr %s593, 4
      %s595 = scalar_lea.vmem %s15, %s594
      %p596 = pneg %p416
      %p597 = pneg %p413
      %s598 = smul.u32 2, %s29
      %p599 = scmp.lt.s32.totalorder %s598, 3
      %s600 = scalar_select %p599, %s598, 3
      %s601 = smul.addr %s600, 4
      %s602 = scalar_lea.vmem %s16, %s601
      %p603 = pneg %p442
      %p604 = pneg %p439
      %s605 = smul.u32 2, %s29
      %p606 = scmp.lt.s32.totalorder %s605, 3
      %s607 = scalar_select %p606, %s605, 3
      %s608 = smul.addr %s607, 4
      %s609 = scalar_lea.vmem %s17, %s608
      %s610 = smul.u32 2, %s29
      %p611 = scmp.lt.s32.totalorder %s610, 3
      %s612 = scalar_select %p611, %s610, 3
      %s613 = smul.addr %s612, 4
      %s614 = scalar_lea.vmem %s0, %s613
      %s615 = smul.u32 2, %s29
      %s616 = smul.u32 2, %s29
      %p617 = scmp.lt.s32.totalorder %s616, 3
      %s618 = scalar_select %p617, %s616, 3
      %s619 = smul.addr %s618, 4
      %s620 = scalar_lea.vmem %s1, %s619
      %s621 = smul.u32 2, %s29
      %s622 = smul.u32 2, %s29
      %p623 = scmp.lt.s32.totalorder %s622, 3
      %s624 = scalar_select %p623, %s622, 3
      %s625 = smul.addr %s624, 4
      %s626 = scalar_lea.vmem %s2, %s625
      %s627 = smul.u32 2, %s29
      %s628 = smul.u32 2, %s29
      %p629 = scmp.lt.s32.totalorder %s628, 3
      %s630 = scalar_select %p629, %s628, 3
      %s631 = smul.addr %s630, 4
      %s632 = scalar_lea.vmem %s3, %s631
      %s633 = smul.u32 2, %s29
      %s634 = smul.u32 2, %s29
      %p635 = scmp.lt.s32.totalorder %s634, 3
      %s636 = scalar_select %p635, %s634, 3
      %s637 = smul.addr %s636, 4
      %s638 = scalar_lea.vmem %s14, %s637
      %s639 = smul.u32 2, %s29
      %s640 = smul.u32 2, %s29
      %p641 = scmp.lt.s32.totalorder %s640, 3
      %s642 = scalar_select %p641, %s640, 3
      %s643 = smul.addr %s642, 4
      %s644 = scalar_lea.vmem %s15, %s643
      %s645 = smul.u32 2, %s29
      %s646 = smul.u32 2, %s29
      %p647 = scmp.lt.s32.totalorder %s646, 3
      %s648 = scalar_select %p647, %s646, 3
      %s649 = smul.addr %s648, 4
      %s650 = scalar_lea.vmem %s16, %s649
      %s651 = smul.u32 2, %s29
      %s652 = smul.u32 2, %s29
      %p653 = scmp.lt.s32.totalorder %s652, 3
      %s654 = scalar_select %p653, %s652, 3
      %s655 = smul.addr %s654, 4
      %s656 = scalar_lea.vmem %s17, %s655
      %s657 = smul.u32 2, %s29
      %v659 = vld [vmem:[%s614] sm:$0xff]
      %v660 = vld [vmem:[%s620] sm:$0xff]
      %v661 = vld [vmem:[%s626] sm:$0xff]
      %v662 = vld [vmem:[%s632] sm:$0xff]
      %v663 = vadd.f32 %v659, %v662
      %v664 = vadd.f32 %v660, %v661
      %v665 = vsub.f32 %v662, %v659
      %v666 = vsub.f32 %v660, %v661
      %v667 = vadd.f32 %v663, %v664
      %v668 = vmul.f32 %v667, 0.5
      %v669 = vadd.f32 %v665, %v666
      %v670 = vmul.f32 %v669, 0.5
      %v671 = vsub.f32 %v665, %v666
      %v672 = vmul.f32 %v671, 0.5
      %v673 = vsub.f32 %v663, %v664
      %v674 = vmul.f32 %v673, 0.5
      %675 = vst [vmem:[%s638] sm:$0xff] %v668
      %677 = vst [vmem:[#allocation1] ss:$2 sm:$0xff] %v670
      %v678 = vld.sshfl [vmem:[#allocation1] sm:$0xff pattern:$0x75316420]
      %v679 = vld.sshfl [vmem:[#allocation1 + $0x8] sm:$0xff pattern:$0x75316420]
      %683 = vst [vmem:[#allocation1] ss:$2 sm:$0xff] %v672
      %v684 = vld.sshfl [vmem:[#allocation1] sm:$0xff pattern:$0x75316420]
      %v685 = vld.sshfl [vmem:[#allocation1 + $0x8] sm:$0xff pattern:$0x75316420]
      %689 = vst [vmem:[#allocation1] ss:$2 sm:$0xff] %v674
      %v690 = vld.sshfl [vmem:[#allocation1] sm:$0xff pattern:$0x75316420]
      %v691 = vld.sshfl [vmem:[#allocation1 + $0x8] sm:$0xff pattern:$0x75316420]
      %v694 = vand.u32 2147483647, %v678
      %v695 = vand.u32 2147483647, %v679
      %v696 = vand.u32 2147483647, %v684
      %v697 = vand.u32 2147483647, %v685
      %v698 = vand.u32 2147483647, %v690
      %v699 = vand.u32 2147483647, %v691
      %v700 = vpack.c.bf16 %v694, %v694
      %v701 = vpack.c.bf16 %v695, %v695
      %v702 = vpack.c.bf16 %v696, %v696
      %v703 = vpack.c.bf16 %v697, %v697
      %v704 = vpack.c.bf16 %v698, %v698
      %v705 = vpack.c.bf16 %v699, %v699
      %v706 = vld [vmem:[%s4] sm:$0x3]
      %v707 = vld [vmem:[%s5] sm:$0xf]
      %709 = vset.pattern.permute.xlu0 0
      %710 = vperm.xlu0 %709, %v707
      %v711 = vpop.permute.xlu0 %710
      %vm713 = vcmask 31744
      %v715 = vsel %vm713, %v706, 0
      %vm717 = vcmask 1041408
      %v719 = vsel %vm717, %v700, 0
      %v722 = vsel %vm717, %v701, 0
      %v725 = vsel %vm717, %v702, 0
      %v728 = vsel %vm717, %v703, 0
      %v731 = vsel %vm717, %v704, 0
      %v734 = vsel %vm717, %v705, 0
      %736 = vmatpush.bf16.msra.mxu0 0
      %737 = vmatpush.bf16.msra.mxu0 0
      %738 = vmatpush.bf16.msra.mxu0 0
      %739 = vmatpush.bf16.msra.mxu0 0
      %740 = vmatpush.bf16.msra.mxu0 0
      %741 = vmatpush.bf16.msra.mxu0 0
      %742 = vmatpush.bf16.msra.mxu0 0
      %743 = vmatpush.bf16.msra.mxu0 %v719
      %744 = vmatmul.bf16.gmra.mxu0 %v715
      %v745 = vpop.f32.mrf.mxu0
      %v746 = vadd.f32 %v711, %v745
      %v747 = vpop.f32.mrf.mxu0
      %748 = vdwg.mxu0
      %749 = vmatpush.bf16.msra.mxu0 0
      %750 = vmatpush.bf16.msra.mxu0 0
      %751 = vmatpush.bf16.msra.mxu0 0
      %752 = vmatpush.bf16.msra.mxu0 0
      %753 = vmatpush.bf16.msra.mxu0 0
      %754 = vmatpush.bf16.msra.mxu0 0
      %755 = vmatpush.bf16.msra.mxu0 0
      %756 = vmatpush.bf16.msra.mxu0 %v722
      %757 = vmatmul.bf16.gmra.mxu0 %v715
      %v758 = vpop.f32.mrf.mxu0
      %v759 = vadd.f32 %v711, %v758
      %v760 = vpop.f32.mrf.mxu0
      %761 = vdwg.mxu0
      %762 = vmatpush.bf16.msra.mxu0 0
      %763 = vmatpush.bf16.msra.mxu0 0
      %764 = vmatpush.bf16.msra.mxu0 0
      %765 = vmatpush.bf16.msra.mxu0 0
      %766 = vmatpush.bf16.msra.mxu0 0
      %767 = vmatpush.bf16.msra.mxu0 0
      %768 = vmatpush.bf16.msra.mxu0 0
      %769 = vmatpush.bf16.msra.mxu0 %v725
      %770 = vmatmul.bf16.gmra.mxu0 %v715
      %v771 = vpop.f32.mrf.mxu0
      %v772 = vadd.f32 %v711, %v771
      %v773 = vpop.f32.mrf.mxu0
      %774 = vdwg.mxu0
      %775 = vmatpush.bf16.msra.mxu0 0
      %776 = vmatpush.bf16.msra.mxu0 0
      %777 = vmatpush.bf16.msra.mxu0 0
      %778 = vmatpush.bf16.msra.mxu0 0
      %779 = vmatpush.bf16.msra.mxu0 0
      %780 = vmatpush.bf16.msra.mxu0 0
      %781 = vmatpush.bf16.msra.mxu0 0
      %782 = vmatpush.bf16.msra.mxu0 %v728
      %783 = vmatmul.bf16.gmra.mxu0 %v715
      %v784 = vpop.f32.mrf.mxu0
      %v785 = vadd.f32 %v711, %v784
      %v786 = vpop.f32.mrf.mxu0
      %787 = vdwg.mxu0
      %788 = vmatpush.bf16.msra.mxu0 0
      %789 = vmatpush.bf16.msra.mxu0 0
      %790 = vmatpush.bf16.msra.mxu0 0
      %791 = vmatpush.bf16.msra.mxu0 0
      %792 = vmatpush.bf16.msra.mxu0 0
      %793 = vmatpush.bf16.msra.mxu0 0
      %794 = vmatpush.bf16.msra.mxu0 0
      %795 = vmatpush.bf16.msra.mxu0 %v731
      %796 = vmatmul.bf16.gmra.mxu0 %v715
      %v797 = vpop.f32.mrf.mxu0
      %v798 = vadd.f32 %v711, %v797
      %v799 = vpop.f32.mrf.mxu0
      %800 = vdwg.mxu0
      %801 = vmatpush.bf16.msra.mxu0 0
      %802 = vmatpush.bf16.msra.mxu0 0
      %803 = vmatpush.bf16.msra.mxu0 0
      %804 = vmatpush.bf16.msra.mxu0 0
      %805 = vmatpush.bf16.msra.mxu0 0
      %806 = vmatpush.bf16.msra.mxu0 0
      %807 = vmatpush.bf16.msra.mxu0 0
      %808 = vmatpush.bf16.msra.mxu0 %v734
      %809 = vmatmul.bf16.gmra.mxu0 %v715
      %v810 = vpop.f32.mrf.mxu0
      %v811 = vadd.f32 %v711, %v810
      %v812 = vpop.f32.mrf.mxu0
      %813 = vdwg.mxu0
      %v814 = vmax.f32 %v746, 0.0
      %v815 = vmax.f32 %v759, 0.0
      %v816 = vmax.f32 %v772, 0.0
      %v817 = vmax.f32 %v785, 0.0
      %v818 = vmax.f32 %v798, 0.0
      %v819 = vmax.f32 %v811, 0.0
      %v820 = vld [vmem:[%s6] sm:$0x3]
      %v821 = vpack.c.bf16 %v814, %v814
      %v822 = vpack.c.bf16 %v815, %v815
      %v823 = vpack.c.bf16 %v816, %v816
      %v824 = vpack.c.bf16 %v817, %v817
      %v825 = vpack.c.bf16 %v818, %v818
      %v826 = vpack.c.bf16 %v819, %v819
      %v827 = vld [vmem:[%s7] sm:$0x3]
      %v829 = vsel %vm713, %v827, 0
      %831 = vmatpush.bf16.msra.mxu0 0
      %832 = vmatpush.bf16.msra.mxu0 0
      %833 = vmatpush.bf16.msra.mxu0 0
      %834 = vmatpush.bf16.msra.mxu0 0
      %835 = vmatpush.bf16.msra.mxu0 0
      %836 = vmatpush.bf16.msra.mxu0 0
      %837 = vmatpush.bf16.msra.mxu0 0
      %838 = vmatpush.bf16.msra.mxu0 %v719
      %839 = vmatmul.bf16.gmra.mxu0 %v829
      %v840 = vpop.f32.mrf.mxu0
      %v841 = vadd.f32 0.0, %v840
      %v842 = vpop.f32.mrf.mxu0
      %843 = vdwg.mxu0
      %844 = vmatpush.bf16.msra.mxu0 0
      %845 = vmatpush.bf16.msra.mxu0 0
      %846 = vmatpush.bf16.msra.mxu0 0
      %847 = vmatpush.bf16.msra.mxu0 0
      %848 = vmatpush.bf16.msra.mxu0 0
      %849 = vmatpush.bf16.msra.mxu0 0
      %850 = vmatpush.bf16.msra.mxu0 0
      %851 = vmatpush.bf16.msra.mxu0 %v722
      %852 = vmatmul.bf16.gmra.mxu0 %v829
      %v853 = vpop.f32.mrf.mxu0
      %v854 = vadd.f32 0.0, %v853
      %v855 = vpop.f32.mrf.mxu0
      %856 = vdwg.mxu0
      %857 = vmatpush.bf16.msra.mxu0 0
      %858 = vmatpush.bf16.msra.mxu0 0
      %859 = vmatpush.bf16.msra.mxu0 0
      %860 = vmatpush.bf16.msra.mxu0 0
      %861 = vmatpush.bf16.msra.mxu0 0
      %862 = vmatpush.bf16.msra.mxu0 0
      %863 = vmatpush.bf16.msra.mxu0 0
      %864 = vmatpush.bf16.msra.mxu0 %v725
      %865 = vmatmul.bf16.gmra.mxu0 %v829
      %v866 = vpop.f32.mrf.mxu0
      %v867 = vadd.f32 0.0, %v866
      %v868 = vpop.f32.mrf.mxu0
      %869 = vdwg.mxu0
      %870 = vmatpush.bf16.msra.mxu0 0
      %871 = vmatpush.bf16.msra.mxu0 0
      %872 = vmatpush.bf16.msra.mxu0 0
      %873 = vmatpush.bf16.msra.mxu0 0
      %874 = vmatpush.bf16.msra.mxu0 0
      %875 = vmatpush.bf16.msra.mxu0 0
      %876 = vmatpush.bf16.msra.mxu0 0
      %877 = vmatpush.bf16.msra.mxu0 %v728
      %878 = vmatmul.bf16.gmra.mxu0 %v829
      %v879 = vpop.f32.mrf.mxu0
      %v880 = vadd.f32 0.0, %v879
      %v881 = vpop.f32.mrf.mxu0
      %882 = vdwg.mxu0
      %883 = vmatpush.bf16.msra.mxu0 0
      %884 = vmatpush.bf16.msra.mxu0 0
      %885 = vmatpush.bf16.msra.mxu0 0
      %886 = vmatpush.bf16.msra.mxu0 0
      %887 = vmatpush.bf16.msra.mxu0 0
      %888 = vmatpush.bf16.msra.mxu0 0
      %889 = vmatpush.bf16.msra.mxu0 0
      %890 = vmatpush.bf16.msra.mxu0 %v731
      %891 = vmatmul.bf16.gmra.mxu0 %v829
      %v892 = vpop.f32.mrf.mxu0
      %v893 = vadd.f32 0.0, %v892
      %v894 = vpop.f32.mrf.mxu0
      %895 = vdwg.mxu0
      %896 = vmatpush.bf16.msra.mxu0 0
      %897 = vmatpush.bf16.msra.mxu0 0
      %898 = vmatpush.bf16.msra.mxu0 0
      %899 = vmatpush.bf16.msra.mxu0 0
      %900 = vmatpush.bf16.msra.mxu0 0
      %901 = vmatpush.bf16.msra.mxu0 0
      %902 = vmatpush.bf16.msra.mxu0 0
      %903 = vmatpush.bf16.msra.mxu0 %v734
      %904 = vmatmul.bf16.gmra.mxu0 %v829
      %v905 = vpop.f32.mrf.mxu0
      %v906 = vadd.f32 0.0, %v905
      %v907 = vpop.f32.mrf.mxu0
      %908 = vdwg.mxu0
      %v910 = vsel %vm713, %v820, 0
      %v913 = vsel %vm717, %v821, 0
      %v916 = vsel %vm717, %v822, 0
      %v919 = vsel %vm717, %v823, 0
      %v922 = vsel %vm717, %v824, 0
      %v925 = vsel %vm717, %v825, 0
      %v928 = vsel %vm717, %v826, 0
      %930 = vmatpush.bf16.msra.mxu0 0
      %931 = vmatpush.bf16.msra.mxu0 0
      %932 = vmatpush.bf16.msra.mxu0 0
      %933 = vmatpush.bf16.msra.mxu0 0
      %934 = vmatpush.bf16.msra.mxu0 0
      %935 = vmatpush.bf16.msra.mxu0 0
      %936 = vmatpush.bf16.msra.mxu0 0
      %937 = vmatpush.bf16.msra.mxu0 %v913
      %938 = vmatmul.bf16.gmra.mxu0 %v910
      %v939 = vpop.f32.mrf.mxu0
      %v940 = vadd.f32 %v841, %v939
      %v941 = vpop.f32.mrf.mxu0
      %942 = vdwg.mxu0
      %943 = vmatpush.bf16.msra.mxu0 0
      %944 = vmatpush.bf16.msra.mxu0 0
      %945 = vmatpush.bf16.msra.mxu0 0
      %946 = vmatpush.bf16.msra.mxu0 0
      %947 = vmatpush.bf16.msra.mxu0 0
      %948 = vmatpush.bf16.msra.mxu0 0
      %949 = vmatpush.bf16.msra.mxu0 0
      %950 = vmatpush.bf16.msra.mxu0 %v916
      %951 = vmatmul.bf16.gmra.mxu0 %v910
      %v952 = vpop.f32.mrf.mxu0
      %v953 = vadd.f32 %v854, %v952
      %v954 = vpop.f32.mrf.mxu0
      %955 = vdwg.mxu0
      %956 = vmatpush.bf16.msra.mxu0 0
      %957 = vmatpush.bf16.msra.mxu0 0
      %958 = vmatpush.bf16.msra.mxu0 0
      %959 = vmatpush.bf16.msra.mxu0 0
      %960 = vmatpush.bf16.msra.mxu0 0
      %961 = vmatpush.bf16.msra.mxu0 0
      %962 = vmatpush.bf16.msra.mxu0 0
      %963 = vmatpush.bf16.msra.mxu0 %v919
      %964 = vmatmul.bf16.gmra.mxu0 %v910
      %v965 = vpop.f32.mrf.mxu0
      %v966 = vadd.f32 %v867, %v965
      %v967 = vpop.f32.mrf.mxu0
      %968 = vdwg.mxu0
      %969 = vmatpush.bf16.msra.mxu0 0
      %970 = vmatpush.bf16.msra.mxu0 0
      %971 = vmatpush.bf16.msra.mxu0 0
      %972 = vmatpush.bf16.msra.mxu0 0
      %973 = vmatpush.bf16.msra.mxu0 0
      %974 = vmatpush.bf16.msra.mxu0 0
      %975 = vmatpush.bf16.msra.mxu0 0
      %976 = vmatpush.bf16.msra.mxu0 %v922
      %977 = vmatmul.bf16.gmra.mxu0 %v910
      %v978 = vpop.f32.mrf.mxu0
      %v979 = vadd.f32 %v880, %v978
      %v980 = vpop.f32.mrf.mxu0
      %981 = vdwg.mxu0
      %982 = vmatpush.bf16.msra.mxu0 0
      %983 = vmatpush.bf16.msra.mxu0 0
      %984 = vmatpush.bf16.msra.mxu0 0
      %985 = vmatpush.bf16.msra.mxu0 0
      %986 = vmatpush.bf16.msra.mxu0 0
      %987 = vmatpush.bf16.msra.mxu0 0
      %988 = vmatpush.bf16.msra.mxu0 0
      %989 = vmatpush.bf16.msra.mxu0 %v925
      %990 = vmatmul.bf16.gmra.mxu0 %v910
      %v991 = vpop.f32.mrf.mxu0
      %v992 = vadd.f32 %v893, %v991
      %v993 = vpop.f32.mrf.mxu0
      %994 = vdwg.mxu0
      %995 = vmatpush.bf16.msra.mxu0 0
      %996 = vmatpush.bf16.msra.mxu0 0
      %997 = vmatpush.bf16.msra.mxu0 0
      %998 = vmatpush.bf16.msra.mxu0 0
      %999 = vmatpush.bf16.msra.mxu0 0
      %1000 = vmatpush.bf16.msra.mxu0 0
      %1001 = vmatpush.bf16.msra.mxu0 0
      %1002 = vmatpush.bf16.msra.mxu0 %v928
      %1003 = vmatmul.bf16.gmra.mxu0 %v910
      %v1004 = vpop.f32.mrf.mxu0
      %v1005 = vadd.f32 %v906, %v1004
      %v1006 = vpop.f32.mrf.mxu0
      %1007 = vdwg.mxu0
      %v1008 = vld [vmem:[%s8] sm:$0xf]
      %1010 = vset.pattern.permute.xlu0 0
      %1011 = vperm.xlu0 %1010, %v1008
      %v1012 = vpop.permute.xlu0 %1011
      %v1014 = vadd.f32 %v940, %v1012
      %v1015 = vadd.f32 %v953, %v1012
      %v1016 = vadd.f32 %v966, %v1012
      %v1017 = vadd.f32 %v979, %v1012
      %v1018 = vadd.f32 %v992, %v1012
      %v1019 = vadd.f32 %v1005, %v1012
      %v1020 = vmax.f32 %v1014, 0.0
      %v1021 = vmax.f32 %v1015, 0.0
      %v1022 = vmax.f32 %v1016, 0.0
      %v1023 = vmax.f32 %v1017, 0.0
      %v1024 = vmax.f32 %v1018, 0.0
      %v1025 = vmax.f32 %v1019, 0.0
      %v1026 = vpack.c.bf16 %v1020, %v1020
      %v1027 = vpack.c.bf16 %v1021, %v1021
      %v1028 = vpack.c.bf16 %v1022, %v1022
      %v1029 = vpack.c.bf16 %v1023, %v1023
      %v1030 = vpack.c.bf16 %v1024, %v1024
      %v1031 = vpack.c.bf16 %v1025, %v1025
      %v1032 = vld [vmem:[%s9] sm:$0x3]
      %v1033 = vld [vmem:[%s10] sm:$0xf]
      %1035 = vset.pattern.permute.xlu0 0
      %1036 = vperm.xlu0 %1035, %v1033
      %v1037 = vpop.permute.xlu0 %1036
      %v1040 = vsel %vm713, %v1032, 0
      %v1043 = vsel %vm717, %v1026, 0
      %v1046 = vsel %vm717, %v1027, 0
      %v1049 = vsel %vm717, %v1028, 0
      %v1052 = vsel %vm717, %v1029, 0
      %v1055 = vsel %vm717, %v1030, 0
      %v1058 = vsel %vm717, %v1031, 0
      %1060 = vmatpush.bf16.msra.mxu0 0
      %1061 = vmatpush.bf16.msra.mxu0 0
      %1062 = vmatpush.bf16.msra.mxu0 0
      %1063 = vmatpush.bf16.msra.mxu0 0
      %1064 = vmatpush.bf16.msra.mxu0 0
      %1065 = vmatpush.bf16.msra.mxu0 0
      %1066 = vmatpush.bf16.msra.mxu0 0
      %1067 = vmatpush.bf16.msra.mxu0 %v1043
      %1068 = vmatmul.bf16.gmra.mxu0 %v1040
      %v1069 = vpop.f32.mrf.mxu0
      %v1070 = vadd.f32 %v1037, %v1069
      %v1071 = vpop.f32.mrf.mxu0
      %1072 = vdwg.mxu0
      %1073 = vmatpush.bf16.msra.mxu0 0
      %1074 = vmatpush.bf16.msra.mxu0 0
      %1075 = vmatpush.bf16.msra.mxu0 0
      %1076 = vmatpush.bf16.msra.mxu0 0
      %1077 = vmatpush.bf16.msra.mxu0 0
      %1078 = vmatpush.bf16.msra.mxu0 0
      %1079 = vmatpush.bf16.msra.mxu0 0
      %1080 = vmatpush.bf16.msra.mxu0 %v1046
      %1081 = vmatmul.bf16.gmra.mxu0 %v1040
      %v1082 = vpop.f32.mrf.mxu0
      %v1083 = vadd.f32 %v1037, %v1082
      %v1084 = vpop.f32.mrf.mxu0
      %1085 = vdwg.mxu0
      %1086 = vmatpush.bf16.msra.mxu0 0
      %1087 = vmatpush.bf16.msra.mxu0 0
      %1088 = vmatpush.bf16.msra.mxu0 0
      %1089 = vmatpush.bf16.msra.mxu0 0
      %1090 = vmatpush.bf16.msra.mxu0 0
      %1091 = vmatpush.bf16.msra.mxu0 0
      %1092 = vmatpush.bf16.msra.mxu0 0
      %1093 = vmatpush.bf16.msra.mxu0 %v1049
      %1094 = vmatmul.bf16.gmra.mxu0 %v1040
      %v1095 = vpop.f32.mrf.mxu0
      %v1096 = vadd.f32 %v1037, %v1095
      %v1097 = vpop.f32.mrf.mxu0
      %1098 = vdwg.mxu0
      %1099 = vmatpush.bf16.msra.mxu0 0
      %1100 = vmatpush.bf16.msra.mxu0 0
      %1101 = vmatpush.bf16.msra.mxu0 0
      %1102 = vmatpush.bf16.msra.mxu0 0
      %1103 = vmatpush.bf16.msra.mxu0 0
      %1104 = vmatpush.bf16.msra.mxu0 0
      %1105 = vmatpush.bf16.msra.mxu0 0
      %1106 = vmatpush.bf16.msra.mxu0 %v1052
      %1107 = vmatmul.bf16.gmra.mxu0 %v1040
      %v1108 = vpop.f32.mrf.mxu0
      %v1109 = vadd.f32 %v1037, %v1108
      %v1110 = vpop.f32.mrf.mxu0
      %1111 = vdwg.mxu0
      %1112 = vmatpush.bf16.msra.mxu0 0
      %1113 = vmatpush.bf16.msra.mxu0 0
      %1114 = vmatpush.bf16.msra.mxu0 0
      %1115 = vmatpush.bf16.msra.mxu0 0
      %1116 = vmatpush.bf16.msra.mxu0 0
      %1117 = vmatpush.bf16.msra.mxu0 0
      %1118 = vmatpush.bf16.msra.mxu0 0
      %1119 = vmatpush.bf16.msra.mxu0 %v1055
      %1120 = vmatmul.bf16.gmra.mxu0 %v1040
      %v1121 = vpop.f32.mrf.mxu0
      %v1122 = vadd.f32 %v1037, %v1121
      %v1123 = vpop.f32.mrf.mxu0
      %1124 = vdwg.mxu0
      %1125 = vmatpush.bf16.msra.mxu0 0
      %1126 = vmatpush.bf16.msra.mxu0 0
      %1127 = vmatpush.bf16.msra.mxu0 0
      %1128 = vmatpush.bf16.msra.mxu0 0
      %1129 = vmatpush.bf16.msra.mxu0 0
      %1130 = vmatpush.bf16.msra.mxu0 0
      %1131 = vmatpush.bf16.msra.mxu0 0
      %1132 = vmatpush.bf16.msra.mxu0 %v1058
      %1133 = vmatmul.bf16.gmra.mxu0 %v1040
      %v1134 = vpop.f32.mrf.mxu0
      %v1135 = vadd.f32 %v1037, %v1134
      %v1136 = vpop.f32.mrf.mxu0
      %1137 = vdwg.mxu0
      %v1138 = vmax.f32 %v1070, 0.0
      %v1139 = vmax.f32 %v1083, 0.0
      %v1140 = vmax.f32 %v1096, 0.0
      %v1141 = vmax.f32 %v1109, 0.0
      %v1142 = vmax.f32 %v1122, 0.0
      %v1143 = vmax.f32 %v1135, 0.0
      %v1144 = vld [vmem:[%s11] sm:$0x3]
      %v1145 = vpack.c.bf16 %v1138, %v1138
      %v1146 = vpack.c.bf16 %v1139, %v1139
      %v1147 = vpack.c.bf16 %v1140, %v1140
      %v1148 = vpack.c.bf16 %v1141, %v1141
      %v1149 = vpack.c.bf16 %v1142, %v1142
      %v1150 = vpack.c.bf16 %v1143, %v1143
      %v1151 = vld [vmem:[%s12] sm:$0x3]
      %v1153 = vsel %vm713, %v1151, 0
      %1155 = vmatpush.bf16.msra.mxu0 0
      %1156 = vmatpush.bf16.msra.mxu0 0
      %1157 = vmatpush.bf16.msra.mxu0 0
      %1158 = vmatpush.bf16.msra.mxu0 0
      %1159 = vmatpush.bf16.msra.mxu0 0
      %1160 = vmatpush.bf16.msra.mxu0 0
      %1161 = vmatpush.bf16.msra.mxu0 0
      %1162 = vmatpush.bf16.msra.mxu0 %v1043
      %1163 = vmatmul.bf16.gmra.mxu0 %v1153
      %v1164 = vpop.f32.mrf.mxu0
      %v1165 = vadd.f32 0.0, %v1164
      %v1166 = vpop.f32.mrf.mxu0
      %1167 = vdwg.mxu0
      %1168 = vmatpush.bf16.msra.mxu0 0
      %1169 = vmatpush.bf16.msra.mxu0 0
      %1170 = vmatpush.bf16.msra.mxu0 0
      %1171 = vmatpush.bf16.msra.mxu0 0
      %1172 = vmatpush.bf16.msra.mxu0 0
      %1173 = vmatpush.bf16.msra.mxu0 0
      %1174 = vmatpush.bf16.msra.mxu0 0
      %1175 = vmatpush.bf16.msra.mxu0 %v1046
      %1176 = vmatmul.bf16.gmra.mxu0 %v1153
      %v1177 = vpop.f32.mrf.mxu0
      %v1178 = vadd.f32 0.0, %v1177
      %v1179 = vpop.f32.mrf.mxu0
      %1180 = vdwg.mxu0
      %1181 = vmatpush.bf16.msra.mxu0 0
      %1182 = vmatpush.bf16.msra.mxu0 0
      %1183 = vmatpush.bf16.msra.mxu0 0
      %1184 = vmatpush.bf16.msra.mxu0 0
      %1185 = vmatpush.bf16.msra.mxu0 0
      %1186 = vmatpush.bf16.msra.mxu0 0
      %1187 = vmatpush.bf16.msra.mxu0 0
      %1188 = vmatpush.bf16.msra.mxu0 %v1049
      %1189 = vmatmul.bf16.gmra.mxu0 %v1153
      %v1190 = vpop.f32.mrf.mxu0
      %v1191 = vadd.f32 0.0, %v1190
      %v1192 = vpop.f32.mrf.mxu0
      %1193 = vdwg.mxu0
      %1194 = vmatpush.bf16.msra.mxu0 0
      %1195 = vmatpush.bf16.msra.mxu0 0
      %1196 = vmatpush.bf16.msra.mxu0 0
      %1197 = vmatpush.bf16.msra.mxu0 0
      %1198 = vmatpush.bf16.msra.mxu0 0
      %1199 = vmatpush.bf16.msra.mxu0 0
      %1200 = vmatpush.bf16.msra.mxu0 0
      %1201 = vmatpush.bf16.msra.mxu0 %v1052
      %1202 = vmatmul.bf16.gmra.mxu0 %v1153
      %v1203 = vpop.f32.mrf.mxu0
      %v1204 = vadd.f32 0.0, %v1203
      %v1205 = vpop.f32.mrf.mxu0
      %1206 = vdwg.mxu0
      %1207 = vmatpush.bf16.msra.mxu0 0
      %1208 = vmatpush.bf16.msra.mxu0 0
      %1209 = vmatpush.bf16.msra.mxu0 0
      %1210 = vmatpush.bf16.msra.mxu0 0
      %1211 = vmatpush.bf16.msra.mxu0 0
      %1212 = vmatpush.bf16.msra.mxu0 0
      %1213 = vmatpush.bf16.msra.mxu0 0
      %1214 = vmatpush.bf16.msra.mxu0 %v1055
      %1215 = vmatmul.bf16.gmra.mxu0 %v1153
      %v1216 = vpop.f32.mrf.mxu0
      %v1217 = vadd.f32 0.0, %v1216
      %v1218 = vpop.f32.mrf.mxu0
      %1219 = vdwg.mxu0
      %1220 = vmatpush.bf16.msra.mxu0 0
      %1221 = vmatpush.bf16.msra.mxu0 0
      %1222 = vmatpush.bf16.msra.mxu0 0
      %1223 = vmatpush.bf16.msra.mxu0 0
      %1224 = vmatpush.bf16.msra.mxu0 0
      %1225 = vmatpush.bf16.msra.mxu0 0
      %1226 = vmatpush.bf16.msra.mxu0 0
      %1227 = vmatpush.bf16.msra.mxu0 %v1058
      %1228 = vmatmul.bf16.gmra.mxu0 %v1153
      %v1229 = vpop.f32.mrf.mxu0
      %v1230 = vadd.f32 0.0, %v1229
      %v1231 = vpop.f32.mrf.mxu0
      %1232 = vdwg.mxu0
      %v1234 = vsel %vm713, %v1144, 0
      %v1237 = vsel %vm717, %v1145, 0
      %v1240 = vsel %vm717, %v1146, 0
      %v1243 = vsel %vm717, %v1147, 0
      %v1246 = vsel %vm717, %v1148, 0
      %v1249 = vsel %vm717, %v1149, 0
      %v1252 = vsel %vm717, %v1150, 0
      %1254 = vmatpush.bf16.msra.mxu0 0
      %1255 = vmatpush.bf16.msra.mxu0 0
      %1256 = vmatpush.bf16.msra.mxu0 0
      %1257 = vmatpush.bf16.msra.mxu0 0
      %1258 = vmatpush.bf16.msra.mxu0 0
      %1259 = vmatpush.bf16.msra.mxu0 0
      %1260 = vmatpush.bf16.msra.mxu0 0
      %1261 = vmatpush.bf16.msra.mxu0 %v1237
      %1262 = vmatmul.bf16.gmra.mxu0 %v1234
      %v1263 = vpop.f32.mrf.mxu0
      %v1264 = vadd.f32 %v1165, %v1263
      %v1265 = vpop.f32.mrf.mxu0
      %1266 = vdwg.mxu0
      %1267 = vmatpush.bf16.msra.mxu0 0
      %1268 = vmatpush.bf16.msra.mxu0 0
      %1269 = vmatpush.bf16.msra.mxu0 0
      %1270 = vmatpush.bf16.msra.mxu0 0
      %1271 = vmatpush.bf16.msra.mxu0 0
      %1272 = vmatpush.bf16.msra.mxu0 0
      %1273 = vmatpush.bf16.msra.mxu0 0
      %1274 = vmatpush.bf16.msra.mxu0 %v1240
      %1275 = vmatmul.bf16.gmra.mxu0 %v1234
      %v1276 = vpop.f32.mrf.mxu0
      %v1277 = vadd.f32 %v1178, %v1276
      %v1278 = vpop.f32.mrf.mxu0
      %1279 = vdwg.mxu0
      %1280 = vmatpush.bf16.msra.mxu0 0
      %1281 = vmatpush.bf16.msra.mxu0 0
      %1282 = vmatpush.bf16.msra.mxu0 0
      %1283 = vmatpush.bf16.msra.mxu0 0
      %1284 = vmatpush.bf16.msra.mxu0 0
      %1285 = vmatpush.bf16.msra.mxu0 0
      %1286 = vmatpush.bf16.msra.mxu0 0
      %1287 = vmatpush.bf16.msra.mxu0 %v1243
      %1288 = vmatmul.bf16.gmra.mxu0 %v1234
      %v1289 = vpop.f32.mrf.mxu0
      %v1290 = vadd.f32 %v1191, %v1289
      %v1291 = vpop.f32.mrf.mxu0
      %1292 = vdwg.mxu0
      %1293 = vmatpush.bf16.msra.mxu0 0
      %1294 = vmatpush.bf16.msra.mxu0 0
      %1295 = vmatpush.bf16.msra.mxu0 0
      %1296 = vmatpush.bf16.msra.mxu0 0
      %1297 = vmatpush.bf16.msra.mxu0 0
      %1298 = vmatpush.bf16.msra.mxu0 0
      %1299 = vmatpush.bf16.msra.mxu0 0
      %1300 = vmatpush.bf16.msra.mxu0 %v1246
      %1301 = vmatmul.bf16.gmra.mxu0 %v1234
      %v1302 = vpop.f32.mrf.mxu0
      %v1303 = vadd.f32 %v1204, %v1302
      %v1304 = vpop.f32.mrf.mxu0
      %1305 = vdwg.mxu0
      %1306 = vmatpush.bf16.msra.mxu0 0
      %1307 = vmatpush.bf16.msra.mxu0 0
      %1308 = vmatpush.bf16.msra.mxu0 0
      %1309 = vmatpush.bf16.msra.mxu0 0
      %1310 = vmatpush.bf16.msra.mxu0 0
      %1311 = vmatpush.bf16.msra.mxu0 0
      %1312 = vmatpush.bf16.msra.mxu0 0
      %1313 = vmatpush.bf16.msra.mxu0 %v1249
      %1314 = vmatmul.bf16.gmra.mxu0 %v1234
      %v1315 = vpop.f32.mrf.mxu0
      %v1316 = vadd.f32 %v1217, %v1315
      %v1317 = vpop.f32.mrf.mxu0
      %1318 = vdwg.mxu0
      %1319 = vmatpush.bf16.msra.mxu0 0
      %1320 = vmatpush.bf16.msra.mxu0 0
      %1321 = vmatpush.bf16.msra.mxu0 0
      %1322 = vmatpush.bf16.msra.mxu0 0
      %1323 = vmatpush.bf16.msra.mxu0 0
      %1324 = vmatpush.bf16.msra.mxu0 0
      %1325 = vmatpush.bf16.msra.mxu0 0
      %1326 = vmatpush.bf16.msra.mxu0 %v1252
      %1327 = vmatmul.bf16.gmra.mxu0 %v1234
      %v1328 = vpop.f32.mrf.mxu0
      %v1329 = vadd.f32 %v1230, %v1328
      %v1330 = vpop.f32.mrf.mxu0
      %1331 = vdwg.mxu0
      %v1332 = vld [vmem:[%s13] sm:$0xf]
      %1334 = vset.pattern.permute.xlu0 0
      %1335 = vperm.xlu0 %1334, %v1332
      %v1336 = vpop.permute.xlu0 %1335
      %v1338 = vadd.f32 %v1264, %v1336
      %v1339 = vadd.f32 %v1277, %v1336
      %v1340 = vadd.f32 %v1290, %v1336
      %v1341 = vadd.f32 %v1303, %v1336
      %v1342 = vadd.f32 %v1316, %v1336
      %v1343 = vadd.f32 %v1329, %v1336
      %v1344 = vmul.f32 %v1338, 0.5
      %v1345 = vmul.f32 %v1339, 0.5
      %v1346 = vmul.f32 %v1340, 0.5
      %v1347 = vmul.f32 %v1341, 0.5
      %v1348 = vmul.f32 %v1342, 0.5
      %v1349 = vmul.f32 %v1343, 0.5
      %v1350 = vtanh.pop %v1344
      %v1351 = vtanh.pop %v1345
      %v1352 = vtanh.pop %v1346
      %v1353 = vtanh.pop %v1347
      %v1354 = vtanh.pop %v1348
      %v1355 = vtanh.pop %v1349
      %v1356 = vadd.f32 %v1350, 1.0
      %v1357 = vadd.f32 %v1351, 1.0
      %v1358 = vadd.f32 %v1352, 1.0
      %v1359 = vadd.f32 %v1353, 1.0
      %v1360 = vadd.f32 %v1354, 1.0
      %v1361 = vadd.f32 %v1355, 1.0
      %v1362 = vmul.f32 %v1356, 0.5
      %v1363 = vmul.f32 %v1357, 0.5
      %v1364 = vmul.f32 %v1358, 0.5
      %v1365 = vmul.f32 %v1359, 0.5
      %v1366 = vmul.f32 %v1360, 0.5
      %v1367 = vmul.f32 %v1361, 0.5
      %v1368 = vmul.f32 %v1362, %v678
      %v1369 = vmul.f32 %v1363, %v679
      %v1370 = vmul.f32 %v1364, %v684
      %v1371 = vmul.f32 %v1365, %v685
      %v1372 = vmul.f32 %v1366, %v690
      %v1373 = vmul.f32 %v1367, %v691
      %v1376 = vrot.slane %v1369, 4
      %vm1377 = vcmask 1043456
      %v1378 = vsel %vm1377, %v1368, %v1376
      %1380 = vst [vmem:[%s644] sm:$0xff] %v1378
      %v1383 = vrot.slane %v1371, 4
      %v1384 = vsel %vm1377, %v1370, %v1383
      %1386 = vst [vmem:[%s650] sm:$0xff] %v1384
      %v1389 = vrot.slane %v1373, 4
      %v1390 = vsel %vm1377, %v1372, %v1389
      %1392 = vst [vmem:[%s656] sm:$0xff] %v1390
      %s1393 = smul.u32 2, %s29
      %p1394 = scmp.lt.s32.totalorder %s1393, 3
      %s1395 = scalar_select %p1394, %s1393, 3
      %s1396 = smul.addr %s1395, 4
      %s1397 = scalar_lea.vmem %s14, %s1396
      %s1398 = smul.u32 2, %s29
      %p1399 = scmp.lt.s32.totalorder %s1398, 3
      %s1400 = scalar_select %p1399, %s1398, 3
      %s1401 = smul.addr %s1400, 4
      %s1402 = scalar_lea.vmem %s15, %s1401
      %s1403 = smul.u32 2, %s29
      %p1404 = scmp.lt.s32.totalorder %s1403, 3
      %s1405 = scalar_select %p1404, %s1403, 3
      %s1406 = smul.addr %s1405, 4
      %s1407 = scalar_lea.vmem %s16, %s1406
      %s1408 = smul.u32 2, %s29
      %p1409 = scmp.lt.s32.totalorder %s1408, 3
      %s1410 = scalar_select %p1409, %s1408, 3
      %s1411 = smul.addr %s1410, 4
      %s1412 = scalar_lea.vmem %s17, %s1411
      // Predicated region
      $region77: #{dhsn1_2d_forward.2} parent=75 // pred_check
        %p1413 = pneg %p361
      $region78: #{dhsn1_2d_forward.2} parent=75 // pred_check_branch
        %1415 = sbr.rel (%p1413) target = $region80
      $region79: #{dhsn1_2d_forward.2} parent=75 // pred_region
        %s1416 = smul.u32 2, %s29
      $region80: #{dhsn1_2d_forward.2} parent=75 // pred_fallthru
        _
      // Predicated region
      $region81: #{dhsn1_2d_forward.2} parent=75 // pred_check
        %p1417 = pneg %p387
      $region82: #{dhsn1_2d_forward.2} parent=75 // pred_check_branch
        %1419 = sbr.rel (%p1417) target = $region84
      $region83: #{dhsn1_2d_forward.2} parent=75 // pred_region
        %s1420 = smul.u32 2, %s29
      $region84: #{dhsn1_2d_forward.2} parent=75 // pred_fallthru
        _
      // Predicated region
      $region85: #{dhsn1_2d_forward.2} parent=75 // pred_check
        %p1421 = pneg %p413
      $region86: #{dhsn1_2d_forward.2} parent=75 // pred_check_branch
        %1423 = sbr.rel (%p1421) target = $region88
      $region87: #{dhsn1_2d_forward.2} parent=75 // pred_region
        %s1424 = smul.u32 2, %s29
      $region88: #{dhsn1_2d_forward.2} parent=75 // pred_fallthru
        _
      // Predicated region
      $region89: #{dhsn1_2d_forward.2} parent=75 // pred_check
        %p1425 = pneg %p439
      $region90: #{dhsn1_2d_forward.2} parent=75 // pred_check_branch
        %1427 = sbr.rel (%p1425) target = $region92
      $region91: #{dhsn1_2d_forward.2} parent=75 // pred_region
        %s1428 = smul.u32 2, %s29
      $region92: #{dhsn1_2d_forward.2} parent=75 // pred_fallthru
        _
    $region76: #{dhsn1_2d_forward.2} parent=5 // pred_fallthru
      _
    %p1429 = scmp.le.s32.totalorder 2, %s24
    // Predicated region
    $region93: #{dhsn1_2d_forward.2} parent=5 // pred_check
      %p1430 = pneg %p1429
    $region94: #{dhsn1_2d_forward.2} parent=5 // pred_check_branch
      %1432 = sbr.rel (%p1430) target = $region96
    $region95: #{dhsn1_2d_forward.2} parent=5 // pred_region
      %s1433 = ssub.s32 %s24, 2
      // Predicated region
      $region97: #{dhsn1_2d_forward.2} parent=95 // pred_check
        %p1434 = pneg %p367
      $region98: #{dhsn1_2d_forward.2} parent=95 // pred_check_branch
        %1436 = sbr.rel (%p1434) target = $region100
      $region99: #{dhsn1_2d_forward.2} parent=95 // pred_region
        %s1437 = smul.u32 2, %s30
        %p1438 = scmp.lt.s32.totalorder %s1437, 3
        %s1439 = scalar_select %p1438, %s1437, 3
        %s1440 = smul.addr %s1439, 4
        %s1441 = scalar_lea.vmem %s14, %s1440
      $region100: #{dhsn1_2d_forward.2} parent=95 // pred_fallthru
        _
      // Predicated region
      $region101: #{dhsn1_2d_forward.2} parent=95 // pred_check
        %p1442 = pneg %p393
      $region102: #{dhsn1_2d_forward.2} parent=95 // pred_check_branch
        %1444 = sbr.rel (%p1442) target = $region104
      $region103: #{dhsn1_2d_forward.2} parent=95 // pred_region
        %s1445 = smul.u32 2, %s30
        %p1446 = scmp.lt.s32.totalorder %s1445, 3
        %s1447 = scalar_select %p1446, %s1445, 3
        %s1448 = smul.addr %s1447, 4
        %s1449 = scalar_lea.vmem %s15, %s1448
      $region104: #{dhsn1_2d_forward.2} parent=95 // pred_fallthru
        _
      // Predicated region
      $region105: #{dhsn1_2d_forward.2} parent=95 // pred_check
        %p1450 = pneg %p419
      $region106: #{dhsn1_2d_forward.2} parent=95 // pred_check_branch
        %1452 = sbr.rel (%p1450) target = $region108
      $region107: #{dhsn1_2d_forward.2} parent=95 // pred_region
        %s1453 = smul.u32 2, %s30
        %p1454 = scmp.lt.s32.totalorder %s1453, 3
        %s1455 = scalar_select %p1454, %s1453, 3
        %s1456 = smul.addr %s1455, 4
        %s1457 = scalar_lea.vmem %s16, %s1456
      $region108: #{dhsn1_2d_forward.2} parent=95 // pred_fallthru
        _
      // Predicated region
      $region109: #{dhsn1_2d_forward.2} parent=95 // pred_check
        %p1458 = pneg %p445
      $region110: #{dhsn1_2d_forward.2} parent=95 // pred_check_branch
        %1460 = sbr.rel (%p1458) target = $region112
      $region111: #{dhsn1_2d_forward.2} parent=95 // pred_region
        %s1461 = smul.u32 2, %s30
        %p1462 = scmp.lt.s32.totalorder %s1461, 3
        %s1463 = scalar_select %p1462, %s1461, 3
        %s1464 = smul.addr %s1463, 4
        %s1465 = scalar_lea.vmem %s17, %s1464
      $region112: #{dhsn1_2d_forward.2} parent=95 // pred_fallthru
        _
    $region96: #{dhsn1_2d_forward.2} parent=5 // pred_fallthru
      _
  $region6: #{dhsn1_2d_forward.2} parent=0 // loop_footer
    %s28 = sadd.s32 1, %s24
  $region7: #{dhsn1_2d_forward.2} parent=0 // loop_footer_branch
    %23 = sbr.rel target = $region3
  $region8: #{dhsn1_2d_forward.2} parent=0 // loop_exit
    _

</llo_original>
